<compile_context>
chip_gen: v7x
topology: tpu7x:2x2x1
jax: 0.10.0
libtpu: 0.0.40
codegen_flags: <defaults>
</compile_context>

<pallas_src>
import jax
import jax.numpy as jnp
from jax import lax
from jax.experimental import pallas as pl
from jax.experimental.pallas import tpu as pltpu

LN_EPS = 1e-5
MATMUL_DTYPE = jnp.bfloat16   # MXU operand dtype; accumulation stays f32

# Row indices into the packed "small vectors" buffer (lane width = max(2d, dff)).
(R_BQ1, R_BO1, R_B1E, R_B2E,
 R_LN1A_G, R_LN1A_B, R_LN1B_G, R_LN1B_B,
 R_BQ2, R_BO2, R_BF1, R_BF2,
 R_LN2A_G, R_LN2A_B, R_LN2B_G, R_LN2B_B) = range(16)
NUM_VEC_ROWS = 16


# ----------------------------------------------------------------------------
# Math shared by the in-kernel hot path and the pure-JAX reference.
# ----------------------------------------------------------------------------
def _mm(a, b):
    # Weights / precomputed KV are already bf16; only the f32 activation
    # operand is cast per call.  f32 accumulation on the MXU.
    return jnp.dot(a.astype(MATMUL_DTYPE), b, preferred_element_type=jnp.float32)


def _mm_t(a, b):
    # a @ b.T without materializing the transpose (contract on last dims).
    return lax.dot_general(a.astype(MATMUL_DTYPE), b,
                           (((1,), (1,)), ((), ())),
                           preferred_element_type=jnp.float32)


def _layer_norm(x, gamma, beta):
    mu = jnp.mean(x, axis=-1, keepdims=True)
    var = jnp.mean((x - mu) ** 2, axis=-1, keepdims=True)
    return (x - mu) * lax.rsqrt(var + LN_EPS) * gamma + beta


def _softmax(x):
    # Exact softmax (no approximate reciprocal) so kernel == reference.
    m = jnp.max(x, axis=-1, keepdims=True)
    e = jnp.exp(x - m)
    return e / jnp.sum(e, axis=-1, keepdims=True)


def _forward_tile(s_tile, kv1, kv2, wq1, wo1, wq2, wo2,
                  w1e, w2e, wf1, wf2, pool, vec):
    """Per-row-tile forward; kv1/kv2 are the hoisted K|V projections (bf16)."""
    d = s_tile.shape[-1]
    dff_enc = w1e.shape[-1]
    d_ff = wf1.shape[-1]

    def vrow(r, width):
        return vec[r:r + 1, :width]

    # ---- block 1: single_encoder = post-LN TransformerEncoderLayer ---------
    q1 = _mm(s_tile, wq1) + vrow(R_BQ1, d)                 # 1/sqrt(d) folded in
    attn1 = _softmax(_mm_t(q1, kv1[:, :d]))                # (tile, N)
    ao1 = _mm(_mm(attn1, kv1[:, d:]), wo1) + vrow(R_BO1, d)
    x = _layer_norm(s_tile + ao1, vrow(R_LN1A_G, d), vrow(R_LN1A_B, d))
    h1 = jnp.maximum(_mm(x, w1e) + vrow(R_B1E, dff_enc), 0.0)
    enc1 = _layer_norm(x + _mm(h1, w2e) + vrow(R_B2E, d),
                       vrow(R_LN1B_G, d), vrow(R_LN1B_B, d))

    # ---- block 2: co_encoder TE = cross-attention (Q=enc1, K/V from C) -----
    q2 = _mm(enc1, wq2) + vrow(R_BQ2, d)
    attn2 = _softmax(_mm_t(q2, kv2[:, :d]))                # (tile, T)
    ao2 = _mm(_mm(attn2, kv2[:, d:]), wo2) + vrow(R_BO2, d)
    y = _layer_norm(enc1 + ao2, vrow(R_LN2A_G, d), vrow(R_LN2A_B, d))
    h2 = jnp.maximum(_mm(y, wf1) + vrow(R_BF1, d_ff), 0.0)
    co = _layer_norm(y + _mm(h2, wf2) + vrow(R_BF2, d),
                     vrow(R_LN2B_G, d), vrow(R_LN2B_B, d))

    # ---- fused AvgPool1d(k=2,s=2) + concat: one K=2d matmul into (tile, d) --
    return _mm(jnp.concatenate([enc1, co], axis=-1), pool)


# ----------------------------------------------------------------------------
# Pallas kernel + wrapper (row grid over N; everything else VMEM-resident).
# ----------------------------------------------------------------------------
def _ct_kernel(s_ref, kv1_ref, kv2_ref, w_q_ref, w_o_ref,
               w1e_ref, w2e_ref, wf1_ref, wf2_ref, pool_ref, vec_ref, out_ref):
    out_ref[...] = _forward_tile(
        s_ref[...], kv1_ref[...], kv2_ref[...],
        w_q_ref[0, :, :], w_o_ref[0, :, :],
        w_q_ref[1, :, :], w_o_ref[1, :, :],
        w1e_ref[...], w2e_ref[...], wf1_ref[...], wf2_ref[...],
        pool_ref[...], vec_ref[...])


def _precompute_kv(S, C, w_kv, b_kv):
    # Hoisted K|V projections: computed ONCE (not per grid step), bias pre-added,
    # stored bf16 (they are only ever MXU operands downstream).
    kv1 = (jnp.dot(S.astype(MATMUL_DTYPE), w_kv[0],
                   preferred_element_type=jnp.float32) + b_kv[0]).astype(MATMUL_DTYPE)
    kv2 = (jnp.dot(C.astype(MATMUL_DTYPE), w_kv[1],
                   preferred_element_type=jnp.float32) + b_kv[1]).astype(MATMUL_DTYPE)
    return kv1, kv2


def contextual_transformer(S, C, params, *, tile_n=None):
    N, d = S.shape
    T = C.shape[0]
    if tile_n is None:
        tile_n = min(N, 256)            # 128 fills v5e's MXU; 256 for v6e/v7x
    assert N % tile_n == 0 and tile_n % 8 == 0, (N, tile_n)

    # Wrapper-side (not in-kernel pl.when) so the megacore "parallel" split
    # never races an init step.
    kv1, kv2 = _precompute_kv(S, C, params["w_kv"], params["b_kv"])

    def const_spec(shape):
        nd = len(shape)
        # Grid-invariant block: constant index map + single buffering (no point
        # double-buffering a block whose index never changes).
        return pl.BlockSpec(shape, lambda i: (0,) * nd,
                            pipeline_mode=pl.Buffered(buffer_count=1))

    grid_spec = pltpu.PrefetchScalarGridSpec(
        num_scalar_prefetch=0,
        grid=(N // tile_n,),
        in_specs=[
            pl.BlockSpec((tile_n, d), lambda i: (i, 0)),   # S row tile (Q + residual)
            const_spec(kv1.shape),                         # (N, 2d) bf16, resident
            const_spec(kv2.shape),                         # (T, 2d) bf16, resident
            const_spec(params["w_q"].shape),               # (2, d, d) bf16
            const_spec(params["w_o"].shape),               # (2, d, d) bf16
            const_spec(params["w1e"].shape),               # (d, dff_enc) bf16
            const_spec(params["w2e"].shape),               # (dff_enc, d) bf16
            const_spec(params["wf1"].shape),               # (d, dff_pad) bf16
            const_spec(params["wf2"].shape),               # (dff_pad, d) bf16
            const_spec(params["pool"].shape),              # (2d, d) bf16 fused pool
            const_spec(params["vec"].shape),               # (16, width) f32 biases+LN
        ],
        out_specs=pl.BlockSpec((tile_n, d), lambda i: (i, 0)),
    )
    return pl.pallas_call(
        _ct_kernel,
        out_shape=jax.ShapeDtypeStruct((N, d), jnp.float32),
        grid_spec=grid_spec,
        compiler_params=pltpu.CompilerParams(
            dimension_semantics=("parallel",),    # rows independent -> megacore
            vmem_limit_bytes=64 * 1024 * 1024,    # above the 16/32 MiB scoped defaults
        ),
    )(S, kv1, kv2, params["w_q"], params["w_o"], params["w1e"], params["w2e"],
      params["wf1"], params["wf2"], params["pool"], params["vec"])


# ----------------------------------------------------------------------------
# Pure-JAX reference (identical packed params, identical shared math).
# ----------------------------------------------------------------------------
def _reference(S, C, params):
    kv1, kv2 = _precompute_kv(S, C, params["w_kv"], params["b_kv"])
    return _forward_tile(S, kv1, kv2,
                         params["w_q"][0], params["w_o"][0],
                         params["w_q"][1], params["w_o"][1],
                         params["w1e"], params["w2e"],
                         params["wf1"], params["wf2"],
                         params["pool"], params["vec"])


# ----------------------------------------------------------------------------
# Deterministic parameter construction (synthetic weights, no checkpoint).
# ----------------------------------------------------------------------------
def make_pool_mat(d):
    # AvgPool1d(kernel=2, stride=2) over the feature dim as a (d, d/2) matmul;
    # the two pools are stacked into a single (2d, d) matrix so
    # [enc1 | co] @ pool_mat = [pool(enc1) | pool(co)] in one K=2d matmul.
    rows = jnp.arange(d)[:, None] // 2
    cols = jnp.arange(d // 2)[None, :]
    half = (rows == cols).astype(jnp.float32) * 0.5          # (d, d/2)
    zeros = jnp.zeros_like(half)
    top = jnp.concatenate([half, zeros], axis=1)              # enc1 -> left half
    bot = jnp.concatenate([zeros, half], axis=1)              # co   -> right half
    return jnp.concatenate([top, bot], axis=0).astype(MATMUL_DTYPE)   # (2d, d)


def make_params(key, d, dff_enc, d_ff, d_ff_pad):
    ks = jax.random.split(key, 32)

    def rnd(k, shape, s):
        return (jax.random.normal(k, shape) * s).astype(jnp.float32)

    def ln_gamma(k):
        return (1.0 + 0.1 * jax.random.normal(k, (d,))).astype(jnp.float32)

    def ln_beta(k):
        return (0.02 * jax.random.normal(k, (d,))).astype(jnp.float32)

    ws = 1.0 / float(d) ** 0.5
    scale = 1.0 / float(d) ** 0.5          # nhead = 1 -> head_dim == d_model

    # block 1: self-attention encoder layer
    wq1, wk1, wv1, wo1 = (rnd(ks[i], (d, d), ws) for i in range(4))
    bq1, bk1, bv1, bo1 = (rnd(ks[4 + i], (d,), 0.02) for i in range(4))
    w1e = rnd(ks[8], (d, dff_enc), ws)
    b1e = rnd(ks[9], (dff_enc,), 0.02)
    w2e = rnd(ks[10], (dff_enc, d), 1.0 / float(dff_enc) ** 0.5)
    b2e = rnd(ks[11], (d,), 0.02)
    g1a, be1a = ln_gamma(ks[12]), ln_beta(ks[13])
    g1b, be1b = ln_gamma(ks[14]), ln_beta(ks[15])

    # block 2: TE cross-attention layer
    wq2, wk2, wv2, wo2 = (rnd(ks[16 + i], (d, d), ws) for i in range(4))
    bq2, bk2, bv2, bo2 = (rnd(ks[20 + i], (d,), 0.02) for i in range(4))
    wf1 = rnd(ks[24], (d, d_ff), ws)
    bf1 = rnd(ks[25], (d_ff,), 0.02)
    wf2 = rnd(ks[26], (d_ff, d), 1.0 / float(d_ff) ** 0.5)
    bf2 = rnd(ks[27], (d,), 0.02)
    g2a, be2a = ln_gamma(ks[28]), ln_beta(ks[29])
    g2b, be2b = ln_gamma(ks[30]), ln_beta(ks[31])

    # Pad the TE FFN hidden dim to a lane-dense 128: padded columns/rows are
    # zero, ReLU(0)*0 contributes nothing -> semantics unchanged.
    wf1 = jnp.pad(wf1, ((0, 0), (0, d_ff_pad - d_ff)))
    bf1 = jnp.pad(bf1, (0, d_ff_pad - d_ff))
    wf2 = jnp.pad(wf2, ((0, d_ff_pad - d_ff), (0, 0)))

    to_mx = lambda a: a.astype(MATMUL_DTYPE)     # host-side bf16 cast (weights only)

    width = max(d, dff_enc, d_ff_pad)

    def row(v):
        v = v.reshape(-1)
        return jnp.pad(v, (0, width - v.shape[0]))[None, :]

    # Packed biases / LayerNorm affines (f32).  Attention scale folded into
    # Wq / bq at parameter-build time (host-side constant fold).
    vec = jnp.concatenate([
        row(bq1 * scale), row(bo1), row(b1e), row(b2e),
        row(g1a), row(be1a), row(g1b), row(be1b),
        row(bq2 * scale), row(bo2), row(bf1), row(bf2),
        row(g2a), row(be2a), row(g2b), row(be2b),
    ], axis=0).astype(jnp.float32)                            # (16, width)
    assert vec.shape[0] == NUM_VEC_ROWS, vec.shape

    return dict(
        w_q=to_mx(jnp.stack([wq1 * scale, wq2 * scale])),      # (2, d, d)
        w_kv=to_mx(jnp.stack([jnp.concatenate([wk1, wv1], axis=1),
                              jnp.concatenate([wk2, wv2], axis=1)])),  # (2, d, 2d)
        w_o=to_mx(jnp.stack([wo1, wo2])),                      # (2, d, d)
        w1e=to_mx(w1e), w2e=to_mx(w2e), wf1=to_mx(wf1), wf2=to_mx(wf2),
        b_kv=jnp.stack([jnp.concatenate([bk1, bv1]),
                        jnp.concatenate([bk2, bv2])]),          # (2, 2d) f32
        pool=make_pool_mat(d),                                  # (2d, d) bf16
        vec=vec,                                                # (16, width) f32
    )


# ----------------------------------------------------------------------------
if __name__ == "__main__":
    # d_model = 128 keeps every operand lane-dense; encoder FFN keeps the 2x
    # ratio and TE d_ff = d/2 matches the module's 1024/512 default (padded to 128).
    N, T, D = 256, 128, 128
    DFF_ENC = 2 * D
    D_FF, D_FF_PAD = D // 2, 128
    TILE_N = 128     # 2 grid steps here; keep 128 (v5e) / 256 (v6e, v7x) at scale

    key = jax.random.PRNGKey(0)
    k_s, k_c, k_p = jax.random.split(key, 3)
    S = jax.random.normal(k_s, (N, D), dtype=jnp.float32)
    C = jax.random.normal(k_c, (T, D), dtype=jnp.float32)
    params = make_params(k_p, D, DFF_ENC, D_FF, D_FF_PAD)

    out = jax.block_until_ready(contextual_transformer(S, C, params, tile_n=TILE_N))
    assert out.shape == (N, D), out.shape

    # Reference shares the exact same packed bf16 weights, hoisted KV and math;
    # remaining divergence is only Mosaic-vs-XLA transcendental/rsqrt rounding
    # (the approximate softmax reciprocal that caused the 1.2e-2 mismatch is gone).
    ref = jax.block_until_ready(jax.jit(_reference)(S, C, params))
    if not jnp.allclose(out, ref, atol=5e-3, rtol=5e-3):
        err = float(jnp.max(jnp.abs(out - ref)))
        raise AssertionError(
            f"Pallas kernel disagrees with JAX reference (max |diff|={err})")

    print("KERNEL_OK")
</pallas_src>

<mosaic_0001>
module attributes {stable_mosaic.version = 11 : i64} {
  func.func @_ct_kernel(%arg0: i32, %arg1: memref<128x128xf32, #tpu.memory_space<vmem>>, %arg2: memref<256x256xbf16, #tpu.memory_space<vmem>>, %arg3: memref<128x256xbf16, #tpu.memory_space<vmem>>, %arg4: memref<2x128x128xbf16, #tpu.memory_space<vmem>>, %arg5: memref<2x128x128xbf16, #tpu.memory_space<vmem>>, %arg6: memref<128x256xbf16, #tpu.memory_space<vmem>>, %arg7: memref<256x128xbf16, #tpu.memory_space<vmem>>, %arg8: memref<128x128xbf16, #tpu.memory_space<vmem>>, %arg9: memref<128x128xbf16, #tpu.memory_space<vmem>>, %arg10: memref<256x128xbf16, #tpu.memory_space<vmem>>, %arg11: memref<16x256xf32, #tpu.memory_space<vmem>>, %arg12: memref<128x128xf32, #tpu.memory_space<vmem>>) attributes {dimension_semantics = [#tpu.dimension_semantics<parallel>], iteration_bounds = array<i64: 2>, scalar_prefetch = 0 : i64, scratch_operands = 0 : i64, tpu.core_type = #tpu.core_type<tc>, window_params = [{transform_indices = @transform_0, window_bounds = array<i64: 128, 128>}, {pipeline_mode = #tpu.pipeline_mode<synchronous>, transform_indices = @transform_1, window_bounds = array<i64: 256, 256>}, {pipeline_mode = #tpu.pipeline_mode<synchronous>, transform_indices = @transform_2, window_bounds = array<i64: 128, 256>}, {pipeline_mode = #tpu.pipeline_mode<synchronous>, transform_indices = @transform_3, window_bounds = array<i64: 2, 128, 128>}, {pipeline_mode = #tpu.pipeline_mode<synchronous>, transform_indices = @transform_4, window_bounds = array<i64: 2, 128, 128>}, {pipeline_mode = #tpu.pipeline_mode<synchronous>, transform_indices = @transform_5, window_bounds = array<i64: 128, 256>}, {pipeline_mode = #tpu.pipeline_mode<synchronous>, transform_indices = @transform_6, window_bounds = array<i64: 256, 128>}, {pipeline_mode = #tpu.pipeline_mode<synchronous>, transform_indices = @transform_7, window_bounds = array<i64: 128, 128>}, {pipeline_mode = #tpu.pipeline_mode<synchronous>, transform_indices = @transform_8, window_bounds = array<i64: 128, 128>}, {pipeline_mode = #tpu.pipeline_mode<synchronous>, transform_indices = @transform_9, window_bounds = array<i64: 256, 128>}, {pipeline_mode = #tpu.pipeline_mode<synchronous>, transform_indices = @transform_10, window_bounds = array<i64: 16, 256>}, {transform_indices = @transform_11, window_bounds = array<i64: 128, 128>}]} {
    %c0 = arith.constant 0 : index
    %c0_0 = arith.constant 0 : index
    %0 = vector.load %arg1[%c0, %c0_0] : memref<128x128xf32, #tpu.memory_space<vmem>>, vector<128x128xf32>
    %c0_1 = arith.constant 0 : index
    %c0_2 = arith.constant 0 : index
    %1 = vector.load %arg2[%c0_1, %c0_2] : memref<256x256xbf16, #tpu.memory_space<vmem>>, vector<256x256xbf16>
    %c0_3 = arith.constant 0 : index
    %c0_4 = arith.constant 0 : index
    %2 = vector.load %arg3[%c0_3, %c0_4] : memref<128x256xbf16, #tpu.memory_space<vmem>>, vector<128x256xbf16>
    %c0_5 = arith.constant 0 : index
    %c0_6 = arith.constant 0 : index
    %c0_7 = arith.constant 0 : index
    %3 = vector.load %arg4[%c0_5, %c0_6, %c0_7] : memref<2x128x128xbf16, #tpu.memory_space<vmem>>, vector<1x128x128xbf16>
    %4 = vector.shape_cast %3 : vector<1x128x128xbf16> to vector<128x128xbf16>
    %c0_8 = arith.constant 0 : index
    %c0_9 = arith.constant 0 : index
    %c0_10 = arith.constant 0 : index
    %5 = vector.load %arg5[%c0_8, %c0_9, %c0_10] : memref<2x128x128xbf16, #tpu.memory_space<vmem>>, vector<1x128x128xbf16>
    %6 = vector.shape_cast %5 : vector<1x128x128xbf16> to vector<128x128xbf16>
    %c1 = arith.constant 1 : index
    %c0_11 = arith.constant 0 : index
    %c0_12 = arith.constant 0 : index
    %7 = vector.load %arg4[%c1, %c0_11, %c0_12] : memref<2x128x128xbf16, #tpu.memory_space<vmem>>, vector<1x128x128xbf16>
    %8 = vector.shape_cast %7 : vector<1x128x128xbf16> to vector<128x128xbf16>
    %c1_13 = arith.constant 1 : index
    %c0_14 = arith.constant 0 : index
    %c0_15 = arith.constant 0 : index
    %9 = vector.load %arg5[%c1_13, %c0_14, %c0_15] : memref<2x128x128xbf16, #tpu.memory_space<vmem>>, vector<1x128x128xbf16>
    %10 = vector.shape_cast %9 : vector<1x128x128xbf16> to vector<128x128xbf16>
    %c0_16 = arith.constant 0 : index
    %c0_17 = arith.constant 0 : index
    %11 = vector.load %arg6[%c0_16, %c0_17] : memref<128x256xbf16, #tpu.memory_space<vmem>>, vector<128x256xbf16>
    %c0_18 = arith.constant 0 : index
    %c0_19 = arith.constant 0 : index
    %12 = vector.load %arg7[%c0_18, %c0_19] : memref<256x128xbf16, #tpu.memory_space<vmem>>, vector<256x128xbf16>
    %c0_20 = arith.constant 0 : index
    %c0_21 = arith.constant 0 : index
    %13 = vector.load %arg8[%c0_20, %c0_21] : memref<128x128xbf16, #tpu.memory_space<vmem>>, vector<128x128xbf16>
    %c0_22 = arith.constant 0 : index
    %c0_23 = arith.constant 0 : index
    %14 = vector.load %arg9[%c0_22, %c0_23] : memref<128x128xbf16, #tpu.memory_space<vmem>>, vector<128x128xbf16>
    %c0_24 = arith.constant 0 : index
    %c0_25 = arith.constant 0 : index
    %15 = vector.load %arg10[%c0_24, %c0_25] : memref<256x128xbf16, #tpu.memory_space<vmem>>, vector<256x128xbf16>
    %c0_26 = arith.constant 0 : index
    %c0_27 = arith.constant 0 : index
    %16 = vector.load %arg11[%c0_26, %c0_27] : memref<16x256xf32, #tpu.memory_space<vmem>>, vector<16x256xf32>
    %17 = arith.truncf %0 : vector<128x128xf32> to vector<128x128xbf16>
    %cst = arith.constant dense<0.000000e+00> : vector<128x128xf32>
    %18 = tpu.matmul %17, %4, %cst {dimension_numbers = #tpu.dot_dimension_numbers<[1], [0], [0], [1], [0, 0, 1, 1], [], []>} : vector<128x128xbf16>, vector<128x128xbf16>, vector<128x128xf32> -> vector<128x128xf32>
    %19 = vector.extract_strided_slice %16 {offsets = [0, 0], sizes = [1, 128], strides = [1, 1]} : vector<16x256xf32> to vector<1x128xf32>
    %20 = vector.broadcast %19 : vector<1x128xf32> to vector<128x128xf32>
    %21 = arith.addf %18, %20 : vector<128x128xf32>
    %22 = vector.extract_strided_slice %1 {offsets = [0, 0], sizes = [256, 128], strides = [1, 1]} : vector<256x256xbf16> to vector<256x128xbf16>
    %23 = arith.truncf %21 : vector<128x128xf32> to vector<128x128xbf16>
    %cst_28 = arith.constant dense<0.000000e+00> : vector<128x256xf32>
    %24 = tpu.matmul %23, %22, %cst_28 {dimension_numbers = #tpu.dot_dimension_numbers<[1], [1], [0], [0], [0, 0, 1, 0], [], []>} : vector<128x128xbf16>, vector<256x128xbf16>, vector<128x256xf32> -> vector<128x256xf32>
    %cst_29 = arith.constant dense<0xFF800000> : vector<128xf32>
    %25 = vector.multi_reduction <maximumf>, %24, %cst_29 [1] : vector<128x256xf32> to vector<128xf32>
    %26 = vector.shape_cast %25 : vector<128xf32> to vector<128x1xf32>
    %27 = vector.broadcast %26 : vector<128x1xf32> to vector<128x256xf32>
    %28 = arith.subf %24, %27 : vector<128x256xf32>
    %29 = math.exp %28 : vector<128x256xf32>
    %cst_30 = arith.constant dense<0.000000e+00> : vector<128xf32>
    %30 = vector.multi_reduction <add>, %29, %cst_30 [1] : vector<128x256xf32> to vector<128xf32>
    %31 = vector.shape_cast %30 : vector<128xf32> to vector<128x1xf32>
    %32 = vector.broadcast %31 : vector<128x1xf32> to vector<128x256xf32>
    %33 = arith.divf %29, %32 : vector<128x256xf32>
    %34 = vector.extract_strided_slice %1 {offsets = [0, 128], sizes = [256, 128], strides = [1, 1]} : vector<256x256xbf16> to vector<256x128xbf16>
    %35 = arith.truncf %33 : vector<128x256xf32> to vector<128x256xbf16>
    %cst_31 = arith.constant dense<0.000000e+00> : vector<128x128xf32>
    %36 = tpu.matmul %35, %34, %cst_31 {dimension_numbers = #tpu.dot_dimension_numbers<[1], [0], [0], [1], [0, 0, 1, 1], [], []>} : vector<128x256xbf16>, vector<256x128xbf16>, vector<128x128xf32> -> vector<128x128xf32>
    %37 = arith.truncf %36 : vector<128x128xf32> to vector<128x128xbf16>
    %cst_32 = arith.constant dense<0.000000e+00> : vector<128x128xf32>
    %38 = tpu.matmul %37, %6, %cst_32 {dimension_numbers = #tpu.dot_dimension_numbers<[1], [0], [0], [1], [0, 0, 1, 1], [], []>} : vector<128x128xbf16>, vector<128x128xbf16>, vector<128x128xf32> -> vector<128x128xf32>
    %39 = vector.extract_strided_slice %16 {offsets = [1, 0], sizes = [1, 128], strides = [1, 1]} : vector<16x256xf32> to vector<1x128xf32>
    %40 = vector.broadcast %39 : vector<1x128xf32> to vector<128x128xf32>
    %41 = arith.addf %38, %40 : vector<128x128xf32>
    %42 = arith.addf %0, %41 : vector<128x128xf32>
    %43 = vector.extract_strided_slice %16 {offsets = [4, 0], sizes = [1, 128], strides = [1, 1]} : vector<16x256xf32> to vector<1x128xf32>
    %44 = vector.extract_strided_slice %16 {offsets = [5, 0], sizes = [1, 128], strides = [1, 1]} : vector<16x256xf32> to vector<1x128xf32>
    %cst_33 = arith.constant dense<0.000000e+00> : vector<128xf32>
    %45 = vector.multi_reduction <add>, %42, %cst_33 [1] : vector<128x128xf32> to vector<128xf32>
    %46 = vector.shape_cast %45 : vector<128xf32> to vector<128x1xf32>
    %cst_34 = arith.constant 1.280000e+02 : f32
    %47 = vector.broadcast %cst_34 : f32 to vector<128x1xf32>
    %48 = arith.divf %46, %47 : vector<128x1xf32>
    %49 = vector.broadcast %48 : vector<128x1xf32> to vector<128x128xf32>
    %50 = arith.subf %42, %49 : vector<128x128xf32>
    %51 = arith.mulf %50, %50 : vector<128x128xf32>
    %cst_35 = arith.constant dense<0.000000e+00> : vector<128xf32>
    %52 = vector.multi_reduction <add>, %51, %cst_35 [1] : vector<128x128xf32> to vector<128xf32>
    %53 = vector.shape_cast %52 : vector<128xf32> to vector<128x1xf32>
    %cst_36 = arith.constant 1.280000e+02 : f32
    %54 = vector.broadcast %cst_36 : f32 to vector<128x1xf32>
    %55 = arith.divf %53, %54 : vector<128x1xf32>
    %56 = vector.broadcast %48 : vector<128x1xf32> to vector<128x128xf32>
    %57 = arith.subf %42, %56 : vector<128x128xf32>
    %cst_37 = arith.constant 9.99999974E-6 : f32
    %58 = vector.broadcast %cst_37 : f32 to vector<128x1xf32>
    %59 = arith.addf %55, %58 : vector<128x1xf32>
    %60 = math.rsqrt %59 : vector<128x1xf32>
    %61 = vector.broadcast %60 : vector<128x1xf32> to vector<128x128xf32>
    %62 = arith.mulf %57, %61 : vector<128x128xf32>
    %63 = vector.broadcast %43 : vector<1x128xf32> to vector<128x128xf32>
    %64 = arith.mulf %62, %63 : vector<128x128xf32>
    %65 = vector.broadcast %44 : vector<1x128xf32> to vector<128x128xf32>
    %66 = arith.addf %64, %65 : vector<128x128xf32>
    %67 = arith.truncf %66 : vector<128x128xf32> to vector<128x128xbf16>
    %cst_38 = arith.constant dense<0.000000e+00> : vector<128x256xf32>
    %68 = tpu.matmul %67, %11, %cst_38 {dimension_numbers = #tpu.dot_dimension_numbers<[1], [0], [0], [1], [0, 0, 1, 1], [], []>} : vector<128x128xbf16>, vector<128x256xbf16>, vector<128x256xf32> -> vector<128x256xf32>
    %69 = vector.extract_strided_slice %16 {offsets = [2, 0], sizes = [1, 256], strides = [1, 1]} : vector<16x256xf32> to vector<1x256xf32>
    %70 = vector.broadcast %69 : vector<1x256xf32> to vector<128x256xf32>
    %71 = arith.addf %68, %70 : vector<128x256xf32>
    %cst_39 = arith.constant 0.000000e+00 : f32
    %72 = vector.broadcast %cst_39 : f32 to vector<128x256xf32>
    %73 = arith.maximumf %71, %72 : vector<128x256xf32>
    %74 = arith.truncf %73 : vector<128x256xf32> to vector<128x256xbf16>
    %cst_40 = arith.constant dense<0.000000e+00> : vector<128x128xf32>
    %75 = tpu.matmul %74, %12, %cst_40 {dimension_numbers = #tpu.dot_dimension_numbers<[1], [0], [0], [1], [0, 0, 1, 1], [], []>} : vector<128x256xbf16>, vector<256x128xbf16>, vector<128x128xf32> -> vector<128x128xf32>
    %76 = arith.addf %66, %75 : vector<128x128xf32>
    %77 = vector.extract_strided_slice %16 {offsets = [3, 0], sizes = [1, 128], strides = [1, 1]} : vector<16x256xf32> to vector<1x128xf32>
    %78 = vector.broadcast %77 : vector<1x128xf32> to vector<128x128xf32>
    %79 = arith.addf %76, %78 : vector<128x128xf32>
    %80 = vector.extract_strided_slice %16 {offsets = [6, 0], sizes = [1, 128], strides = [1, 1]} : vector<16x256xf32> to vector<1x128xf32>
    %81 = vector.extract_strided_slice %16 {offsets = [7, 0], sizes = [1, 128], strides = [1, 1]} : vector<16x256xf32> to vector<1x128xf32>
    %cst_41 = arith.constant dense<0.000000e+00> : vector<128xf32>
    %82 = vector.multi_reduction <add>, %79, %cst_41 [1] : vector<128x128xf32> to vector<128xf32>
    %83 = vector.shape_cast %82 : vector<128xf32> to vector<128x1xf32>
    %cst_42 = arith.constant 1.280000e+02 : f32
    %84 = vector.broadcast %cst_42 : f32 to vector<128x1xf32>
    %85 = arith.divf %83, %84 : vector<128x1xf32>
    %86 = vector.broadcast %85 : vector<128x1xf32> to vector<128x128xf32>
    %87 = arith.subf %79, %86 : vector<128x128xf32>
    %88 = arith.mulf %87, %87 : vector<128x128xf32>
    %cst_43 = arith.constant dense<0.000000e+00> : vector<128xf32>
    %89 = vector.multi_reduction <add>, %88, %cst_43 [1] : vector<128x128xf32> to vector<128xf32>
    %90 = vector.shape_cast %89 : vector<128xf32> to vector<128x1xf32>
    %cst_44 = arith.constant 1.280000e+02 : f32
    %91 = vector.broadcast %cst_44 : f32 to vector<128x1xf32>
    %92 = arith.divf %90, %91 : vector<128x1xf32>
    %93 = vector.broadcast %85 : vector<128x1xf32> to vector<128x128xf32>
    %94 = arith.subf %79, %93 : vector<128x128xf32>
    %cst_45 = arith.constant 9.99999974E-6 : f32
    %95 = vector.broadcast %cst_45 : f32 to vector<128x1xf32>
    %96 = arith.addf %92, %95 : vector<128x1xf32>
    %97 = math.rsqrt %96 : vector<128x1xf32>
    %98 = vector.broadcast %97 : vector<128x1xf32> to vector<128x128xf32>
    %99 = arith.mulf %94, %98 : vector<128x128xf32>
    %100 = vector.broadcast %80 : vector<1x128xf32> to vector<128x128xf32>
    %101 = arith.mulf %99, %100 : vector<128x128xf32>
    %102 = vector.broadcast %81 : vector<1x128xf32> to vector<128x128xf32>
    %103 = arith.addf %101, %102 : vector<128x128xf32>
    %104 = arith.truncf %103 : vector<128x128xf32> to vector<128x128xbf16>
    %cst_46 = arith.constant dense<0.000000e+00> : vector<128x128xf32>
    %105 = tpu.matmul %104, %8, %cst_46 {dimension_numbers = #tpu.dot_dimension_numbers<[1], [0], [0], [1], [0, 0, 1, 1], [], []>} : vector<128x128xbf16>, vector<128x128xbf16>, vector<128x128xf32> -> vector<128x128xf32>
    %106 = vector.extract_strided_slice %16 {offsets = [8, 0], sizes = [1, 128], strides = [1, 1]} : vector<16x256xf32> to vector<1x128xf32>
    %107 = vector.broadcast %106 : vector<1x128xf32> to vector<128x128xf32>
    %108 = arith.addf %105, %107 : vector<128x128xf32>
    %109 = vector.extract_strided_slice %2 {offsets = [0, 0], sizes = [128, 128], strides = [1, 1]} : vector<128x256xbf16> to vector<128x128xbf16>
    %110 = arith.truncf %108 : vector<128x128xf32> to vector<128x128xbf16>
    %cst_47 = arith.constant dense<0.000000e+00> : vector<128x128xf32>
    %111 = tpu.matmul %110, %109, %cst_47 {dimension_numbers = #tpu.dot_dimension_numbers<[1], [1], [0], [0], [0, 0, 1, 0], [], []>} : vector<128x128xbf16>, vector<128x128xbf16>, vector<128x128xf32> -> vector<128x128xf32>
    %cst_48 = arith.constant dense<0xFF800000> : vector<128xf32>
    %112 = vector.multi_reduction <maximumf>, %111, %cst_48 [1] : vector<128x128xf32> to vector<128xf32>
    %113 = vector.shape_cast %112 : vector<128xf32> to vector<128x1xf32>
    %114 = vector.broadcast %113 : vector<128x1xf32> to vector<128x128xf32>
    %115 = arith.subf %111, %114 : vector<128x128xf32>
    %116 = math.exp %115 : vector<128x128xf32>
    %cst_49 = arith.constant dense<0.000000e+00> : vector<128xf32>
    %117 = vector.multi_reduction <add>, %116, %cst_49 [1] : vector<128x128xf32> to vector<128xf32>
    %118 = vector.shape_cast %117 : vector<128xf32> to vector<128x1xf32>
    %119 = vector.broadcast %118 : vector<128x1xf32> to vector<128x128xf32>
    %120 = arith.divf %116, %119 : vector<128x128xf32>
    %121 = vector.extract_strided_slice %2 {offsets = [0, 128], sizes = [128, 128], strides = [1, 1]} : vector<128x256xbf16> to vector<128x128xbf16>
    %122 = arith.truncf %120 : vector<128x128xf32> to vector<128x128xbf16>
    %cst_50 = arith.constant dense<0.000000e+00> : vector<128x128xf32>
    %123 = tpu.matmul %122, %121, %cst_50 {dimension_numbers = #tpu.dot_dimension_numbers<[1], [0], [0], [1], [0, 0, 1, 1], [], []>} : vector<128x128xbf16>, vector<128x128xbf16>, vector<128x128xf32> -> vector<128x128xf32>
    %124 = arith.truncf %123 : vector<128x128xf32> to vector<128x128xbf16>
    %cst_51 = arith.constant dense<0.000000e+00> : vector<128x128xf32>
    %125 = tpu.matmul %124, %10, %cst_51 {dimension_numbers = #tpu.dot_dimension_numbers<[1], [0], [0], [1], [0, 0, 1, 1], [], []>} : vector<128x128xbf16>, vector<128x128xbf16>, vector<128x128xf32> -> vector<128x128xf32>
    %126 = vector.extract_strided_slice %16 {offsets = [9, 0], sizes = [1, 128], strides = [1, 1]} : vector<16x256xf32> to vector<1x128xf32>
    %127 = vector.broadcast %126 : vector<1x128xf32> to vector<128x128xf32>
    %128 = arith.addf %125, %127 : vector<128x128xf32>
    %129 = arith.addf %103, %128 : vector<128x128xf32>
    %130 = vector.extract_strided_slice %16 {offsets = [12, 0], sizes = [1, 128], strides = [1, 1]} : vector<16x256xf32> to vector<1x128xf32>
    %131 = vector.extract_strided_slice %16 {offsets = [13, 0], sizes = [1, 128], strides = [1, 1]} : vector<16x256xf32> to vector<1x128xf32>
    %cst_52 = arith.constant dense<0.000000e+00> : vector<128xf32>
    %132 = vector.multi_reduction <add>, %129, %cst_52 [1] : vector<128x128xf32> to vector<128xf32>
    %133 = vector.shape_cast %132 : vector<128xf32> to vector<128x1xf32>
    %cst_53 = arith.constant 1.280000e+02 : f32
    %134 = vector.broadcast %cst_53 : f32 to vector<128x1xf32>
    %135 = arith.divf %133, %134 : vector<128x1xf32>
    %136 = vector.broadcast %135 : vector<128x1xf32> to vector<128x128xf32>
    %137 = arith.subf %129, %136 : vector<128x128xf32>
    %138 = arith.mulf %137, %137 : vector<128x128xf32>
    %cst_54 = arith.constant dense<0.000000e+00> : vector<128xf32>
    %139 = vector.multi_reduction <add>, %138, %cst_54 [1] : vector<128x128xf32> to vector<128xf32>
    %140 = vector.shape_cast %139 : vector<128xf32> to vector<128x1xf32>
    %cst_55 = arith.constant 1.280000e+02 : f32
    %141 = vector.broadcast %cst_55 : f32 to vector<128x1xf32>
    %142 = arith.divf %140, %141 : vector<128x1xf32>
    %143 = vector.broadcast %135 : vector<128x1xf32> to vector<128x128xf32>
    %144 = arith.subf %129, %143 : vector<128x128xf32>
    %cst_56 = arith.constant 9.99999974E-6 : f32
    %145 = vector.broadcast %cst_56 : f32 to vector<128x1xf32>
    %146 = arith.addf %142, %145 : vector<128x1xf32>
    %147 = math.rsqrt %146 : vector<128x1xf32>
    %148 = vector.broadcast %147 : vector<128x1xf32> to vector<128x128xf32>
    %149 = arith.mulf %144, %148 : vector<128x128xf32>
    %150 = vector.broadcast %130 : vector<1x128xf32> to vector<128x128xf32>
    %151 = arith.mulf %149, %150 : vector<128x128xf32>
    %152 = vector.broadcast %131 : vector<1x128xf32> to vector<128x128xf32>
    %153 = arith.addf %151, %152 : vector<128x128xf32>
    %154 = arith.truncf %153 : vector<128x128xf32> to vector<128x128xbf16>
    %cst_57 = arith.constant dense<0.000000e+00> : vector<128x128xf32>
    %155 = tpu.matmul %154, %13, %cst_57 {dimension_numbers = #tpu.dot_dimension_numbers<[1], [0], [0], [1], [0, 0, 1, 1], [], []>} : vector<128x128xbf16>, vector<128x128xbf16>, vector<128x128xf32> -> vector<128x128xf32>
    %156 = vector.extract_strided_slice %16 {offsets = [10, 0], sizes = [1, 128], strides = [1, 1]} : vector<16x256xf32> to vector<1x128xf32>
    %157 = vector.broadcast %156 : vector<1x128xf32> to vector<128x128xf32>
    %158 = arith.addf %155, %157 : vector<128x128xf32>
    %cst_58 = arith.constant 0.000000e+00 : f32
    %159 = vector.broadcast %cst_58 : f32 to vector<128x128xf32>
    %160 = arith.maximumf %158, %159 : vector<128x128xf32>
    %161 = arith.truncf %160 : vector<128x128xf32> to vector<128x128xbf16>
    %cst_59 = arith.constant dense<0.000000e+00> : vector<128x128xf32>
    %162 = tpu.matmul %161, %14, %cst_59 {dimension_numbers = #tpu.dot_dimension_numbers<[1], [0], [0], [1], [0, 0, 1, 1], [], []>} : vector<128x128xbf16>, vector<128x128xbf16>, vector<128x128xf32> -> vector<128x128xf32>
    %163 = arith.addf %153, %162 : vector<128x128xf32>
    %164 = vector.extract_strided_slice %16 {offsets = [11, 0], sizes = [1, 128], strides = [1, 1]} : vector<16x256xf32> to vector<1x128xf32>
    %165 = vector.broadcast %164 : vector<1x128xf32> to vector<128x128xf32>
    %166 = arith.addf %163, %165 : vector<128x128xf32>
    %167 = vector.extract_strided_slice %16 {offsets = [14, 0], sizes = [1, 128], strides = [1, 1]} : vector<16x256xf32> to vector<1x128xf32>
    %168 = vector.extract_strided_slice %16 {offsets = [15, 0], sizes = [1, 128], strides = [1, 1]} : vector<16x256xf32> to vector<1x128xf32>
    %cst_60 = arith.constant dense<0.000000e+00> : vector<128xf32>
    %169 = vector.multi_reduction <add>, %166, %cst_60 [1] : vector<128x128xf32> to vector<128xf32>
    %170 = vector.shape_cast %169 : vector<128xf32> to vector<128x1xf32>
    %cst_61 = arith.constant 1.280000e+02 : f32
    %171 = vector.broadcast %cst_61 : f32 to vector<128x1xf32>
    %172 = arith.divf %170, %171 : vector<128x1xf32>
    %173 = vector.broadcast %172 : vector<128x1xf32> to vector<128x128xf32>
    %174 = arith.subf %166, %173 : vector<128x128xf32>
    %175 = arith.mulf %174, %174 : vector<128x128xf32>
    %cst_62 = arith.constant dense<0.000000e+00> : vector<128xf32>
    %176 = vector.multi_reduction <add>, %175, %cst_62 [1] : vector<128x128xf32> to vector<128xf32>
    %177 = vector.shape_cast %176 : vector<128xf32> to vector<128x1xf32>
    %cst_63 = arith.constant 1.280000e+02 : f32
    %178 = vector.broadcast %cst_63 : f32 to vector<128x1xf32>
    %179 = arith.divf %177, %178 : vector<128x1xf32>
    %180 = vector.broadcast %172 : vector<128x1xf32> to vector<128x128xf32>
    %181 = arith.subf %166, %180 : vector<128x128xf32>
    %cst_64 = arith.constant 9.99999974E-6 : f32
    %182 = vector.broadcast %cst_64 : f32 to vector<128x1xf32>
    %183 = arith.addf %179, %182 : vector<128x1xf32>
    %184 = math.rsqrt %183 : vector<128x1xf32>
    %185 = vector.broadcast %184 : vector<128x1xf32> to vector<128x128xf32>
    %186 = arith.mulf %181, %185 : vector<128x128xf32>
    %187 = vector.broadcast %167 : vector<1x128xf32> to vector<128x128xf32>
    %188 = arith.mulf %186, %187 : vector<128x128xf32>
    %189 = vector.broadcast %168 : vector<1x128xf32> to vector<128x128xf32>
    %190 = arith.addf %188, %189 : vector<128x128xf32>
    %191 = tpu.concatenate %103, %190 in 1 : vector<128x128xf32>, vector<128x128xf32> -> vector<128x256xf32>
    %192 = arith.truncf %191 : vector<128x256xf32> to vector<128x256xbf16>
    %cst_65 = arith.constant dense<0.000000e+00> : vector<128x128xf32>
    %193 = tpu.matmul %192, %15, %cst_65 {dimension_numbers = #tpu.dot_dimension_numbers<[1], [0], [0], [1], [0, 0, 1, 1], [], []>} : vector<128x256xbf16>, vector<256x128xbf16>, vector<128x128xf32> -> vector<128x128xf32>
    %c0_66 = arith.constant 0 : index
    %c0_67 = arith.constant 0 : index
    %194 = vector.load %arg12[%c0_66, %c0_67] : memref<128x128xf32, #tpu.memory_space<vmem>>, vector<128x128xf32>
    tpu.vector_store %arg12[%c0_66, %c0_67], %193 {strides = array<i32>} : memref<128x128xf32, #tpu.memory_space<vmem>>, vector<128x128xf32>,
    return
  }
  func.func @transform_0(%arg0: i32) -> (i32, i32) {
    %c0_i32 = arith.constant 0 : i32
    %c0_i32_0 = arith.constant 0 : i32
    return %arg0, %c0_i32 : i32, i32
  }
  func.func @transform_1(%arg0: i32) -> (i32, i32) {
    %c0_i32 = arith.constant 0 : i32
    %c0_i32_0 = arith.constant 0 : i32
    %c0_i32_1 = arith.constant 0 : i32
    return %c0_i32, %c0_i32_0 : i32, i32
  }
  func.func @transform_2(%arg0: i32) -> (i32, i32) {
    %c0_i32 = arith.constant 0 : i32
    %c0_i32_0 = arith.constant 0 : i32
    %c0_i32_1 = arith.constant 0 : i32
    return %c0_i32, %c0_i32_0 : i32, i32
  }
  func.func @transform_3(%arg0: i32) -> (i32, i32, i32) {
    %c0_i32 = arith.constant 0 : i32
    %c0_i32_0 = arith.constant 0 : i32
    %c0_i32_1 = arith.constant 0 : i32
    %c0_i32_2 = arith.constant 0 : i32
    return %c0_i32, %c0_i32_0, %c0_i32_1 : i32, i32, i32
  }
  func.func @transform_4(%arg0: i32) -> (i32, i32, i32) {
    %c0_i32 = arith.constant 0 : i32
    %c0_i32_0 = arith.constant 0 : i32
    %c0_i32_1 = arith.constant 0 : i32
    %c0_i32_2 = arith.constant 0 : i32
    return %c0_i32, %c0_i32_0, %c0_i32_1 : i32, i32, i32
  }
  func.func @transform_5(%arg0: i32) -> (i32, i32) {
    %c0_i32 = arith.constant 0 : i32
    %c0_i32_0 = arith.constant 0 : i32
    %c0_i32_1 = arith.constant 0 : i32
    return %c0_i32, %c0_i32_0 : i32, i32
  }
  func.func @transform_6(%arg0: i32) -> (i32, i32) {
    %c0_i32 = arith.constant 0 : i32
    %c0_i32_0 = arith.constant 0 : i32
    %c0_i32_1 = arith.constant 0 : i32
    return %c0_i32, %c0_i32_0 : i32, i32
  }
  func.func @transform_7(%arg0: i32) -> (i32, i32) {
    %c0_i32 = arith.constant 0 : i32
    %c0_i32_0 = arith.constant 0 : i32
    %c0_i32_1 = arith.constant 0 : i32
    return %c0_i32, %c0_i32_0 : i32, i32
  }
  func.func @transform_8(%arg0: i32) -> (i32, i32) {
    %c0_i32 = arith.constant 0 : i32
    %c0_i32_0 = arith.constant 0 : i32
    %c0_i32_1 = arith.constant 0 : i32
    return %c0_i32, %c0_i32_0 : i32, i32
  }
  func.func @transform_9(%arg0: i32) -> (i32, i32) {
    %c0_i32 = arith.constant 0 : i32
    %c0_i32_0 = arith.constant 0 : i32
    %c0_i32_1 = arith.constant 0 : i32
    return %c0_i32, %c0_i32_0 : i32, i32
  }
  func.func @transform_10(%arg0: i32) -> (i32, i32) {
    %c0_i32 = arith.constant 0 : i32
    %c0_i32_0 = arith.constant 0 : i32
    %c0_i32_1 = arith.constant 0 : i32
    return %c0_i32, %c0_i32_0 : i32, i32
  }
  func.func @transform_11(%arg0: i32) -> (i32, i32) {
    %c0_i32 = arith.constant 0 : i32
    %c0_i32_0 = arith.constant 0 : i32
    return %arg0, %c0_i32 : i32, i32
  }
}

</mosaic_0001>

<llo_original>
// kernel: tpu_custom_call.1
$region0: #{tpu_custom_call.1}
  #allocation0 [shape = 'u32[]', space=smem, size = 0x4, offset = 0x4, fixed_abs, tag = 'smem constant byte address 0x4 - core index']
  #allocation1 [shape = 'u32[144,128]{1,0:T(1,128)}', space=vmem, size = 0x12000, scoped, tag = 'internal scratch']
  %s0 = inlined_call_operand.hbm [shape: f32[256,128], index: 0, kind: input, shape index: {}]
  %s1 = inlined_call_operand.hbm [shape: bf16[256,256], index: 1, kind: input, shape index: {}]
  %s2 = inlined_call_operand.hbm [shape: bf16[128,256], index: 2, kind: input, shape index: {}]
  %s3 = inlined_call_operand.hbm [shape: bf16[2,128,128], index: 3, kind: input, shape index: {}]
  %s4 = inlined_call_operand.hbm [shape: bf16[2,128,128], index: 4, kind: input, shape index: {}]
  %s5 = inlined_call_operand.hbm [shape: bf16[128,256], index: 5, kind: input, shape index: {}]
  %s6 = inlined_call_operand.hbm [shape: bf16[256,128], index: 6, kind: input, shape index: {}]
  %s7 = inlined_call_operand.hbm [shape: bf16[128,128], index: 7, kind: input, shape index: {}]
  %s8 = inlined_call_operand.hbm [shape: bf16[128,128], index: 8, kind: input, shape index: {}]
  %s9 = inlined_call_operand.hbm [shape: bf16[256,128], index: 9, kind: input, shape index: {}]
  %s10 = inlined_call_operand.hbm [shape: f32[16,256], index: 10, kind: input, shape index: {}]
  %s11 = inlined_call_operand.hbm [shape: f32[256,128], index: 11, kind: output, shape index: {}]
  %s12 = sld [smem:[#allocation0]]
  $region121: #{tpu_custom_call.1} parent=0
    _
  %s14 = ssub.s32 1, %s12
  %s15 = scalar_select 0, %s14, %s12
  $region1: #{tpu_custom_call.1} parent=0
    #allocation2 [shape = 'u8[131072]{0}', space=vmem, size = 0x20000, scoped, tag = 'input window, operand 0']
    #allocation3 [shape = 's32[2]{0}', space=sflag, size = 0x8, scoped, tag = 'scoped memory for tpu_custom_call.1']
    #allocation4 [shape = 's32[2]{0}', space=sflag, size = 0x8, scoped, tag = 'scoped memory for tpu_custom_call.1']
    #allocation5 [shape = 'u8[131072]{0}', space=vmem, size = 0x20000, scoped, tag = 'input window, operand 1, single buffered']
    #allocation6 [shape = 's32[1]{0}', space=sflag, size = 0x4, scoped, tag = 'scoped memory for tpu_custom_call.1']
    #allocation7 [shape = 'u8[65536]{0}', space=vmem, size = 0x10000, scoped, tag = 'input window, operand 2, single buffered']
    #allocation8 [shape = 'u8[65536]{0}', space=vmem, size = 0x10000, scoped, tag = 'input window, operand 3, single buffered']
    #allocation9 [shape = 's32[1]{0}', space=sflag, size = 0x4, scoped, tag = 'scoped memory for tpu_custom_call.1']
    #allocation10 [shape = 'u8[65536]{0}', space=vmem, size = 0x10000, scoped, tag = 'input window, operand 4, single buffered']
    #allocation11 [shape = 'u8[65536]{0}', space=vmem, size = 0x10000, scoped, tag = 'input window, operand 5, single buffered']
    #allocation12 [shape = 's32[1]{0}', space=sflag, size = 0x4, scoped, tag = 'scoped memory for tpu_custom_call.1']
    #allocation13 [shape = 'u8[65536]{0}', space=vmem, size = 0x10000, scoped, tag = 'input window, operand 6, single buffered']
    #allocation14 [shape = 'u8[32768]{0}', space=vmem, size = 0x8000, scoped, tag = 'input window, operand 7, single buffered']
    #allocation15 [shape = 's32[1]{0}', space=sflag, size = 0x4, scoped, tag = 'scoped memory for tpu_custom_call.1']
    #allocation16 [shape = 'u8[32768]{0}', space=vmem, size = 0x8000, scoped, tag = 'input window, operand 8, single buffered']
    #allocation17 [shape = 'u8[65536]{0}', space=vmem, size = 0x10000, scoped, tag = 'input window, operand 9, single buffered']
    #allocation18 [shape = 's32[1]{0}', space=sflag, size = 0x4, scoped, tag = 'scoped memory for tpu_custom_call.1']
    #allocation19 [shape = 'u8[16384]{0}', space=vmem, size = 0x4000, scoped, tag = 'input window, operand 10, single buffered']
    #allocation20 [shape = 'u8[131072]{0}', space=vmem, size = 0x20000, scoped, tag = 'output window, operand 0']
    %16 = vsyncpa [#allocation3], 0
    %s17 = scalar_lea.sflag [#allocation3], 1
    %18 = vsyncpa %s17, 0
    %19 = vsyncpa [#allocation6], 0
    %20 = vsyncpa [#allocation9], 0
    %21 = vsyncpa [#allocation12], 0
    %22 = vsyncpa [#allocation15], 0
    %23 = vsyncpa [#allocation18], 0
    %24 = vsyncpa [#allocation4], 0
    %s25 = scalar_lea.sflag [#allocation4], 1
    %26 = vsyncpa %s25, 0
    loop: start=0, step=1, limit=4
    $region2: #{tpu_custom_call.1} parent=1 // loop_pre_header
      _
    $region3: #{tpu_custom_call.1} parent=1 // loop_header
      %s28 = sphi 0, %s32
      %p29 = scmp.ge.s32.totalorder %s28, 4
      %s38 = sphi 0, %s40
      %s41 = sphi 0, %s38
      %s42 = sphi 0, %s41
      %s58 = sphi 0, %s42
      %s62 = sphi 0, %s62
      %s64 = sphi 0, %s62
      %s65 = sphi 0, %s64
      %s79 = sphi 0, %s65
      %s83 = sphi 0, %s83
      %s85 = sphi 0, %s83
      %s86 = sphi 0, %s85
      %s100 = sphi 0, %s86
      %s104 = sphi 0, %s104
      %s106 = sphi 0, %s104
      %s107 = sphi 0, %s106
      %s121 = sphi 0, %s107
      %s125 = sphi 0, %s125
      %s127 = sphi 0, %s125
      %s128 = sphi 0, %s127
      %s142 = sphi 0, %s128
      %s146 = sphi 0, %s146
      %s148 = sphi 0, %s146
      %s149 = sphi 0, %s148
      %s163 = sphi 0, %s149
      %s167 = sphi 0, %s167
      %s169 = sphi 0, %s167
      %s170 = sphi 0, %s169
      %s184 = sphi 0, %s170
      %s188 = sphi 0, %s188
      %s190 = sphi 0, %s188
      %s191 = sphi 0, %s190
      %s205 = sphi 0, %s191
      %s209 = sphi 0, %s209
      %s211 = sphi 0, %s209
      %s212 = sphi 0, %s211
      %s226 = sphi 0, %s212
      %s230 = sphi 0, %s230
      %s232 = sphi 0, %s230
      %s233 = sphi 0, %s232
      %s247 = sphi 0, %s233
      %s251 = sphi 0, %s251
      %s253 = sphi 0, %s251
      %s254 = sphi 0, %s253
      %s268 = sphi 0, %s254
      %s274 = sphi 0, %s276
      %s277 = sphi 0, %s274
      %s278 = sphi 0, %s277
      %s294 = sphi 0, %s278
    $region4: #{tpu_custom_call.1} parent=1 // loop_header_branch
      %31 = sbr.rel (%p29) target = $region8
    $region5: #{tpu_custom_call.1} parent=1 // loop_body
      %s33 = ssub.s32 %s28, 1
      %s34 = ssub.s32 %s28, 2
      %s35 = sadd.s32 %s28, 1
      %s36 = ssub.s32 %s28, %s35
      %p37 = scmp.eq.s32.totalorder %s36, 0
      %s39 = sadd.s32 %s38, 1
      %s40 = scalar_select %p37, %s38, %s39
      %p43 = pneg %p37
      %p44 = scmp.eq.s32.totalorder %s28, 1
      %p45 = por %p43, %p44
      %p46 = scmp.ne.s32.totalorder %s38, %s41
      %p47 = scmp.eq.s32.totalorder %s28, 0
      %p48 = por %p46, %p47
      %p49 = scmp.ne.s32.totalorder %s38, %s41
      %p50 = scmp.eq.s32.totalorder %s33, 1
      %p51 = por %p49, %p50
      %p52 = scmp.ne.s32.totalorder %s41, %s42
      %p53 = scmp.eq.s32.totalorder %s33, 0
      %p54 = por %p52, %p53
      %p55 = scmp.ne.s32.totalorder %s41, %s42
      %p56 = scmp.eq.s32.totalorder %s34, 1
      %p57 = por %p55, %p56
      %p59 = scmp.ne.s32.totalorder %s42, %s58
      %p60 = scmp.eq.s32.totalorder %s34, 0
      %p61 = por %p59, %p60
      %s63 = sadd.s32 %s62, 1
      %p66 = scmp.eq.s32.totalorder %s28, 1
      %p67 = scmp.ne.s32.totalorder %s62, %s64
      %p68 = scmp.eq.s32.totalorder %s28, 0
      %p69 = por %p67, %p68
      %p70 = scmp.ne.s32.totalorder %s62, %s64
      %p71 = scmp.eq.s32.totalorder %s33, 1
      %p72 = por %p70, %p71
      %p73 = scmp.ne.s32.totalorder %s64, %s65
      %p74 = scmp.eq.s32.totalorder %s33, 0
      %p75 = por %p73, %p74
      %p76 = scmp.ne.s32.totalorder %s64, %s65
      %p77 = scmp.eq.s32.totalorder %s34, 1
      %p78 = por %p76, %p77
      %p80 = scmp.ne.s32.totalorder %s65, %s79
      %p81 = scmp.eq.s32.totalorder %s34, 0
      %p82 = por %p80, %p81
      %s84 = sadd.s32 %s83, 1
      %p87 = scmp.eq.s32.totalorder %s28, 1
      %p88 = scmp.ne.s32.totalorder %s83, %s85
      %p89 = scmp.eq.s32.totalorder %s28, 0
      %p90 = por %p88, %p89
      %p91 = scmp.ne.s32.totalorder %s83, %s85
      %p92 = scmp.eq.s32.totalorder %s33, 1
      %p93 = por %p91, %p92
      %p94 = scmp.ne.s32.totalorder %s85, %s86
      %p95 = scmp.eq.s32.totalorder %s33, 0
      %p96 = por %p94, %p95
      %p97 = scmp.ne.s32.totalorder %s85, %s86
      %p98 = scmp.eq.s32.totalorder %s34, 1
      %p99 = por %p97, %p98
      %p101 = scmp.ne.s32.totalorder %s86, %s100
      %p102 = scmp.eq.s32.totalorder %s34, 0
      %p103 = por %p101, %p102
      %s105 = sadd.s32 %s104, 1
      %p108 = scmp.eq.s32.totalorder %s28, 1
      %p109 = scmp.ne.s32.totalorder %s104, %s106
      %p110 = scmp.eq.s32.totalorder %s28, 0
      %p111 = por %p109, %p110
      %p112 = scmp.ne.s32.totalorder %s104, %s106
      %p113 = scmp.eq.s32.totalorder %s33, 1
      %p114 = por %p112, %p113
      %p115 = scmp.ne.s32.totalorder %s106, %s107
      %p116 = scmp.eq.s32.totalorder %s33, 0
      %p117 = por %p115, %p116
      %p118 = scmp.ne.s32.totalorder %s106, %s107
      %p119 = scmp.eq.s32.totalorder %s34, 1
      %p120 = por %p118, %p119
      %p122 = scmp.ne.s32.totalorder %s107, %s121
      %p123 = scmp.eq.s32.totalorder %s34, 0
      %p124 = por %p122, %p123
      %s126 = sadd.s32 %s125, 1
      %p129 = scmp.eq.s32.totalorder %s28, 1
      %p130 = scmp.ne.s32.totalorder %s125, %s127
      %p131 = scmp.eq.s32.totalorder %s28, 0
      %p132 = por %p130, %p131
      %p133 = scmp.ne.s32.totalorder %s125, %s127
      %p134 = scmp.eq.s32.totalorder %s33, 1
      %p135 = por %p133, %p134
      %p136 = scmp.ne.s32.totalorder %s127, %s128
      %p137 = scmp.eq.s32.totalorder %s33, 0
      %p138 = por %p136, %p137
      %p139 = scmp.ne.s32.totalorder %s127, %s128
      %p140 = scmp.eq.s32.totalorder %s34, 1
      %p141 = por %p139, %p140
      %p143 = scmp.ne.s32.totalorder %s128, %s142
      %p144 = scmp.eq.s32.totalorder %s34, 0
      %p145 = por %p143, %p144
      %s147 = sadd.s32 %s146, 1
      %p150 = scmp.eq.s32.totalorder %s28, 1
      %p151 = scmp.ne.s32.totalorder %s146, %s148
      %p152 = scmp.eq.s32.totalorder %s28, 0
      %p153 = por %p151, %p152
      %p154 = scmp.ne.s32.totalorder %s146, %s148
      %p155 = scmp.eq.s32.totalorder %s33, 1
      %p156 = por %p154, %p155
      %p157 = scmp.ne.s32.totalorder %s148, %s149
      %p158 = scmp.eq.s32.totalorder %s33, 0
      %p159 = por %p157, %p158
      %p160 = scmp.ne.s32.totalorder %s148, %s149
      %p161 = scmp.eq.s32.totalorder %s34, 1
      %p162 = por %p160, %p161
      %p164 = scmp.ne.s32.totalorder %s149, %s163
      %p165 = scmp.eq.s32.totalorder %s34, 0
      %p166 = por %p164, %p165
      %s168 = sadd.s32 %s167, 1
      %p171 = scmp.eq.s32.totalorder %s28, 1
      %p172 = scmp.ne.s32.totalorder %s167, %s169
      %p173 = scmp.eq.s32.totalorder %s28, 0
      %p174 = por %p172, %p173
      %p175 = scmp.ne.s32.totalorder %s167, %s169
      %p176 = scmp.eq.s32.totalorder %s33, 1
      %p177 = por %p175, %p176
      %p178 = scmp.ne.s32.totalorder %s169, %s170
      %p179 = scmp.eq.s32.totalorder %s33, 0
      %p180 = por %p178, %p179
      %p181 = scmp.ne.s32.totalorder %s169, %s170
      %p182 = scmp.eq.s32.totalorder %s34, 1
      %p183 = por %p181, %p182
      %p185 = scmp.ne.s32.totalorder %s170, %s184
      %p186 = scmp.eq.s32.totalorder %s34, 0
      %p187 = por %p185, %p186
      %s189 = sadd.s32 %s188, 1
      %p192 = scmp.eq.s32.totalorder %s28, 1
      %p193 = scmp.ne.s32.totalorder %s188, %s190
      %p194 = scmp.eq.s32.totalorder %s28, 0
      %p195 = por %p193, %p194
      %p196 = scmp.ne.s32.totalorder %s188, %s190
      %p197 = scmp.eq.s32.totalorder %s33, 1
      %p198 = por %p196, %p197
      %p199 = scmp.ne.s32.totalorder %s190, %s191
      %p200 = scmp.eq.s32.totalorder %s33, 0
      %p201 = por %p199, %p200
      %p202 = scmp.ne.s32.totalorder %s190, %s191
      %p203 = scmp.eq.s32.totalorder %s34, 1
      %p204 = por %p202, %p203
      %p206 = scmp.ne.s32.totalorder %s191, %s205
      %p207 = scmp.eq.s32.totalorder %s34, 0
      %p208 = por %p206, %p207
      %s210 = sadd.s32 %s209, 1
      %p213 = scmp.eq.s32.totalorder %s28, 1
      %p214 = scmp.ne.s32.totalorder %s209, %s211
      %p215 = scmp.eq.s32.totalorder %s28, 0
      %p216 = por %p214, %p215
      %p217 = scmp.ne.s32.totalorder %s209, %s211
      %p218 = scmp.eq.s32.totalorder %s33, 1
      %p219 = por %p217, %p218
      %p220 = scmp.ne.s32.totalorder %s211, %s212
      %p221 = scmp.eq.s32.totalorder %s33, 0
      %p222 = por %p220, %p221
      %p223 = scmp.ne.s32.totalorder %s211, %s212
      %p224 = scmp.eq.s32.totalorder %s34, 1
      %p225 = por %p223, %p224
      %p227 = scmp.ne.s32.totalorder %s212, %s226
      %p228 = scmp.eq.s32.totalorder %s34, 0
      %p229 = por %p227, %p228
      %s231 = sadd.s32 %s230, 1
      %p234 = scmp.eq.s32.totalorder %s28, 1
      %p235 = scmp.ne.s32.totalorder %s230, %s232
      %p236 = scmp.eq.s32.totalorder %s28, 0
      %p237 = por %p235, %p236
      %p238 = scmp.ne.s32.totalorder %s230, %s232
      %p239 = scmp.eq.s32.totalorder %s33, 1
      %p240 = por %p238, %p239
      %p241 = scmp.ne.s32.totalorder %s232, %s233
      %p242 = scmp.eq.s32.totalorder %s33, 0
      %p243 = por %p241, %p242
      %p244 = scmp.ne.s32.totalorder %s232, %s233
      %p245 = scmp.eq.s32.totalorder %s34, 1
      %p246 = por %p244, %p245
      %p248 = scmp.ne.s32.totalorder %s233, %s247
      %p249 = scmp.eq.s32.totalorder %s34, 0
      %p250 = por %p248, %p249
      %s252 = sadd.s32 %s251, 1
      %p255 = scmp.eq.s32.totalorder %s28, 1
      %p256 = scmp.ne.s32.totalorder %s251, %s253
      %p257 = scmp.eq.s32.totalorder %s28, 0
      %p258 = por %p256, %p257
      %p259 = scmp.ne.s32.totalorder %s251, %s253
      %p260 = scmp.eq.s32.totalorder %s33, 1
      %p261 = por %p259, %p260
      %p262 = scmp.ne.s32.totalorder %s253, %s254
      %p263 = scmp.eq.s32.totalorder %s33, 0
      %p264 = por %p262, %p263
      %p265 = scmp.ne.s32.totalorder %s253, %s254
      %p266 = scmp.eq.s32.totalorder %s34, 1
      %p267 = por %p265, %p266
      %p269 = scmp.ne.s32.totalorder %s254, %s268
      %p270 = scmp.eq.s32.totalorder %s34, 0
      %p271 = por %p269, %p270
      %s272 = ssub.s32 %s28, %s35
      %p273 = scmp.eq.s32.totalorder %s272, 0
      %s275 = sadd.s32 %s274, 1
      %s276 = scalar_select %p273, %s274, %s275
      %p279 = pneg %p273
      %p280 = scmp.eq.s32.totalorder %s28, 1
      %p281 = por %p279, %p280
      %p282 = scmp.ne.s32.totalorder %s274, %s277
      %p283 = scmp.eq.s32.totalorder %s28, 0
      %p284 = por %p282, %p283
      %p285 = scmp.ne.s32.totalorder %s274, %s277
      %p286 = scmp.eq.s32.totalorder %s33, 1
      %p287 = por %p285, %p286
      %p288 = scmp.ne.s32.totalorder %s277, %s278
      %p289 = scmp.eq.s32.totalorder %s33, 0
      %p290 = por %p288, %p289
      %p291 = scmp.ne.s32.totalorder %s277, %s278
      %p292 = scmp.eq.s32.totalorder %s34, 1
      %p293 = por %p291, %p292
      %p295 = scmp.ne.s32.totalorder %s278, %s294
      %p296 = scmp.eq.s32.totalorder %s34, 0
      %p297 = por %p295, %p296
      %p298 = scmp.le.s32.totalorder 1, %s28
      %p299 = scmp.lt.s32.totalorder %s28, 3
      %p300 = pnand %p298, %p299
      %p301 = pneg %p300
      // Predicated region
      $region9: #{tpu_custom_call.1} parent=5 // pred_check
        _
      $region10: #{tpu_custom_call.1} parent=5 // pred_check_branch
        %303 = sbr.rel (%p300) target = $region12
      $region11: #{tpu_custom_call.1} parent=5 // pred_region
        %s304 = ssub.s32 %s28, 1
        // Predicated region
        $region13: #{tpu_custom_call.1} parent=11 // pred_check
          %p305 = pneg %p75
        $region14: #{tpu_custom_call.1} parent=11 // pred_check_branch
          %307 = sbr.rel (%p305) target = $region16
        $region15: #{tpu_custom_call.1} parent=11 // pred_region
          %s309 = ssub.s32 4096, 4096
          %310 = vsyncadd [#allocation6], %s309
          %s311 = sshll.u32 [#allocation5], 4
          %s312 = int_to_ptr.vmem [resolvable:$true] %s311
          %317 = dma.hbm_to_vmem [thread:$0]  %s1, 4096, %s312, [#allocation6], 128, 128, 8
        $region16: #{tpu_custom_call.1} parent=11 // pred_fallthru
          _
        // Predicated region
        $region17: #{tpu_custom_call.1} parent=11 // pred_check
          %p318 = pneg %p96
        $region18: #{tpu_custom_call.1} parent=11 // pred_check_branch
          %320 = sbr.rel (%p318) target = $region20
        $region19: #{tpu_custom_call.1} parent=11 // pred_region
          %s322 = ssub.s32 2048, 2048
          %323 = vsyncadd [#allocation6], %s322
          %s324 = sshll.u32 [#allocation7], 4
          %s325 = int_to_ptr.vmem [resolvable:$true] %s324
          %330 = dma.hbm_to_vmem [thread:$0]  %s2, 2048, %s325, [#allocation6], 128, 128, 8
        $region20: #{tpu_custom_call.1} parent=11 // pred_fallthru
          _
        // Predicated region
        $region21: #{tpu_custom_call.1} parent=11 // pred_check
          %p331 = pneg %p117
        $region22: #{tpu_custom_call.1} parent=11 // pred_check_branch
          %333 = sbr.rel (%p331) target = $region24
        $region23: #{tpu_custom_call.1} parent=11 // pred_region
          %s335 = ssub.s32 2048, 2048
          %336 = vsyncadd [#allocation9], %s335
          %s337 = sshll.u32 [#allocation8], 4
          %s338 = int_to_ptr.vmem [resolvable:$true] %s337
          %343 = dma.hbm_to_vmem [thread:$0]  %s3, 2048, %s338, [#allocation9], 64, 64, 4
        $region24: #{tpu_custom_call.1} parent=11 // pred_fallthru
          _
        // Predicated region
        $region25: #{tpu_custom_call.1} parent=11 // pred_check
          %p344 = pneg %p138
        $region26: #{tpu_custom_call.1} parent=11 // pred_check_branch
          %346 = sbr.rel (%p344) target = $region28
        $region27: #{tpu_custom_call.1} parent=11 // pred_region
          %s348 = ssub.s32 2048, 2048
          %349 = vsyncadd [#allocation9], %s348
          %s350 = sshll.u32 [#allocation10], 4
          %s351 = int_to_ptr.vmem [resolvable:$true] %s350
          %356 = dma.hbm_to_vmem [thread:$0]  %s4, 2048, %s351, [#allocation9], 64, 64, 4
        $region28: #{tpu_custom_call.1} parent=11 // pred_fallthru
          _
        // Predicated region
        $region29: #{tpu_custom_call.1} parent=11 // pred_check
          %p357 = pneg %p159
        $region30: #{tpu_custom_call.1} parent=11 // pred_check_branch
          %359 = sbr.rel (%p357) target = $region32
        $region31: #{tpu_custom_call.1} parent=11 // pred_region
          %s361 = ssub.s32 2048, 2048
          %362 = vsyncadd [#allocation12], %s361
          %s363 = sshll.u32 [#allocation11], 4
          %s364 = int_to_ptr.vmem [resolvable:$true] %s363
          %369 = dma.hbm_to_vmem [thread:$0]  %s5, 2048, %s364, [#allocation12], 128, 128, 8
        $region32: #{tpu_custom_call.1} parent=11 // pred_fallthru
          _
        // Predicated region
        $region33: #{tpu_custom_call.1} parent=11 // pred_check
          %p370 = pneg %p180
        $region34: #{tpu_custom_call.1} parent=11 // pred_check_branch
          %372 = sbr.rel (%p370) target = $region36
        $region35: #{tpu_custom_call.1} parent=11 // pred_region
          %s374 = ssub.s32 2048, 2048
          %375 = vsyncadd [#allocation12], %s374
          %s376 = sshll.u32 [#allocation13], 4
          %s377 = int_to_ptr.vmem [resolvable:$true] %s376
          %382 = dma.hbm_to_vmem [thread:$0]  %s6, 2048, %s377, [#allocation12], 64, 64, 4
        $region36: #{tpu_custom_call.1} parent=11 // pred_fallthru
          _
        // Predicated region
        $region37: #{tpu_custom_call.1} parent=11 // pred_check
          %p383 = pneg %p201
        $region38: #{tpu_custom_call.1} parent=11 // pred_check_branch
          %385 = sbr.rel (%p383) target = $region40
        $region39: #{tpu_custom_call.1} parent=11 // pred_region
          %s387 = ssub.s32 1024, 1024
          %388 = vsyncadd [#allocation15], %s387
          %s389 = sshll.u32 [#allocation14], 4
          %s390 = int_to_ptr.vmem [resolvable:$true] %s389
          %395 = dma.hbm_to_vmem [thread:$0]  %s7, 1024, %s390, [#allocation15], 64, 64, 4
        $region40: #{tpu_custom_call.1} parent=11 // pred_fallthru
          _
        // Predicated region
        $region41: #{tpu_custom_call.1} parent=11 // pred_check
          %p396 = pneg %p222
        $region42: #{tpu_custom_call.1} parent=11 // pred_check_branch
          %398 = sbr.rel (%p396) target = $region44
        $region43: #{tpu_custom_call.1} parent=11 // pred_region
          %s400 = ssub.s32 1024, 1024
          %401 = vsyncadd [#allocation15], %s400
          %s402 = sshll.u32 [#allocation16], 4
          %s403 = int_to_ptr.vmem [resolvable:$true] %s402
          %408 = dma.hbm_to_vmem [thread:$0]  %s8, 1024, %s403, [#allocation15], 64, 64, 4
        $region44: #{tpu_custom_call.1} parent=11 // pred_fallthru
          _
        // Predicated region
        $region45: #{tpu_custom_call.1} parent=11 // pred_check
          %p409 = pneg %p243
        $region46: #{tpu_custom_call.1} parent=11 // pred_check_branch
          %411 = sbr.rel (%p409) target = $region48
        $region47: #{tpu_custom_call.1} parent=11 // pred_region
          %s413 = ssub.s32 2048, 2048
          %414 = vsyncadd [#allocation18], %s413
          %s415 = sshll.u32 [#allocation17], 4
          %s416 = int_to_ptr.vmem [resolvable:$true] %s415
          %421 = dma.hbm_to_vmem [thread:$0]  %s9, 2048, %s416, [#allocation18], 64, 64, 4
        $region48: #{tpu_custom_call.1} parent=11 // pred_fallthru
          _
        // Predicated region
        $region49: #{tpu_custom_call.1} parent=11 // pred_check
          %p422 = pneg %p264
        $region50: #{tpu_custom_call.1} parent=11 // pred_check_branch
          %424 = sbr.rel (%p422) target = $region52
        $region51: #{tpu_custom_call.1} parent=11 // pred_region
          %s426 = ssub.s32 512, 512
          %427 = vsyncadd [#allocation18], %s426
          %s428 = sshll.u32 [#allocation19], 4
          %s429 = int_to_ptr.vmem [resolvable:$true] %s428
          %434 = dma.hbm_to_vmem [thread:$0]  %s10, 512, %s429, [#allocation18], 256, 256, 16
        $region52: #{tpu_custom_call.1} parent=11 // pred_fallthru
          _
      $region12: #{tpu_custom_call.1} parent=5 // pred_fallthru
        _
      %p435 = scmp.lt.s32.totalorder %s28, 2
      // Predicated region
      $region53: #{tpu_custom_call.1} parent=5 // pred_check
        %p436 = pneg %p435
      $region54: #{tpu_custom_call.1} parent=5 // pred_check_branch
        %438 = sbr.rel (%p436) target = $region56
      $region55: #{tpu_custom_call.1} parent=5 // pred_region
        // Predicated region
        $region57: #{tpu_custom_call.1} parent=55 // pred_check
          %p439 = pneg %p48
        $region58: #{tpu_custom_call.1} parent=55 // pred_check_branch
          %441 = sbr.rel (%p439) target = $region60
        $region59: #{tpu_custom_call.1} parent=55 // pred_region
          %s442 = sand.u32 %s38, 1
          %s443 = scalar_lea.sflag [#allocation3], %s442
          %s444 = sand.u32 %s38, 1
          %s445 = smul.addr %s444, 128
          %s446 = scalar_lea.vmem [#allocation2], %s445
          %s447 = smul.u32 16, %s28
          %s449 = ssub.s32 2048, 2048
          %450 = vsyncadd %s443, %s449
          %s451 = smul.addr %s447, 128
          %s452 = scalar_lea.hbm %s0, %s451
          %s453 = sshll.u32 %s446, 4
          %s454 = int_to_ptr.vmem [resolvable:$true] %s453
          %459 = dma.hbm_to_vmem [thread:$0]  %s452, 2048, %s454, %s443, 128, 128, 8
        $region60: #{tpu_custom_call.1} parent=55 // pred_fallthru
          _
      $region56: #{tpu_custom_call.1} parent=5 // pred_fallthru
        _
      %p460 = scmp.le.s32.totalorder 1, %s28
      %p461 = scmp.lt.s32.totalorder %s28, 3
      %p462 = pnand %p460, %p461
      %p463 = pneg %p462
      // Predicated region
      $region61: #{tpu_custom_call.1} parent=5 // pred_check
        _
      $region62: #{tpu_custom_call.1} parent=5 // pred_check_branch
        %465 = sbr.rel (%p462) target = $region64
      $region63: #{tpu_custom_call.1} parent=5 // pred_region
        %s466 = ssub.s32 %s28, 1
        %s467 = sand.u32 %s41, 1
        %s468 = scalar_lea.sflag [#allocation3], %s467
        %s469 = sand.u32 %s41, 1
        %s470 = smul.addr %s469, 128
        %s471 = scalar_lea.vmem [#allocation2], %s470
        // Predicated region
        $region65: #{tpu_custom_call.1} parent=63 // pred_check
          %p472 = pneg %p54
        $region66: #{tpu_custom_call.1} parent=63 // pred_check_branch
          %474 = sbr.rel (%p472) target = $region68
        $region67: #{tpu_custom_call.1} parent=63 // pred_region
          %475 = dma.done %s468, 2048
        $region68: #{tpu_custom_call.1} parent=63 // pred_fallthru
          _
        // Predicated region
        $region69: #{tpu_custom_call.1} parent=63 // pred_check
          %p476 = pneg %p75
        $region70: #{tpu_custom_call.1} parent=63 // pred_check_branch
          %478 = sbr.rel (%p476) target = $region72
        $region71: #{tpu_custom_call.1} parent=63 // pred_region
          %479 = dma.done [#allocation6], 4096
        $region72: #{tpu_custom_call.1} parent=63 // pred_fallthru
          _
        // Predicated region
        $region73: #{tpu_custom_call.1} parent=63 // pred_check
          %p480 = pneg %p96
        $region74: #{tpu_custom_call.1} parent=63 // pred_check_branch
          %482 = sbr.rel (%p480) target = $region76
        $region75: #{tpu_custom_call.1} parent=63 // pred_region
          %483 = dma.done [#allocation6], 2048
        $region76: #{tpu_custom_call.1} parent=63 // pred_fallthru
          _
        // Predicated region
        $region77: #{tpu_custom_call.1} parent=63 // pred_check
          %p484 = pneg %p117
        $region78: #{tpu_custom_call.1} parent=63 // pred_check_branch
          %486 = sbr.rel (%p484) target = $region80
        $region79: #{tpu_custom_call.1} parent=63 // pred_region
          %487 = dma.done [#allocation9], 2048
        $region80: #{tpu_custom_call.1} parent=63 // pred_fallthru
          _
        // Predicated region
        $region81: #{tpu_custom_call.1} parent=63 // pred_check
          %p488 = pneg %p138
        $region82: #{tpu_custom_call.1} parent=63 // pred_check_branch
          %490 = sbr.rel (%p488) target = $region84
        $region83: #{tpu_custom_call.1} parent=63 // pred_region
          %491 = dma.done [#allocation9], 2048
        $region84: #{tpu_custom_call.1} parent=63 // pred_fallthru
          _
        // Predicated region
        $region85: #{tpu_custom_call.1} parent=63 // pred_check
          %p492 = pneg %p159
        $region86: #{tpu_custom_call.1} parent=63 // pred_check_branch
          %494 = sbr.rel (%p492) target = $region88
        $region87: #{tpu_custom_call.1} parent=63 // pred_region
          %495 = dma.done [#allocation12], 2048
        $region88: #{tpu_custom_call.1} parent=63 // pred_fallthru
          _
        // Predicated region
        $region89: #{tpu_custom_call.1} parent=63 // pred_check
          %p496 = pneg %p180
        $region90: #{tpu_custom_call.1} parent=63 // pred_check_branch
          %498 = sbr.rel (%p496) target = $region92
        $region91: #{tpu_custom_call.1} parent=63 // pred_region
          %499 = dma.done [#allocation12], 2048
        $region92: #{tpu_custom_call.1} parent=63 // pred_fallthru
          _
        // Predicated region
        $region93: #{tpu_custom_call.1} parent=63 // pred_check
          %p500 = pneg %p201
        $region94: #{tpu_custom_call.1} parent=63 // pred_check_branch
          %502 = sbr.rel (%p500) target = $region96
        $region95: #{tpu_custom_call.1} parent=63 // pred_region
          %503 = dma.done [#allocation15], 1024
        $region96: #{tpu_custom_call.1} parent=63 // pred_fallthru
          _
        // Predicated region
        $region97: #{tpu_custom_call.1} parent=63 // pred_check
          %p504 = pneg %p222
        $region98: #{tpu_custom_call.1} parent=63 // pred_check_branch
          %506 = sbr.rel (%p504) target = $region100
        $region99: #{tpu_custom_call.1} parent=63 // pred_region
          %507 = dma.done [#allocation15], 1024
        $region100: #{tpu_custom_call.1} parent=63 // pred_fallthru
          _
        // Predicated region
        $region101: #{tpu_custom_call.1} parent=63 // pred_check
          %p508 = pneg %p243
        $region102: #{tpu_custom_call.1} parent=63 // pred_check_branch
          %510 = sbr.rel (%p508) target = $region104
        $region103: #{tpu_custom_call.1} parent=63 // pred_region
          %511 = dma.done [#allocation18], 2048
        $region104: #{tpu_custom_call.1} parent=63 // pred_fallthru
          _
        // Predicated region
        $region105: #{tpu_custom_call.1} parent=63 // pred_check
          %p512 = pneg %p264
        $region106: #{tpu_custom_call.1} parent=63 // pred_check_branch
          %514 = sbr.rel (%p512) target = $region108
        $region107: #{tpu_custom_call.1} parent=63 // pred_region
          %515 = dma.done [#allocation18], 512
        $region108: #{tpu_custom_call.1} parent=63 // pred_fallthru
          _
        %s516 = sand.u32 %s41, 1
        %s517 = scalar_lea.sflag [#allocation3], %s516
        %s518 = sand.u32 %s41, 1
        %s519 = smul.addr %s518, 128
        %s520 = scalar_lea.vmem [#allocation2], %s519
        %p521 = pneg %p54
        %p522 = pneg %p51
        %p523 = pneg %p75
        %p524 = pneg %p72
        %p525 = pneg %p96
        %p526 = pneg %p93
        %p527 = pneg %p117
        %p528 = pneg %p114
        %p529 = pneg %p138
        %p530 = pneg %p135
        %p531 = pneg %p159
        %p532 = pneg %p156
        %p533 = pneg %p180
        %p534 = pneg %p177
        %p535 = pneg %p201
        %p536 = pneg %p198
        %p537 = pneg %p222
        %p538 = pneg %p219
        %p539 = pneg %p243
        %p540 = pneg %p240
        %p541 = pneg %p264
        %p542 = pneg %p261
        %p543 = pneg %p290
        %p544 = pneg %p287
        %s545 = sand.u32 %s277, 1
        %s546 = scalar_lea.sflag [#allocation4], %s545
        %s547 = sand.u32 %s277, 1
        %s548 = smul.addr %s547, 128
        %s549 = scalar_lea.vmem [#allocation20], %s548
        %s550 = smul.u32 16, %s33
        %s551 = smul.u32 16, %s33
        %v553 = vld [vmem:[%s471] sm:$0xff]
        %v554 = vld [vmem:[%s471 + $0x8] sm:$0xff]
        %v555 = vld [vmem:[%s471 + $0x10] sm:$0xff]
        %v556 = vld [vmem:[%s471 + $0x18] sm:$0xff]
        %v557 = vld [vmem:[%s471 + $0x20] sm:$0xff]
        %v558 = vld [vmem:[%s471 + $0x28] sm:$0xff]
        %v559 = vld [vmem:[%s471 + $0x30] sm:$0xff]
        %v560 = vld [vmem:[%s471 + $0x38] sm:$0xff]
        %v561 = vld [vmem:[%s471 + $0x40] sm:$0xff]
        %v562 = vld [vmem:[%s471 + $0x48] sm:$0xff]
        %v563 = vld [vmem:[%s471 + $0x50] sm:$0xff]
        %v564 = vld [vmem:[%s471 + $0x58] sm:$0xff]
        %v565 = vld [vmem:[%s471 + $0x60] sm:$0xff]
        %v566 = vld [vmem:[%s471 + $0x68] sm:$0xff]
        %v567 = vld [vmem:[%s471 + $0x70] sm:$0xff]
        %v568 = vld [vmem:[%s471 + $0x78] sm:$0xff]
        %v569 = vld [vmem:[#allocation5] sm:$0xff]
        %v570 = vld [vmem:[#allocation5 + $0x8] sm:$0xff]
        %v571 = vld [vmem:[#allocation5 + $0x10] sm:$0xff]
        %v572 = vld [vmem:[#allocation5 + $0x18] sm:$0xff]
        %v573 = vld [vmem:[#allocation5 + $0x20] sm:$0xff]
        %v574 = vld [vmem:[#allocation5 + $0x28] sm:$0xff]
        %v575 = vld [vmem:[#allocation5 + $0x30] sm:$0xff]
        %v576 = vld [vmem:[#allocation5 + $0x38] sm:$0xff]
        %v577 = vld [vmem:[#allocation5 + $0x40] sm:$0xff]
        %v578 = vld [vmem:[#allocation5 + $0x48] sm:$0xff]
        %v579 = vld [vmem:[#allocation5 + $0x50] sm:$0xff]
        %v580 = vld [vmem:[#allocation5 + $0x58] sm:$0xff]
        %v581 = vld [vmem:[#allocation5 + $0x60] sm:$0xff]
        %v582 = vld [vmem:[#allocation5 + $0x68] sm:$0xff]
        %v583 = vld [vmem:[#allocation5 + $0x70] sm:$0xff]
        %v584 = vld [vmem:[#allocation5 + $0x78] sm:$0xff]
        %v585 = vld [vmem:[#allocation5 + $0x80] sm:$0xff]
        %v586 = vld [vmem:[#allocation5 + $0x88] sm:$0xff]
        %v587 = vld [vmem:[#allocation5 + $0x90] sm:$0xff]
        %v588 = vld [vmem:[#allocation5 + $0x98] sm:$0xff]
        %v589 = vld [vmem:[#allocation5 + $0xa0] sm:$0xff]
        %v590 = vld [vmem:[#allocation5 + $0xa8] sm:$0xff]
        %v591 = vld [vmem:[#allocation5 + $0xb0] sm:$0xff]
        %v592 = vld [vmem:[#allocation5 + $0xb8] sm:$0xff]
        %v593 = vld [vmem:[#allocation5 + $0xc0] sm:$0xff]
        %v594 = vld [vmem:[#allocation5 + $0xc8] sm:$0xff]
        %v595 = vld [vmem:[#allocation5 + $0xd0] sm:$0xff]
        %v596 = vld [vmem:[#allocation5 + $0xd8] sm:$0xff]
        %v597 = vld [vmem:[#allocation5 + $0xe0] sm:$0xff]
        %v598 = vld [vmem:[#allocation5 + $0xe8] sm:$0xff]
        %v599 = vld [vmem:[#allocation5 + $0xf0] sm:$0xff]
        %v600 = vld [vmem:[#allocation5 + $0xf8] sm:$0xff]
        %v601 = vld [vmem:[#allocation7] sm:$0xff]
        %v602 = vld [vmem:[#allocation7 + $0x8] sm:$0xff]
        %v603 = vld [vmem:[#allocation7 + $0x10] sm:$0xff]
        %v604 = vld [vmem:[#allocation7 + $0x18] sm:$0xff]
        %v605 = vld [vmem:[#allocation7 + $0x20] sm:$0xff]
        %v606 = vld [vmem:[#allocation7 + $0x28] sm:$0xff]
        %v607 = vld [vmem:[#allocation7 + $0x30] sm:$0xff]
        %v608 = vld [vmem:[#allocation7 + $0x38] sm:$0xff]
        %v609 = vld [vmem:[#allocation7 + $0x40] sm:$0xff]
        %v610 = vld [vmem:[#allocation7 + $0x48] sm:$0xff]
        %v611 = vld [vmem:[#allocation7 + $0x50] sm:$0xff]
        %v612 = vld [vmem:[#allocation7 + $0x58] sm:$0xff]
        %v613 = vld [vmem:[#allocation7 + $0x60] sm:$0xff]
        %v614 = vld [vmem:[#allocation7 + $0x68] sm:$0xff]
        %v615 = vld [vmem:[#allocation7 + $0x70] sm:$0xff]
        %v616 = vld [vmem:[#allocation7 + $0x78] sm:$0xff]
        %v617 = vld [vmem:[#allocation8] sm:$0xf]
        %v618 = vld [vmem:[#allocation8 + $0x4] sm:$0xf]
        %v619 = vld [vmem:[#allocation8 + $0x8] sm:$0xf]
        %v620 = vld [vmem:[#allocation8 + $0xc] sm:$0xf]
        %v621 = vld [vmem:[#allocation8 + $0x10] sm:$0xf]
        %v622 = vld [vmem:[#allocation8 + $0x14] sm:$0xf]
        %v623 = vld [vmem:[#allocation8 + $0x18] sm:$0xf]
        %v624 = vld [vmem:[#allocation8 + $0x1c] sm:$0xf]
        %v625 = vld [vmem:[#allocation8 + $0x20] sm:$0xf]
        %v626 = vld [vmem:[#allocation8 + $0x24] sm:$0xf]
        %v627 = vld [vmem:[#allocation8 + $0x28] sm:$0xf]
        %v628 = vld [vmem:[#allocation8 + $0x2c] sm:$0xf]
        %v629 = vld [vmem:[#allocation8 + $0x30] sm:$0xf]
        %v630 = vld [vmem:[#allocation8 + $0x34] sm:$0xf]
        %v631 = vld [vmem:[#allocation8 + $0x38] sm:$0xf]
        %v632 = vld [vmem:[#allocation8 + $0x3c] sm:$0xf]
        %v633 = vld [vmem:[#allocation10] sm:$0xf]
        %v634 = vld [vmem:[#allocation10 + $0x4] sm:$0xf]
        %v635 = vld [vmem:[#allocation10 + $0x8] sm:$0xf]
        %v636 = vld [vmem:[#allocation10 + $0xc] sm:$0xf]
        %v637 = vld [vmem:[#allocation10 + $0x10] sm:$0xf]
        %v638 = vld [vmem:[#allocation10 + $0x14] sm:$0xf]
        %v639 = vld [vmem:[#allocation10 + $0x18] sm:$0xf]
        %v640 = vld [vmem:[#allocation10 + $0x1c] sm:$0xf]
        %v641 = vld [vmem:[#allocation10 + $0x20] sm:$0xf]
        %v642 = vld [vmem:[#allocation10 + $0x24] sm:$0xf]
        %v643 = vld [vmem:[#allocation10 + $0x28] sm:$0xf]
        %v644 = vld [vmem:[#allocation10 + $0x2c] sm:$0xf]
        %v645 = vld [vmem:[#allocation10 + $0x30] sm:$0xf]
        %v646 = vld [vmem:[#allocation10 + $0x34] sm:$0xf]
        %v647 = vld [vmem:[#allocation10 + $0x38] sm:$0xf]
        %v648 = vld [vmem:[#allocation10 + $0x3c] sm:$0xf]
        %s649 = scalar_lea.vmem [#allocation8], 64
        %v650 = vld [vmem:[%s649] sm:$0xf]
        %v651 = vld [vmem:[%s649 + $0x4] sm:$0xf]
        %v652 = vld [vmem:[%s649 + $0x8] sm:$0xf]
        %v653 = vld [vmem:[%s649 + $0xc] sm:$0xf]
        %v654 = vld [vmem:[%s649 + $0x10] sm:$0xf]
        %v655 = vld [vmem:[%s649 + $0x14] sm:$0xf]
        %v656 = vld [vmem:[%s649 + $0x18] sm:$0xf]
        %v657 = vld [vmem:[%s649 + $0x1c] sm:$0xf]
        %v658 = vld [vmem:[%s649 + $0x20] sm:$0xf]
        %v659 = vld [vmem:[%s649 + $0x24] sm:$0xf]
        %v660 = vld [vmem:[%s649 + $0x28] sm:$0xf]
        %v661 = vld [vmem:[%s649 + $0x2c] sm:$0xf]
        %v662 = vld [vmem:[%s649 + $0x30] sm:$0xf]
        %v663 = vld [vmem:[%s649 + $0x34] sm:$0xf]
        %v664 = vld [vmem:[%s649 + $0x38] sm:$0xf]
        %v665 = vld [vmem:[%s649 + $0x3c] sm:$0xf]
        %s666 = scalar_lea.vmem [#allocation10], 64
        %v667 = vld [vmem:[%s666] sm:$0xf]
        %v668 = vld [vmem:[%s666 + $0x4] sm:$0xf]
        %v669 = vld [vmem:[%s666 + $0x8] sm:$0xf]
        %v670 = vld [vmem:[%s666 + $0xc] sm:$0xf]
        %v671 = vld [vmem:[%s666 + $0x10] sm:$0xf]
        %v672 = vld [vmem:[%s666 + $0x14] sm:$0xf]
        %v673 = vld [vmem:[%s666 + $0x18] sm:$0xf]
        %v674 = vld [vmem:[%s666 + $0x1c] sm:$0xf]
        %v675 = vld [vmem:[%s666 + $0x20] sm:$0xf]
        %v676 = vld [vmem:[%s666 + $0x24] sm:$0xf]
        %v677 = vld [vmem:[%s666 + $0x28] sm:$0xf]
        %v678 = vld [vmem:[%s666 + $0x2c] sm:$0xf]
        %v679 = vld [vmem:[%s666 + $0x30] sm:$0xf]
        %v680 = vld [vmem:[%s666 + $0x34] sm:$0xf]
        %v681 = vld [vmem:[%s666 + $0x38] sm:$0xf]
        %v682 = vld [vmem:[%s666 + $0x3c] sm:$0xf]
        %v683 = vld [vmem:[#allocation11] sm:$0xff]
        %v684 = vld [vmem:[#allocation11 + $0x8] sm:$0xff]
        %v685 = vld [vmem:[#allocation11 + $0x10] sm:$0xff]
        %v686 = vld [vmem:[#allocation11 + $0x18] sm:$0xff]
        %v687 = vld [vmem:[#allocation11 + $0x20] sm:$0xff]
        %v688 = vld [vmem:[#allocation11 + $0x28] sm:$0xff]
        %v689 = vld [vmem:[#allocation11 + $0x30] sm:$0xff]
        %v690 = vld [vmem:[#allocation11 + $0x38] sm:$0xff]
        %v691 = vld [vmem:[#allocation11 + $0x40] sm:$0xff]
        %v692 = vld [vmem:[#allocation11 + $0x48] sm:$0xff]
        %v693 = vld [vmem:[#allocation11 + $0x50] sm:$0xff]
        %v694 = vld [vmem:[#allocation11 + $0x58] sm:$0xff]
        %v695 = vld [vmem:[#allocation11 + $0x60] sm:$0xff]
        %v696 = vld [vmem:[#allocation11 + $0x68] sm:$0xff]
        %v697 = vld [vmem:[#allocation11 + $0x70] sm:$0xff]
        %v698 = vld [vmem:[#allocation11 + $0x78] sm:$0xff]
        %v699 = vld [vmem:[#allocation13] sm:$0xf]
        %v700 = vld [vmem:[#allocation13 + $0x4] sm:$0xf]
        %v701 = vld [vmem:[#allocation13 + $0x8] sm:$0xf]
        %v702 = vld [vmem:[#allocation13 + $0xc] sm:$0xf]
        %v703 = vld [vmem:[#allocation13 + $0x10] sm:$0xf]
        %v704 = vld [vmem:[#allocation13 + $0x14] sm:$0xf]
        %v705 = vld [vmem:[#allocation13 + $0x18] sm:$0xf]
        %v706 = vld [vmem:[#allocation13 + $0x1c] sm:$0xf]
        %v707 = vld [vmem:[#allocation13 + $0x20] sm:$0xf]
        %v708 = vld [vmem:[#allocation13 + $0x24] sm:$0xf]
        %v709 = vld [vmem:[#allocation13 + $0x28] sm:$0xf]
        %v710 = vld [vmem:[#allocation13 + $0x2c] sm:$0xf]
        %v711 = vld [vmem:[#allocation13 + $0x30] sm:$0xf]
        %v712 = vld [vmem:[#allocation13 + $0x34] sm:$0xf]
        %v713 = vld [vmem:[#allocation13 + $0x38] sm:$0xf]
        %v714 = vld [vmem:[#allocation13 + $0x3c] sm:$0xf]
        %v715 = vld [vmem:[#allocation13 + $0x40] sm:$0xf]
        %v716 = vld [vmem:[#allocation13 + $0x44] sm:$0xf]
        %v717 = vld [vmem:[#allocation13 + $0x48] sm:$0xf]
        %v718 = vld [vmem:[#allocation13 + $0x4c] sm:$0xf]
        %v719 = vld [vmem:[#allocation13 + $0x50] sm:$0xf]
        %v720 = vld [vmem:[#allocation13 + $0x54] sm:$0xf]
        %v721 = vld [vmem:[#allocation13 + $0x58] sm:$0xf]
        %v722 = vld [vmem:[#allocation13 + $0x5c] sm:$0xf]
        %v723 = vld [vmem:[#allocation13 + $0x60] sm:$0xf]
        %v724 = vld [vmem:[#allocation13 + $0x64] sm:$0xf]
        %v725 = vld [vmem:[#allocation13 + $0x68] sm:$0xf]
        %v726 = vld [vmem:[#allocation13 + $0x6c] sm:$0xf]
        %v727 = vld [vmem:[#allocation13 + $0x70] sm:$0xf]
        %v728 = vld [vmem:[#allocation13 + $0x74] sm:$0xf]
        %v729 = vld [vmem:[#allocation13 + $0x78] sm:$0xf]
        %v730 = vld [vmem:[#allocation13 + $0x7c] sm:$0xf]
        %v731 = vld [vmem:[#allocation14] sm:$0xf]
        %v732 = vld [vmem:[#allocation14 + $0x4] sm:$0xf]
        %v733 = vld [vmem:[#allocation14 + $0x8] sm:$0xf]
        %v734 = vld [vmem:[#allocation14 + $0xc] sm:$0xf]
        %v735 = vld [vmem:[#allocation14 + $0x10] sm:$0xf]
        %v736 = vld [vmem:[#allocation14 + $0x14] sm:$0xf]
        %v737 = vld [vmem:[#allocation14 + $0x18] sm:$0xf]
        %v738 = vld [vmem:[#allocation14 + $0x1c] sm:$0xf]
        %v739 = vld [vmem:[#allocation14 + $0x20] sm:$0xf]
        %v740 = vld [vmem:[#allocation14 + $0x24] sm:$0xf]
        %v741 = vld [vmem:[#allocation14 + $0x28] sm:$0xf]
        %v742 = vld [vmem:[#allocation14 + $0x2c] sm:$0xf]
        %v743 = vld [vmem:[#allocation14 + $0x30] sm:$0xf]
        %v744 = vld [vmem:[#allocation14 + $0x34] sm:$0xf]
        %v745 = vld [vmem:[#allocation14 + $0x38] sm:$0xf]
        %v746 = vld [vmem:[#allocation14 + $0x3c] sm:$0xf]
        %v747 = vld [vmem:[#allocation16] sm:$0xf]
        %v748 = vld [vmem:[#allocation16 + $0x4] sm:$0xf]
        %v749 = vld [vmem:[#allocation16 + $0x8] sm:$0xf]
        %v750 = vld [vmem:[#allocation16 + $0xc] sm:$0xf]
        %v751 = vld [vmem:[#allocation16 + $0x10] sm:$0xf]
        %v752 = vld [vmem:[#allocation16 + $0x14] sm:$0xf]
        %v753 = vld [vmem:[#allocation16 + $0x18] sm:$0xf]
        %v754 = vld [vmem:[#allocation16 + $0x1c] sm:$0xf]
        %v755 = vld [vmem:[#allocation16 + $0x20] sm:$0xf]
        %v756 = vld [vmem:[#allocation16 + $0x24] sm:$0xf]
        %v757 = vld [vmem:[#allocation16 + $0x28] sm:$0xf]
        %v758 = vld [vmem:[#allocation16 + $0x2c] sm:$0xf]
        %v759 = vld [vmem:[#allocation16 + $0x30] sm:$0xf]
        %v760 = vld [vmem:[#allocation16 + $0x34] sm:$0xf]
        %v761 = vld [vmem:[#allocation16 + $0x38] sm:$0xf]
        %v762 = vld [vmem:[#allocation16 + $0x3c] sm:$0xf]
        %v763 = vld [vmem:[#allocation17] sm:$0xf]
        %v764 = vld [vmem:[#allocation17 + $0x4] sm:$0xf]
        %v765 = vld [vmem:[#allocation17 + $0x8] sm:$0xf]
        %v766 = vld [vmem:[#allocation17 + $0xc] sm:$0xf]
        %v767 = vld [vmem:[#allocation17 + $0x10] sm:$0xf]
        %v768 = vld [vmem:[#allocation17 + $0x14] sm:$0xf]
        %v769 = vld [vmem:[#allocation17 + $0x18] sm:$0xf]
        %v770 = vld [vmem:[#allocation17 + $0x1c] sm:$0xf]
        %v771 = vld [vmem:[#allocation17 + $0x20] sm:$0xf]
        %v772 = vld [vmem:[#allocation17 + $0x24] sm:$0xf]
        %v773 = vld [vmem:[#allocation17 + $0x28] sm:$0xf]
        %v774 = vld [vmem:[#allocation17 + $0x2c] sm:$0xf]
        %v775 = vld [vmem:[#allocation17 + $0x30] sm:$0xf]
        %v776 = vld [vmem:[#allocation17 + $0x34] sm:$0xf]
        %v777 = vld [vmem:[#allocation17 + $0x38] sm:$0xf]
        %v778 = vld [vmem:[#allocation17 + $0x3c] sm:$0xf]
        %v779 = vld [vmem:[#allocation17 + $0x40] sm:$0xf]
        %v780 = vld [vmem:[#allocation17 + $0x44] sm:$0xf]
        %v781 = vld [vmem:[#allocation17 + $0x48] sm:$0xf]
        %v782 = vld [vmem:[#allocation17 + $0x4c] sm:$0xf]
        %v783 = vld [vmem:[#allocation17 + $0x50] sm:$0xf]
        %v784 = vld [vmem:[#allocation17 + $0x54] sm:$0xf]
        %v785 = vld [vmem:[#allocation17 + $0x58] sm:$0xf]
        %v786 = vld [vmem:[#allocation17 + $0x5c] sm:$0xf]
        %v787 = vld [vmem:[#allocation17 + $0x60] sm:$0xf]
        %v788 = vld [vmem:[#allocation17 + $0x64] sm:$0xf]
        %v789 = vld [vmem:[#allocation17 + $0x68] sm:$0xf]
        %v790 = vld [vmem:[#allocation17 + $0x6c] sm:$0xf]
        %v791 = vld [vmem:[#allocation17 + $0x70] sm:$0xf]
        %v792 = vld [vmem:[#allocation17 + $0x74] sm:$0xf]
        %v793 = vld [vmem:[#allocation17 + $0x78] sm:$0xf]
        %v794 = vld [vmem:[#allocation17 + $0x7c] sm:$0xf]
        %v795 = vld [vmem:[#allocation19] sm:$0xff]
        %v796 = vld [vmem:[#allocation19 + $0x8] sm:$0xff]
        %v797 = vld [vmem:[#allocation19 + $0x10] sm:$0xff]
        %v798 = vpack.c.bf16 %v554, %v553
        %v799 = vpack.c.bf16 %v556, %v555
        %v800 = vpack.c.bf16 %v558, %v557
        %v801 = vpack.c.bf16 %v560, %v559
        %v802 = vpack.c.bf16 %v562, %v561
        %v803 = vpack.c.bf16 %v564, %v563
        %v804 = vpack.c.bf16 %v566, %v565
        %v805 = vpack.c.bf16 %v568, %v567
        %v806 = vlaneseq
        %v807 = vshrl.u32 %v806, 7
        %v808 = vsub.s32 0, %v807
        %v809 = vrot.slane %v795, %v808
        %v826 = vunpack.c.l.b16 %v617
        %v827 = vunpack.c.l.b16 %v618
        %v828 = vunpack.c.l.b16 %v619
        %v829 = vunpack.c.l.b16 %v620
        %v830 = vunpack.c.l.b16 %v621
        %v831 = vunpack.c.l.b16 %v622
        %v832 = vunpack.c.l.b16 %v623
        %v833 = vunpack.c.l.b16 %v624
        %v834 = vunpack.c.l.b16 %v625
        %v835 = vunpack.c.l.b16 %v626
        %v836 = vunpack.c.l.b16 %v627
        %v837 = vunpack.c.l.b16 %v628
        %v838 = vunpack.c.l.b16 %v629
        %v839 = vunpack.c.l.b16 %v630
        %v840 = vunpack.c.l.b16 %v631
        %v841 = vunpack.c.l.b16 %v632
        %v842 = vpack.c.b16 %v827, %v826
        %v843 = vpack.c.b16 %v829, %v828
        %v844 = vpack.c.b16 %v831, %v830
        %v845 = vpack.c.b16 %v833, %v832
        %v846 = vpack.c.b16 %v835, %v834
        %v847 = vpack.c.b16 %v837, %v836
        %v848 = vpack.c.b16 %v839, %v838
        %v849 = vpack.c.b16 %v841, %v840
        %858 = vmatprep.subr.bf16.mxu0 0
        %859 = vmatpush1.bf16.msra.mxu0 %v842
        %860 = vmatprep.subr.bf16.mxu0 0
        %861 = vmatpush1.bf16.msra.mxu0 %v843
        %862 = vmatprep.subr.bf16.mxu0 0
        %863 = vmatpush1.bf16.msra.mxu0 %v844
        %864 = vmatprep.subr.bf16.mxu0 0
        %865 = vmatpush1.bf16.msra.mxu0 %v845
        %866 = vmatprep.subr.bf16.mxu0 0
        %867 = vmatpush1.bf16.msra.mxu0 %v846
        %868 = vmatprep.subr.bf16.mxu0 0
        %869 = vmatpush1.bf16.msra.mxu0 %v847
        %870 = vmatprep.subr.bf16.mxu0 0
        %871 = vmatpush1.bf16.msra.mxu0 %v848
        %872 = vmatprep.subr.bf16.mxu0 0
        %873 = vmatpush1.bf16.msra.mxu0 %v849
        %874 = vmatprep.subr.bf16.mxu0 0
        %875 = vmatpush1.bf16.msra.mxu0 0
        %876 = vmatprep.subr.bf16.mxu0 0
        %877 = vmatpush1.bf16.msra.mxu0 0
        %878 = vmatprep.subr.bf16.mxu0 0
        %879 = vmatpush1.bf16.msra.mxu0 0
        %880 = vmatprep.subr.bf16.mxu0 0
        %881 = vmatpush1.bf16.msra.mxu0 0
        %882 = vmatprep.subr.bf16.mxu0 0
        %883 = vmatpush1.bf16.msra.mxu0 0
        %884 = vmatprep.subr.bf16.mxu0 0
        %885 = vmatpush1.bf16.msra.mxu0 0
        %886 = vmatprep.subr.bf16.mxu0 0
        %887 = vmatpush1.bf16.msra.mxu0 0
        %888 = vmatprep.subr.bf16.mxu0 0
        %889 = vmatpush1.bf16.msra.mxu0 0
        %890 = vmatprep.mubr.bf16.mxu0 0
        %891 = vmatmul.mubr.bf16.gmra.mrb[0].mxu0 %v798
        %v892 = vpop.f32.mrb[0].mxu0
        %v893 = vadd.f32 %v809, %v892
        %v894 = vpop.f32.mrb[0].mxu0
        %v895 = vpop.f32.mrb[0].mxu0
        %v896 = vadd.f32 %v809, %v895
        %v897 = vpop.f32.mrb[0].mxu0
        %898 = vmatprep.mubr.bf16.mxu0 0
        %899 = vmatmul.mubr.bf16.gmra.mrb[0].mxu0 %v799
        %v900 = vpop.f32.mrb[0].mxu0
        %v901 = vadd.f32 %v809, %v900
        %v902 = vpop.f32.mrb[0].mxu0
        %v903 = vpop.f32.mrb[0].mxu0
        %v904 = vadd.f32 %v809, %v903
        %v905 = vpop.f32.mrb[0].mxu0
        %906 = vmatprep.mubr.bf16.mxu0 0
        %907 = vmatmul.mubr.bf16.gmra.mrb[0].mxu0 %v800
        %v908 = vpop.f32.mrb[0].mxu0
        %v909 = vadd.f32 %v809, %v908
        %v910 = vpop.f32.mrb[0].mxu0
        %v911 = vpop.f32.mrb[0].mxu0
        %v912 = vadd.f32 %v809, %v911
        %v913 = vpop.f32.mrb[0].mxu0
        %914 = vmatprep.mubr.bf16.mxu0 0
        %915 = vmatmul.mubr.bf16.gmra.mrb[0].mxu0 %v801
        %v916 = vpop.f32.mrb[0].mxu0
        %v917 = vadd.f32 %v809, %v916
        %v918 = vpop.f32.mrb[0].mxu0
        %v919 = vpop.f32.mrb[0].mxu0
        %v920 = vadd.f32 %v809, %v919
        %v921 = vpop.f32.mrb[0].mxu0
        %922 = vmatprep.mubr.bf16.mxu0 0
        %923 = vmatmul.mubr.bf16.gmra.mrb[0].mxu0 %v802
        %v924 = vpop.f32.mrb[0].mxu0
        %v925 = vadd.f32 %v809, %v924
        %v926 = vpop.f32.mrb[0].mxu0
        %v927 = vpop.f32.mrb[0].mxu0
        %v928 = vadd.f32 %v809, %v927
        %v929 = vpop.f32.mrb[0].mxu0
        %930 = vmatprep.mubr.bf16.mxu0 0
        %931 = vmatmul.mubr.bf16.gmra.mrb[0].mxu0 %v803
        %v932 = vpop.f32.mrb[0].mxu0
        %v933 = vadd.f32 %v809, %v932
        %v934 = vpop.f32.mrb[0].mxu0
        %v935 = vpop.f32.mrb[0].mxu0
        %v936 = vadd.f32 %v809, %v935
        %v937 = vpop.f32.mrb[0].mxu0
        %938 = vmatprep.mubr.bf16.mxu0 0
        %939 = vmatmul.mubr.bf16.gmra.mrb[0].mxu0 %v804
        %v940 = vpop.f32.mrb[0].mxu0
        %v941 = vadd.f32 %v809, %v940
        %v942 = vpop.f32.mrb[0].mxu0
        %v943 = vpop.f32.mrb[0].mxu0
        %v944 = vadd.f32 %v809, %v943
        %v945 = vpop.f32.mrb[0].mxu0
        %946 = vmatprep.mubr.bf16.mxu0 0
        %947 = vmatmul.mubr.bf16.gmra.mrb[0].mxu0 %v805
        %v948 = vpop.f32.mrb[0].mxu0
        %v949 = vadd.f32 %v809, %v948
        %v950 = vpop.f32.mrb[0].mxu0
        %v951 = vpop.f32.mrb[0].mxu0
        %v952 = vadd.f32 %v809, %v951
        %v953 = vpop.f32.mrb[0].mxu0
        %954 = vdwg.mxu0
        %v955 = vpack.c.bf16 %v896, %v893
        %v956 = vpack.c.bf16 %v904, %v901
        %v957 = vpack.c.bf16 %v912, %v909
        %v958 = vpack.c.bf16 %v920, %v917
        %v959 = vpack.c.bf16 %v928, %v925
        %v960 = vpack.c.bf16 %v936, %v933
        %v961 = vpack.c.bf16 %v944, %v941
        %v962 = vpack.c.bf16 %v952, %v949
        %v995 = vunpack.c.l.b16 %v569
        %v996 = vunpack.c.l.b16 %v570
        %v997 = vunpack.c.l.b16 %v571
        %v998 = vunpack.c.l.b16 %v572
        %v999 = vunpack.c.l.b16 %v573
        %v1000 = vunpack.c.l.b16 %v574
        %v1001 = vunpack.c.l.b16 %v575
        %v1002 = vunpack.c.l.b16 %v576
        %v1003 = vunpack.c.l.b16 %v577
        %v1004 = vunpack.c.l.b16 %v578
        %v1005 = vunpack.c.l.b16 %v579
        %v1006 = vunpack.c.l.b16 %v580
        %v1007 = vunpack.c.l.b16 %v581
        %v1008 = vunpack.c.l.b16 %v582
        %v1009 = vunpack.c.l.b16 %v583
        %v1010 = vunpack.c.l.b16 %v584
        %v1011 = vunpack.c.l.b16 %v585
        %v1012 = vunpack.c.l.b16 %v586
        %v1013 = vunpack.c.l.b16 %v587
        %v1014 = vunpack.c.l.b16 %v588
        %v1015 = vunpack.c.l.b16 %v589
        %v1016 = vunpack.c.l.b16 %v590
        %v1017 = vunpack.c.l.b16 %v591
        %v1018 = vunpack.c.l.b16 %v592
        %v1019 = vunpack.c.l.b16 %v593
        %v1020 = vunpack.c.l.b16 %v594
        %v1021 = vunpack.c.l.b16 %v595
        %v1022 = vunpack.c.l.b16 %v596
        %v1023 = vunpack.c.l.b16 %v597
        %v1024 = vunpack.c.l.b16 %v598
        %v1025 = vunpack.c.l.b16 %v599
        %v1026 = vunpack.c.l.b16 %v600
        %v1027 = vpack.c.b16 %v996, %v995
        %v1028 = vpack.c.b16 %v998, %v997
        %v1029 = vpack.c.b16 %v1000, %v999
        %v1030 = vpack.c.b16 %v1002, %v1001
        %v1031 = vpack.c.b16 %v1004, %v1003
        %v1032 = vpack.c.b16 %v1006, %v1005
        %v1033 = vpack.c.b16 %v1008, %v1007
        %v1034 = vpack.c.b16 %v1010, %v1009
        %v1035 = vpack.c.b16 %v1012, %v1011
        %v1036 = vpack.c.b16 %v1014, %v1013
        %v1037 = vpack.c.b16 %v1016, %v1015
        %v1038 = vpack.c.b16 %v1018, %v1017
        %v1039 = vpack.c.b16 %v1020, %v1019
        %v1040 = vpack.c.b16 %v1022, %v1021
        %v1041 = vpack.c.b16 %v1024, %v1023
        %v1042 = vpack.c.b16 %v1026, %v1025
        %1059 = vmatprep.subr.bf16.mxu0 0
        %1060 = vmatpush1.bf16.xpose.msra.mxu0 %v1027
        %1061 = vmatprep.subr.bf16.mxu0 0
        %1062 = vmatpush1.bf16.xpose.msra.mxu0 %v1028
        %1063 = vmatprep.subr.bf16.mxu0 0
        %1064 = vmatpush1.bf16.xpose.msra.mxu0 %v1029
        %1065 = vmatprep.subr.bf16.mxu0 0
        %1066 = vmatpush1.bf16.xpose.msra.mxu0 %v1030
        %1067 = vmatprep.subr.bf16.mxu0 0
        %1068 = vmatpush1.bf16.xpose.msra.mxu0 %v1031
        %1069 = vmatprep.subr.bf16.mxu0 0
        %1070 = vmatpush1.bf16.xpose.msra.mxu0 %v1032
        %1071 = vmatprep.subr.bf16.mxu0 0
        %1072 = vmatpush1.bf16.xpose.msra.mxu0 %v1033
        %1073 = vmatprep.subr.bf16.mxu0 0
        %1074 = vmatpush1.bf16.xpose.msra.mxu0 %v1034
        %1075 = vmatprep.subr.bf16.mxu0 0
        %1076 = vmatpush1.bf16.xpose.msra.mxu0 %v1035
        %1077 = vmatprep.subr.bf16.mxu0 0
        %1078 = vmatpush1.bf16.xpose.msra.mxu0 %v1036
        %1079 = vmatprep.subr.bf16.mxu0 0
        %1080 = vmatpush1.bf16.xpose.msra.mxu0 %v1037
        %1081 = vmatprep.subr.bf16.mxu0 0
        %1082 = vmatpush1.bf16.xpose.msra.mxu0 %v1038
        %1083 = vmatprep.subr.bf16.mxu0 0
        %1084 = vmatpush1.bf16.xpose.msra.mxu0 %v1039
        %1085 = vmatprep.subr.bf16.mxu0 0
        %1086 = vmatpush1.bf16.xpose.msra.mxu0 %v1040
        %1087 = vmatprep.subr.bf16.mxu0 0
        %1088 = vmatpush1.bf16.xpose.msra.mxu0 %v1041
        %1089 = vmatprep.subr.bf16.mxu0 0
        %1090 = vmatpush1.bf16.xpose.msra.mxu0 %v1042
        %1091 = vmatprep.mubr.bf16.mxu0 0
        %1092 = vmatmul.mubr.bf16.gmra.mrb[0].mxu0 %v955
        %v1093 = vpop.f32.mrb[0].mxu0
        %v1094 = vadd.f32 0.0, %v1093
        %v1095 = vpop.f32.mrb[0].mxu0
        %v1096 = vadd.f32 0.0, %v1095
        %v1097 = vpop.f32.mrb[0].mxu0
        %v1098 = vadd.f32 0.0, %v1097
        %v1099 = vpop.f32.mrb[0].mxu0
        %v1100 = vadd.f32 0.0, %v1099
        %1101 = vmatprep.mubr.bf16.mxu0 0
        %1102 = vmatmul.mubr.bf16.gmra.mrb[0].mxu0 %v956
        %v1103 = vpop.f32.mrb[0].mxu0
        %v1104 = vadd.f32 0.0, %v1103
        %v1105 = vpop.f32.mrb[0].mxu0
        %v1106 = vadd.f32 0.0, %v1105
        %v1107 = vpop.f32.mrb[0].mxu0
        %v1108 = vadd.f32 0.0, %v1107
        %v1109 = vpop.f32.mrb[0].mxu0
        %v1110 = vadd.f32 0.0, %v1109
        %1111 = vmatprep.mubr.bf16.mxu0 0
        %1112 = vmatmul.mubr.bf16.gmra.mrb[0].mxu0 %v957
        %v1113 = vpop.f32.mrb[0].mxu0
        %v1114 = vadd.f32 0.0, %v1113
        %v1115 = vpop.f32.mrb[0].mxu0
        %v1116 = vadd.f32 0.0, %v1115
        %v1117 = vpop.f32.mrb[0].mxu0
        %v1118 = vadd.f32 0.0, %v1117
        %v1119 = vpop.f32.mrb[0].mxu0
        %v1120 = vadd.f32 0.0, %v1119
        %1121 = vmatprep.mubr.bf16.mxu0 0
        %1122 = vmatmul.mubr.bf16.gmra.mrb[0].mxu0 %v958
        %v1123 = vpop.f32.mrb[0].mxu0
        %v1124 = vadd.f32 0.0, %v1123
        %v1125 = vpop.f32.mrb[0].mxu0
        %v1126 = vadd.f32 0.0, %v1125
        %v1127 = vpop.f32.mrb[0].mxu0
        %v1128 = vadd.f32 0.0, %v1127
        %v1129 = vpop.f32.mrb[0].mxu0
        %v1130 = vadd.f32 0.0, %v1129
        %1131 = vmatprep.mubr.bf16.mxu0 0
        %1132 = vmatmul.mubr.bf16.gmra.mrb[0].mxu0 %v959
        %v1133 = vpop.f32.mrb[0].mxu0
        %v1134 = vadd.f32 0.0, %v1133
        %v1135 = vpop.f32.mrb[0].mxu0
        %v1136 = vadd.f32 0.0, %v1135
        %v1137 = vpop.f32.mrb[0].mxu0
        %v1138 = vadd.f32 0.0, %v1137
        %v1139 = vpop.f32.mrb[0].mxu0
        %v1140 = vadd.f32 0.0, %v1139
        %1141 = vmatprep.mubr.bf16.mxu0 0
        %1142 = vmatmul.mubr.bf16.gmra.mrb[0].mxu0 %v960
        %v1143 = vpop.f32.mrb[0].mxu0
        %v1144 = vadd.f32 0.0, %v1143
        %v1145 = vpop.f32.mrb[0].mxu0
        %v1146 = vadd.f32 0.0, %v1145
        %v1147 = vpop.f32.mrb[0].mxu0
        %v1148 = vadd.f32 0.0, %v1147
        %v1149 = vpop.f32.mrb[0].mxu0
        %v1150 = vadd.f32 0.0, %v1149
        %1151 = vmatprep.mubr.bf16.mxu0 0
        %1152 = vmatmul.mubr.bf16.gmra.mrb[0].mxu0 %v961
        %v1153 = vpop.f32.mrb[0].mxu0
        %v1154 = vadd.f32 0.0, %v1153
        %v1155 = vpop.f32.mrb[0].mxu0
        %v1156 = vadd.f32 0.0, %v1155
        %v1157 = vpop.f32.mrb[0].mxu0
        %v1158 = vadd.f32 0.0, %v1157
        %v1159 = vpop.f32.mrb[0].mxu0
        %v1160 = vadd.f32 0.0, %v1159
        %1161 = vmatprep.mubr.bf16.mxu0 0
        %1162 = vmatmul.mubr.bf16.gmra.mrb[0].mxu0 %v962
        %v1163 = vpop.f32.mrb[0].mxu0
        %v1164 = vadd.f32 0.0, %v1163
        %v1165 = vpop.f32.mrb[0].mxu0
        %v1166 = vadd.f32 0.0, %v1165
        %v1167 = vpop.f32.mrb[0].mxu0
        %v1168 = vadd.f32 0.0, %v1167
        %v1169 = vpop.f32.mrb[0].mxu0
        %v1170 = vadd.f32 0.0, %v1169
        %1171 = vdwg.mxu0
        %v1172 = vmax.f32 %v1094, %v1096
        %1173 = vmax.xlane.f32.xlu0 %v1172
        %v1174 = vpop.xlane.xlu0 %1173
        %v1175 = vmax.f32 %v1098, %v1100
        %1176 = vmax.xlane.f32.xlu0 %v1175
        %v1177 = vpop.xlane.xlu0 %1176
        %v1178 = vmax.f32 %v1104, %v1106
        %1179 = vmax.xlane.f32.xlu0 %v1178
        %v1180 = vpop.xlane.xlu0 %1179
        %v1181 = vmax.f32 %v1108, %v1110
        %1182 = vmax.xlane.f32.xlu0 %v1181
        %v1183 = vpop.xlane.xlu0 %1182
        %v1184 = vmax.f32 %v1114, %v1116
        %1185 = vmax.xlane.f32.xlu0 %v1184
        %v1186 = vpop.xlane.xlu0 %1185
        %v1187 = vmax.f32 %v1118, %v1120
        %1188 = vmax.xlane.f32.xlu0 %v1187
        %v1189 = vpop.xlane.xlu0 %1188
        %v1190 = vmax.f32 %v1124, %v1126
        %1191 = vmax.xlane.f32.xlu0 %v1190
        %v1192 = vpop.xlane.xlu0 %1191
        %v1193 = vmax.f32 %v1128, %v1130
        %1194 = vmax.xlane.f32.xlu0 %v1193
        %v1195 = vpop.xlane.xlu0 %1194
        %v1196 = vmax.f32 %v1134, %v1136
        %1197 = vmax.xlane.f32.xlu0 %v1196
        %v1198 = vpop.xlane.xlu0 %1197
        %v1199 = vmax.f32 %v1138, %v1140
        %1200 = vmax.xlane.f32.xlu0 %v1199
        %v1201 = vpop.xlane.xlu0 %1200
        %v1202 = vmax.f32 %v1144, %v1146
        %1203 = vmax.xlane.f32.xlu0 %v1202
        %v1204 = vpop.xlane.xlu0 %1203
        %v1205 = vmax.f32 %v1148, %v1150
        %1206 = vmax.xlane.f32.xlu0 %v1205
        %v1207 = vpop.xlane.xlu0 %1206
        %v1208 = vmax.f32 %v1154, %v1156
        %1209 = vmax.xlane.f32.xlu0 %v1208
        %v1210 = vpop.xlane.xlu0 %1209
        %v1211 = vmax.f32 %v1158, %v1160
        %1212 = vmax.xlane.f32.xlu0 %v1211
        %v1213 = vpop.xlane.xlu0 %1212
        %v1214 = vmax.f32 %v1164, %v1166
        %1215 = vmax.xlane.f32.xlu0 %v1214
        %v1216 = vpop.xlane.xlu0 %1215
        %v1217 = vmax.f32 %v1168, %v1170
        %1218 = vmax.xlane.f32.xlu0 %v1217
        %v1219 = vpop.xlane.xlu0 %1218
        %v1220 = vsub.f32 %v1094, %v1174
        %v1221 = vsub.f32 %v1096, %v1174
        %v1222 = vsub.f32 %v1098, %v1177
        %v1223 = vsub.f32 %v1100, %v1177
        %v1224 = vsub.f32 %v1104, %v1180
        %v1225 = vsub.f32 %v1106, %v1180
        %v1226 = vsub.f32 %v1108, %v1183
        %v1227 = vsub.f32 %v1110, %v1183
        %v1228 = vsub.f32 %v1114, %v1186
        %v1229 = vsub.f32 %v1116, %v1186
        %v1230 = vsub.f32 %v1118, %v1189
        %v1231 = vsub.f32 %v1120, %v1189
        %v1232 = vsub.f32 %v1124, %v1192
        %v1233 = vsub.f32 %v1126, %v1192
        %v1234 = vsub.f32 %v1128, %v1195
        %v1235 = vsub.f32 %v1130, %v1195
        %v1236 = vsub.f32 %v1134, %v1198
        %v1237 = vsub.f32 %v1136, %v1198
        %v1238 = vsub.f32 %v1138, %v1201
        %v1239 = vsub.f32 %v1140, %v1201
        %v1240 = vsub.f32 %v1144, %v1204
        %v1241 = vsub.f32 %v1146, %v1204
        %v1242 = vsub.f32 %v1148, %v1207
        %v1243 = vsub.f32 %v1150, %v1207
        %v1244 = vsub.f32 %v1154, %v1210
        %v1245 = vsub.f32 %v1156, %v1210
        %v1246 = vsub.f32 %v1158, %v1213
        %v1247 = vsub.f32 %v1160, %v1213
        %v1248 = vsub.f32 %v1164, %v1216
        %v1249 = vsub.f32 %v1166, %v1216
        %v1250 = vsub.f32 %v1168, %v1219
        %v1251 = vsub.f32 %v1170, %v1219
        %v1252 = vmul.f32 %v1220, 1.442695
        %v1253 = vpow.pop %v1252
        %v1254 = vmul.f32 %v1221, 1.442695
        %v1255 = vpow.pop %v1254
        %v1256 = vmul.f32 %v1222, 1.442695
        %v1257 = vpow.pop %v1256
        %v1258 = vmul.f32 %v1223, 1.442695
        %v1259 = vpow.pop %v1258
        %v1260 = vmul.f32 %v1224, 1.442695
        %v1261 = vpow.pop %v1260
        %v1262 = vmul.f32 %v1225, 1.442695
        %v1263 = vpow.pop %v1262
        %v1264 = vmul.f32 %v1226, 1.442695
        %v1265 = vpow.pop %v1264
        %v1266 = vmul.f32 %v1227, 1.442695
        %v1267 = vpow.pop %v1266
        %v1268 = vmul.f32 %v1228, 1.442695
        %v1269 = vpow.pop %v1268
        %v1270 = vmul.f32 %v1229, 1.442695
        %v1271 = vpow.pop %v1270
        %v1272 = vmul.f32 %v1230, 1.442695
        %v1273 = vpow.pop %v1272
        %v1274 = vmul.f32 %v1231, 1.442695
        %v1275 = vpow.pop %v1274
        %v1276 = vmul.f32 %v1232, 1.442695
        %v1277 = vpow.pop %v1276
        %v1278 = vmul.f32 %v1233, 1.442695
        %v1279 = vpow.pop %v1278
        %v1280 = vmul.f32 %v1234, 1.442695
        %v1281 = vpow.pop %v1280
        %v1282 = vmul.f32 %v1235, 1.442695
        %v1283 = vpow.pop %v1282
        %v1284 = vmul.f32 %v1236, 1.442695
        %v1285 = vpow.pop %v1284
        %v1286 = vmul.f32 %v1237, 1.442695
        %v1287 = vpow.pop %v1286
        %v1288 = vmul.f32 %v1238, 1.442695
        %v1289 = vpow.pop %v1288
        %v1290 = vmul.f32 %v1239, 1.442695
        %v1291 = vpow.pop %v1290
        %v1292 = vmul.f32 %v1240, 1.442695
        %v1293 = vpow.pop %v1292
        %v1294 = vmul.f32 %v1241, 1.442695
        %v1295 = vpow.pop %v1294
        %v1296 = vmul.f32 %v1242, 1.442695
        %v1297 = vpow.pop %v1296
        %v1298 = vmul.f32 %v1243, 1.442695
        %v1299 = vpow.pop %v1298
        %v1300 = vmul.f32 %v1244, 1.442695
        %v1301 = vpow.pop %v1300
        %v1302 = vmul.f32 %v1245, 1.442695
        %v1303 = vpow.pop %v1302
        %v1304 = vmul.f32 %v1246, 1.442695
        %v1305 = vpow.pop %v1304
        %v1306 = vmul.f32 %v1247, 1.442695
        %v1307 = vpow.pop %v1306
        %v1308 = vmul.f32 %v1248, 1.442695
        %v1309 = vpow.pop %v1308
        %v1310 = vmul.f32 %v1249, 1.442695
        %v1311 = vpow.pop %v1310
        %v1312 = vmul.f32 %v1250, 1.442695
        %v1313 = vpow.pop %v1312
        %v1314 = vmul.f32 %v1251, 1.442695
        %v1315 = vpow.pop %v1314
        %v1316 = vadd.f32 %v1253, %v1255
        %1317 = vadd.xlane.f32.xlu0 %v1316
        %v1318 = vpop.xlane.xlu0 %1317
        %v1319 = vadd.f32 %v1257, %v1259
        %1320 = vadd.xlane.f32.xlu0 %v1319
        %v1321 = vpop.xlane.xlu0 %1320
        %v1322 = vadd.f32 %v1261, %v1263
        %1323 = vadd.xlane.f32.xlu0 %v1322
        %v1324 = vpop.xlane.xlu0 %1323
        %v1325 = vadd.f32 %v1265, %v1267
        %1326 = vadd.xlane.f32.xlu0 %v1325
        %v1327 = vpop.xlane.xlu0 %1326
        %v1328 = vadd.f32 %v1269, %v1271
        %1329 = vadd.xlane.f32.xlu0 %v1328
        %v1330 = vpop.xlane.xlu0 %1329
        %v1331 = vadd.f32 %v1273, %v1275
        %1332 = vadd.xlane.f32.xlu0 %v1331
        %v1333 = vpop.xlane.xlu0 %1332
        %v1334 = vadd.f32 %v1277, %v1279
        %1335 = vadd.xlane.f32.xlu0 %v1334
        %v1336 = vpop.xlane.xlu0 %1335
        %v1337 = vadd.f32 %v1281, %v1283
        %1338 = vadd.xlane.f32.xlu0 %v1337
        %v1339 = vpop.xlane.xlu0 %1338
        %v1340 = vadd.f32 %v1285, %v1287
        %1341 = vadd.xlane.f32.xlu0 %v1340
        %v1342 = vpop.xlane.xlu0 %1341
        %v1343 = vadd.f32 %v1289, %v1291
        %1344 = vadd.xlane.f32.xlu0 %v1343
        %v1345 = vpop.xlane.xlu0 %1344
        %v1346 = vadd.f32 %v1293, %v1295
        %1347 = vadd.xlane.f32.xlu0 %v1346
        %v1348 = vpop.xlane.xlu0 %1347
        %v1349 = vadd.f32 %v1297, %v1299
        %1350 = vadd.xlane.f32.xlu0 %v1349
        %v1351 = vpop.xlane.xlu0 %1350
        %v1352 = vadd.f32 %v1301, %v1303
        %1353 = vadd.xlane.f32.xlu0 %v1352
        %v1354 = vpop.xlane.xlu0 %1353
        %v1355 = vadd.f32 %v1305, %v1307
        %1356 = vadd.xlane.f32.xlu0 %v1355
        %v1357 = vpop.xlane.xlu0 %1356
        %v1358 = vadd.f32 %v1309, %v1311
        %1359 = vadd.xlane.f32.xlu0 %v1358
        %v1360 = vpop.xlane.xlu0 %1359
        %v1361 = vadd.f32 %v1313, %v1315
        %1362 = vadd.xlane.f32.xlu0 %v1361
        %v1363 = vpop.xlane.xlu0 %1362
        %v1364 = vrcp.pop %v1318
        %v1365 = vmul.f32 %v1253, %v1364
        %v1366 = vmul.f32 %v1255, %v1364
        %v1367 = vrcp.pop %v1321
        %v1368 = vmul.f32 %v1257, %v1367
        %v1369 = vmul.f32 %v1259, %v1367
        %v1370 = vrcp.pop %v1324
        %v1371 = vmul.f32 %v1261, %v1370
        %v1372 = vmul.f32 %v1263, %v1370
        %v1373 = vrcp.pop %v1327
        %v1374 = vmul.f32 %v1265, %v1373
        %v1375 = vmul.f32 %v1267, %v1373
        %v1376 = vrcp.pop %v1330
        %v1377 = vmul.f32 %v1269, %v1376
        %v1378 = vmul.f32 %v1271, %v1376
        %v1379 = vrcp.pop %v1333
        %v1380 = vmul.f32 %v1273, %v1379
        %v1381 = vmul.f32 %v1275, %v1379
        %v1382 = vrcp.pop %v1336
        %v1383 = vmul.f32 %v1277, %v1382
        %v1384 = vmul.f32 %v1279, %v1382
        %v1385 = vrcp.pop %v1339
        %v1386 = vmul.f32 %v1281, %v1385
        %v1387 = vmul.f32 %v1283, %v1385
        %v1388 = vrcp.pop %v1342
        %v1389 = vmul.f32 %v1285, %v1388
        %v1390 = vmul.f32 %v1287, %v1388
        %v1391 = vrcp.pop %v1345
        %v1392 = vmul.f32 %v1289, %v1391
        %v1393 = vmul.f32 %v1291, %v1391
        %v1394 = vrcp.pop %v1348
        %v1395 = vmul.f32 %v1293, %v1394
        %v1396 = vmul.f32 %v1295, %v1394
        %v1397 = vrcp.pop %v1351
        %v1398 = vmul.f32 %v1297, %v1397
        %v1399 = vmul.f32 %v1299, %v1397
        %v1400 = vrcp.pop %v1354
        %v1401 = vmul.f32 %v1301, %v1400
        %v1402 = vmul.f32 %v1303, %v1400
        %v1403 = vrcp.pop %v1357
        %v1404 = vmul.f32 %v1305, %v1403
        %v1405 = vmul.f32 %v1307, %v1403
        %v1406 = vrcp.pop %v1360
        %v1407 = vmul.f32 %v1309, %v1406
        %v1408 = vmul.f32 %v1311, %v1406
        %v1409 = vrcp.pop %v1363
        %v1410 = vmul.f32 %v1313, %v1409
        %v1411 = vmul.f32 %v1315, %v1409
        %v1412 = vpack.c.bf16 %v1368, %v1365
        %v1413 = vpack.c.bf16 %v1369, %v1366
        %v1414 = vpack.c.bf16 %v1374, %v1371
        %v1415 = vpack.c.bf16 %v1375, %v1372
        %v1416 = vpack.c.bf16 %v1380, %v1377
        %v1417 = vpack.c.bf16 %v1381, %v1378
        %v1418 = vpack.c.bf16 %v1386, %v1383
        %v1419 = vpack.c.bf16 %v1387, %v1384
        %v1420 = vpack.c.bf16 %v1392, %v1389
        %v1421 = vpack.c.bf16 %v1393, %v1390
        %v1422 = vpack.c.bf16 %v1398, %v1395
        %v1423 = vpack.c.bf16 %v1399, %v1396
        %v1424 = vpack.c.bf16 %v1404, %v1401
        %v1425 = vpack.c.bf16 %v1405, %v1402
        %v1426 = vpack.c.bf16 %v1410, %v1407
        %v1427 = vpack.c.bf16 %v1411, %v1408
        %v1428 = vunpack.c.h.b16 %v569
        %v1429 = vunpack.c.h.b16 %v570
        %v1430 = vunpack.c.h.b16 %v571
        %v1431 = vunpack.c.h.b16 %v572
        %v1432 = vunpack.c.h.b16 %v573
        %v1433 = vunpack.c.h.b16 %v574
        %v1434 = vunpack.c.h.b16 %v575
        %v1435 = vunpack.c.h.b16 %v576
        %v1436 = vunpack.c.h.b16 %v577
        %v1437 = vunpack.c.h.b16 %v578
        %v1438 = vunpack.c.h.b16 %v579
        %v1439 = vunpack.c.h.b16 %v580
        %v1440 = vunpack.c.h.b16 %v581
        %v1441 = vunpack.c.h.b16 %v582
        %v1442 = vunpack.c.h.b16 %v583
        %v1443 = vunpack.c.h.b16 %v584
        %v1444 = vunpack.c.h.b16 %v585
        %v1445 = vunpack.c.h.b16 %v586
        %v1446 = vunpack.c.h.b16 %v587
        %v1447 = vunpack.c.h.b16 %v588
        %v1448 = vunpack.c.h.b16 %v589
        %v1449 = vunpack.c.h.b16 %v590
        %v1450 = vunpack.c.h.b16 %v591
        %v1451 = vunpack.c.h.b16 %v592
        %v1452 = vunpack.c.h.b16 %v593
        %v1453 = vunpack.c.h.b16 %v594
        %v1454 = vunpack.c.h.b16 %v595
        %v1455 = vunpack.c.h.b16 %v596
        %v1456 = vunpack.c.h.b16 %v597
        %v1457 = vunpack.c.h.b16 %v598
        %v1458 = vunpack.c.h.b16 %v599
        %v1459 = vunpack.c.h.b16 %v600
        %v1460 = vpack.c.b16 %v1429, %v1428
        %v1461 = vpack.c.b16 %v1431, %v1430
        %v1462 = vpack.c.b16 %v1433, %v1432
        %v1463 = vpack.c.b16 %v1435, %v1434
        %v1464 = vpack.c.b16 %v1437, %v1436
        %v1465 = vpack.c.b16 %v1439, %v1438
        %v1466 = vpack.c.b16 %v1441, %v1440
        %v1467 = vpack.c.b16 %v1443, %v1442
        %v1468 = vpack.c.b16 %v1445, %v1444
        %v1469 = vpack.c.b16 %v1447, %v1446
        %v1470 = vpack.c.b16 %v1449, %v1448
        %v1471 = vpack.c.b16 %v1451, %v1450
        %v1472 = vpack.c.b16 %v1453, %v1452
        %v1473 = vpack.c.b16 %v1455, %v1454
        %v1474 = vpack.c.b16 %v1457, %v1456
        %v1475 = vpack.c.b16 %v1459, %v1458
        %1492 = vmatprep.subr.bf16.mxu0 0
        %1493 = vmatpush1.bf16.msra.mxu0 %v1460
        %1494 = vmatprep.subr.bf16.mxu0 0
        %1495 = vmatpush1.bf16.msra.mxu0 %v1461
        %1496 = vmatprep.subr.bf16.mxu0 0
        %1497 = vmatpush1.bf16.msra.mxu0 %v1462
        %1498 = vmatprep.subr.bf16.mxu0 0
        %1499 = vmatpush1.bf16.msra.mxu0 %v1463
        %1500 = vmatprep.subr.bf16.mxu0 0
        %1501 = vmatpush1.bf16.msra.mxu0 %v1464
        %1502 = vmatprep.subr.bf16.mxu0 0
        %1503 = vmatpush1.bf16.msra.mxu0 %v1465
        %1504 = vmatprep.subr.bf16.mxu0 0
        %1505 = vmatpush1.bf16.msra.mxu0 %v1466
        %1506 = vmatprep.subr.bf16.mxu0 0
        %1507 = vmatpush1.bf16.msra.mxu0 %v1467
        %1508 = vmatprep.subr.bf16.mxu0 0
        %1509 = vmatpush1.bf16.msra.mxu0 %v1468
        %1510 = vmatprep.subr.bf16.mxu0 0
        %1511 = vmatpush1.bf16.msra.mxu0 %v1469
        %1512 = vmatprep.subr.bf16.mxu0 0
        %1513 = vmatpush1.bf16.msra.mxu0 %v1470
        %1514 = vmatprep.subr.bf16.mxu0 0
        %1515 = vmatpush1.bf16.msra.mxu0 %v1471
        %1516 = vmatprep.subr.bf16.mxu0 0
        %1517 = vmatpush1.bf16.msra.mxu0 %v1472
        %1518 = vmatprep.subr.bf16.mxu0 0
        %1519 = vmatpush1.bf16.msra.mxu0 %v1473
        %1520 = vmatprep.subr.bf16.mxu0 0
        %1521 = vmatpush1.bf16.msra.mxu0 %v1474
        %1522 = vmatprep.subr.bf16.mxu0 0
        %1523 = vmatpush1.bf16.msra.mxu0 %v1475
        %1524 = vmatprep.mubr.bf16.mxu0 %v1413
        %1525 = vmatmul.mubr.bf16.gmra.mrb[0].mxu0 %v1412
        %v1526 = vpop.f32.mrb[0].mxu0
        %v1527 = vadd.f32 0.0, %v1526
        %v1528 = vpop.f32.mrb[0].mxu0
        %v1529 = vpop.f32.mrb[0].mxu0
        %v1530 = vadd.f32 0.0, %v1529
        %v1531 = vpop.f32.mrb[0].mxu0
        %1532 = vmatprep.mubr.bf16.mxu0 %v1415
        %1533 = vmatmul.mubr.bf16.gmra.mrb[0].mxu0 %v1414
        %v1534 = vpop.f32.mrb[0].mxu0
        %v1535 = vadd.f32 0.0, %v1534
        %v1536 = vpop.f32.mrb[0].mxu0
        %v1537 = vpop.f32.mrb[0].mxu0
        %v1538 = vadd.f32 0.0, %v1537
        %v1539 = vpop.f32.mrb[0].mxu0
        %1540 = vmatprep.mubr.bf16.mxu0 %v1417
        %1541 = vmatmul.mubr.bf16.gmra.mrb[0].mxu0 %v1416
        %v1542 = vpop.f32.mrb[0].mxu0
        %v1543 = vadd.f32 0.0, %v1542
        %v1544 = vpop.f32.mrb[0].mxu0
        %v1545 = vpop.f32.mrb[0].mxu0
        %v1546 = vadd.f32 0.0, %v1545
        %v1547 = vpop.f32.mrb[0].mxu0
        %1548 = vmatprep.mubr.bf16.mxu0 %v1419
        %1549 = vmatmul.mubr.bf16.gmra.mrb[0].mxu0 %v1418
        %v1550 = vpop.f32.mrb[0].mxu0
        %v1551 = vadd.f32 0.0, %v1550
        %v1552 = vpop.f32.mrb[0].mxu0
        %v1553 = vpop.f32.mrb[0].mxu0
        %v1554 = vadd.f32 0.0, %v1553
        %v1555 = vpop.f32.mrb[0].mxu0
        %1556 = vmatprep.mubr.bf16.mxu0 %v1421
        %1557 = vmatmul.mubr.bf16.gmra.mrb[0].mxu0 %v1420
        %v1558 = vpop.f32.mrb[0].mxu0
        %v1559 = vadd.f32 0.0, %v1558
        %v1560 = vpop.f32.mrb[0].mxu0
        %v1561 = vpop.f32.mrb[0].mxu0
        %v1562 = vadd.f32 0.0, %v1561
        %v1563 = vpop.f32.mrb[0].mxu0
        %1564 = vmatprep.mubr.bf16.mxu0 %v1423
        %1565 = vmatmul.mubr.bf16.gmra.mrb[0].mxu0 %v1422
        %v1566 = vpop.f32.mrb[0].mxu0
        %v1567 = vadd.f32 0.0, %v1566
        %v1568 = vpop.f32.mrb[0].mxu0
        %v1569 = vpop.f32.mrb[0].mxu0
        %v1570 = vadd.f32 0.0, %v1569
        %v1571 = vpop.f32.mrb[0].mxu0
        %1572 = vmatprep.mubr.bf16.mxu0 %v1425
        %1573 = vmatmul.mubr.bf16.gmra.mrb[0].mxu0 %v1424
        %v1574 = vpop.f32.mrb[0].mxu0
        %v1575 = vadd.f32 0.0, %v1574
        %v1576 = vpop.f32.mrb[0].mxu0
        %v1577 = vpop.f32.mrb[0].mxu0
        %v1578 = vadd.f32 0.0, %v1577
        %v1579 = vpop.f32.mrb[0].mxu0
        %1580 = vmatprep.mubr.bf16.mxu0 %v1427
        %1581 = vmatmul.mubr.bf16.gmra.mrb[0].mxu0 %v1426
        %v1582 = vpop.f32.mrb[0].mxu0
        %v1583 = vadd.f32 0.0, %v1582
        %v1584 = vpop.f32.mrb[0].mxu0
        %v1585 = vpop.f32.mrb[0].mxu0
        %v1586 = vadd.f32 0.0, %v1585
        %v1587 = vpop.f32.mrb[0].mxu0
        %1588 = vdwg.mxu0
        %v1589 = vpack.c.bf16 %v1530, %v1527
        %v1590 = vpack.c.bf16 %v1538, %v1535
        %v1591 = vpack.c.bf16 %v1546, %v1543
        %v1592 = vpack.c.bf16 %v1554, %v1551
        %v1593 = vpack.c.bf16 %v1562, %v1559
        %v1594 = vpack.c.bf16 %v1570, %v1567
        %v1595 = vpack.c.bf16 %v1578, %v1575
        %v1596 = vpack.c.bf16 %v1586, %v1583
        %v1597 = vlaneseq
        %v1598 = vshrl.u32 %v1597, 7
        %v1599 = vsub.s32 1, %v1598
        %v1600 = vrot.slane %v795, %v1599
        %v1617 = vunpack.c.l.b16 %v633
        %v1618 = vunpack.c.l.b16 %v634
        %v1619 = vunpack.c.l.b16 %v635
        %v1620 = vunpack.c.l.b16 %v636
        %v1621 = vunpack.c.l.b16 %v637
        %v1622 = vunpack.c.l.b16 %v638
        %v1623 = vunpack.c.l.b16 %v639
        %v1624 = vunpack.c.l.b16 %v640
        %v1625 = vunpack.c.l.b16 %v641
        %v1626 = vunpack.c.l.b16 %v642
        %v1627 = vunpack.c.l.b16 %v643
        %v1628 = vunpack.c.l.b16 %v644
        %v1629 = vunpack.c.l.b16 %v645
        %v1630 = vunpack.c.l.b16 %v646
        %v1631 = vunpack.c.l.b16 %v647
        %v1632 = vunpack.c.l.b16 %v648
        %v1633 = vpack.c.b16 %v1618, %v1617
        %v1634 = vpack.c.b16 %v1620, %v1619
        %v1635 = vpack.c.b16 %v1622, %v1621
        %v1636 = vpack.c.b16 %v1624, %v1623
        %v1637 = vpack.c.b16 %v1626, %v1625
        %v1638 = vpack.c.b16 %v1628, %v1627
        %v1639 = vpack.c.b16 %v1630, %v1629
        %v1640 = vpack.c.b16 %v1632, %v1631
        %1649 = vmatprep.subr.bf16.mxu0 0
        %1650 = vmatpush1.bf16.msra.mxu0 %v1633
        %1651 = vmatprep.subr.bf16.mxu0 0
        %1652 = vmatpush1.bf16.msra.mxu0 %v1634
        %1653 = vmatprep.subr.bf16.mxu0 0
        %1654 = vmatpush1.bf16.msra.mxu0 %v1635
        %1655 = vmatprep.subr.bf16.mxu0 0
        %1656 = vmatpush1.bf16.msra.mxu0 %v1636
        %1657 = vmatprep.subr.bf16.mxu0 0
        %1658 = vmatpush1.bf16.msra.mxu0 %v1637
        %1659 = vmatprep.subr.bf16.mxu0 0
        %1660 = vmatpush1.bf16.msra.mxu0 %v1638
        %1661 = vmatprep.subr.bf16.mxu0 0
        %1662 = vmatpush1.bf16.msra.mxu0 %v1639
        %1663 = vmatprep.subr.bf16.mxu0 0
        %1664 = vmatpush1.bf16.msra.mxu0 %v1640
        %1665 = vmatprep.subr.bf16.mxu0 0
        %1666 = vmatpush1.bf16.msra.mxu0 0
        %1667 = vmatprep.subr.bf16.mxu0 0
        %1668 = vmatpush1.bf16.msra.mxu0 0
        %1669 = vmatprep.subr.bf16.mxu0 0
        %1670 = vmatpush1.bf16.msra.mxu0 0
        %1671 = vmatprep.subr.bf16.mxu0 0
        %1672 = vmatpush1.bf16.msra.mxu0 0
        %1673 = vmatprep.subr.bf16.mxu0 0
        %1674 = vmatpush1.bf16.msra.mxu0 0
        %1675 = vmatprep.subr.bf16.mxu0 0
        %1676 = vmatpush1.bf16.msra.mxu0 0
        %1677 = vmatprep.subr.bf16.mxu0 0
        %1678 = vmatpush1.bf16.msra.mxu0 0
        %1679 = vmatprep.subr.bf16.mxu0 0
        %1680 = vmatpush1.bf16.msra.mxu0 0
        %1681 = vmatprep.mubr.bf16.mxu0 0
        %1682 = vmatmul.mubr.bf16.gmra.mrb[0].mxu0 %v1589
        %v1683 = vpop.f32.mrb[0].mxu0
        %v1684 = vadd.f32 %v1600, %v1683
        %v1685 = vpop.f32.mrb[0].mxu0
        %v1686 = vpop.f32.mrb[0].mxu0
        %v1687 = vadd.f32 %v1600, %v1686
        %v1688 = vpop.f32.mrb[0].mxu0
        %1689 = vmatprep.mubr.bf16.mxu0 0
        %1690 = vmatmul.mubr.bf16.gmra.mrb[0].mxu0 %v1590
        %v1691 = vpop.f32.mrb[0].mxu0
        %v1692 = vadd.f32 %v1600, %v1691
        %v1693 = vpop.f32.mrb[0].mxu0
        %v1694 = vpop.f32.mrb[0].mxu0
        %v1695 = vadd.f32 %v1600, %v1694
        %v1696 = vpop.f32.mrb[0].mxu0
        %1697 = vmatprep.mubr.bf16.mxu0 0
        %1698 = vmatmul.mubr.bf16.gmra.mrb[0].mxu0 %v1591
        %v1699 = vpop.f32.mrb[0].mxu0
        %v1700 = vadd.f32 %v1600, %v1699
        %v1701 = vpop.f32.mrb[0].mxu0
        %v1702 = vpop.f32.mrb[0].mxu0
        %v1703 = vadd.f32 %v1600, %v1702
        %v1704 = vpop.f32.mrb[0].mxu0
        %1705 = vmatprep.mubr.bf16.mxu0 0
        %1706 = vmatmul.mubr.bf16.gmra.mrb[0].mxu0 %v1592
        %v1707 = vpop.f32.mrb[0].mxu0
        %v1708 = vadd.f32 %v1600, %v1707
        %v1709 = vpop.f32.mrb[0].mxu0
        %v1710 = vpop.f32.mrb[0].mxu0
        %v1711 = vadd.f32 %v1600, %v1710
        %v1712 = vpop.f32.mrb[0].mxu0
        %1713 = vmatprep.mubr.bf16.mxu0 0
        %1714 = vmatmul.mubr.bf16.gmra.mrb[0].mxu0 %v1593
        %v1715 = vpop.f32.mrb[0].mxu0
        %v1716 = vadd.f32 %v1600, %v1715
        %v1717 = vpop.f32.mrb[0].mxu0
        %v1718 = vpop.f32.mrb[0].mxu0
        %v1719 = vadd.f32 %v1600, %v1718
        %v1720 = vpop.f32.mrb[0].mxu0
        %1721 = vmatprep.mubr.bf16.mxu0 0
        %1722 = vmatmul.mubr.bf16.gmra.mrb[0].mxu0 %v1594
        %v1723 = vpop.f32.mrb[0].mxu0
        %v1724 = vadd.f32 %v1600, %v1723
        %v1725 = vpop.f32.mrb[0].mxu0
        %v1726 = vpop.f32.mrb[0].mxu0
        %v1727 = vadd.f32 %v1600, %v1726
        %v1728 = vpop.f32.mrb[0].mxu0
        %1729 = vmatprep.mubr.bf16.mxu0 0
        %1730 = vmatmul.mubr.bf16.gmra.mrb[0].mxu0 %v1595
        %v1731 = vpop.f32.mrb[0].mxu0
        %v1732 = vadd.f32 %v1600, %v1731
        %v1733 = vpop.f32.mrb[0].mxu0
        %v1734 = vpop.f32.mrb[0].mxu0
        %v1735 = vadd.f32 %v1600, %v1734
        %v1736 = vpop.f32.mrb[0].mxu0
        %1737 = vmatprep.mubr.bf16.mxu0 0
        %1738 = vmatmul.mubr.bf16.gmra.mrb[0].mxu0 %v1596
        %v1739 = vpop.f32.mrb[0].mxu0
        %v1740 = vadd.f32 %v1600, %v1739
        %v1741 = vpop.f32.mrb[0].mxu0
        %v1742 = vpop.f32.mrb[0].mxu0
        %v1743 = vadd.f32 %v1600, %v1742
        %v1744 = vpop.f32.mrb[0].mxu0
        %1745 = vdwg.mxu0
        %v1746 = vadd.f32 %v553, %v1684
        %v1747 = vadd.f32 %v554, %v1687
        %v1748 = vadd.f32 %v555, %v1692
        %v1749 = vadd.f32 %v556, %v1695
        %v1750 = vadd.f32 %v557, %v1700
        %v1751 = vadd.f32 %v558, %v1703
        %v1752 = vadd.f32 %v559, %v1708
        %v1753 = vadd.f32 %v560, %v1711
        %v1754 = vadd.f32 %v561, %v1716
        %v1755 = vadd.f32 %v562, %v1719
        %v1756 = vadd.f32 %v563, %v1724
        %v1757 = vadd.f32 %v564, %v1727
        %v1758 = vadd.f32 %v565, %v1732
        %v1759 = vadd.f32 %v566, %v1735
        %v1760 = vadd.f32 %v567, %v1740
        %v1761 = vadd.f32 %v568, %v1743
        %1762 = vadd.xlane.f32.xlu0 %v1746
        %v1763 = vpop.xlane.xlu0 %1762
        %1764 = vadd.xlane.f32.xlu0 %v1747
        %v1765 = vpop.xlane.xlu0 %1764
        %1766 = vadd.xlane.f32.xlu0 %v1748
        %v1767 = vpop.xlane.xlu0 %1766
        %1768 = vadd.xlane.f32.xlu0 %v1749
        %v1769 = vpop.xlane.xlu0 %1768
        %1770 = vadd.xlane.f32.xlu0 %v1750
        %v1771 = vpop.xlane.xlu0 %1770
        %1772 = vadd.xlane.f32.xlu0 %v1751
        %v1773 = vpop.xlane.xlu0 %1772
        %1774 = vadd.xlane.f32.xlu0 %v1752
        %v1775 = vpop.xlane.xlu0 %1774
        %1776 = vadd.xlane.f32.xlu0 %v1753
        %v1777 = vpop.xlane.xlu0 %1776
        %1778 = vadd.xlane.f32.xlu0 %v1754
        %v1779 = vpop.xlane.xlu0 %1778
        %1780 = vadd.xlane.f32.xlu0 %v1755
        %v1781 = vpop.xlane.xlu0 %1780
        %1782 = vadd.xlane.f32.xlu0 %v1756
        %v1783 = vpop.xlane.xlu0 %1782
        %1784 = vadd.xlane.f32.xlu0 %v1757
        %v1785 = vpop.xlane.xlu0 %1784
        %1786 = vadd.xlane.f32.xlu0 %v1758
        %v1787 = vpop.xlane.xlu0 %1786
        %1788 = vadd.xlane.f32.xlu0 %v1759
        %v1789 = vpop.xlane.xlu0 %1788
        %1790 = vadd.xlane.f32.xlu0 %v1760
        %v1791 = vpop.xlane.xlu0 %1790
        %1792 = vadd.xlane.f32.xlu0 %v1761
        %v1793 = vpop.xlane.xlu0 %1792
        %v1794 = vrcp.pop 128.0
        %v1795 = vmul.f32 %v1763, %v1794
        %v1796 = vmul.f32 %v1765, %v1794
        %v1797 = vmul.f32 %v1767, %v1794
        %v1798 = vmul.f32 %v1769, %v1794
        %v1799 = vmul.f32 %v1771, %v1794
        %v1800 = vmul.f32 %v1773, %v1794
        %v1801 = vmul.f32 %v1775, %v1794
        %v1802 = vmul.f32 %v1777, %v1794
        %v1803 = vmul.f32 %v1779, %v1794
        %v1804 = vmul.f32 %v1781, %v1794
        %v1805 = vmul.f32 %v1783, %v1794
        %v1806 = vmul.f32 %v1785, %v1794
        %v1807 = vmul.f32 %v1787, %v1794
        %v1808 = vmul.f32 %v1789, %v1794
        %v1809 = vmul.f32 %v1791, %v1794
        %v1810 = vmul.f32 %v1793, %v1794
        %v1811 = vsub.f32 %v1746, %v1795
        %v1812 = vsub.f32 %v1747, %v1796
        %v1813 = vsub.f32 %v1748, %v1797
        %v1814 = vsub.f32 %v1749, %v1798
        %v1815 = vsub.f32 %v1750, %v1799
        %v1816 = vsub.f32 %v1751, %v1800
        %v1817 = vsub.f32 %v1752, %v1801
        %v1818 = vsub.f32 %v1753, %v1802
        %v1819 = vsub.f32 %v1754, %v1803
        %v1820 = vsub.f32 %v1755, %v1804
        %v1821 = vsub.f32 %v1756, %v1805
        %v1822 = vsub.f32 %v1757, %v1806
        %v1823 = vsub.f32 %v1758, %v1807
        %v1824 = vsub.f32 %v1759, %v1808
        %v1825 = vsub.f32 %v1760, %v1809
        %v1826 = vsub.f32 %v1761, %v1810
        %v1827 = vmul.f32 %v1811, %v1811
        %v1828 = vmul.f32 %v1812, %v1812
        %v1829 = vmul.f32 %v1813, %v1813
        %v1830 = vmul.f32 %v1814, %v1814
        %v1831 = vmul.f32 %v1815, %v1815
        %v1832 = vmul.f32 %v1816, %v1816
        %v1833 = vmul.f32 %v1817, %v1817
        %v1834 = vmul.f32 %v1818, %v1818
        %v1835 = vmul.f32 %v1819, %v1819
        %v1836 = vmul.f32 %v1820, %v1820
        %v1837 = vmul.f32 %v1821, %v1821
        %v1838 = vmul.f32 %v1822, %v1822
        %v1839 = vmul.f32 %v1823, %v1823
        %v1840 = vmul.f32 %v1824, %v1824
        %v1841 = vmul.f32 %v1825, %v1825
        %v1842 = vmul.f32 %v1826, %v1826
        %1843 = vadd.xlane.f32.xlu0 %v1827
        %v1844 = vpop.xlane.xlu0 %1843
        %1845 = vadd.xlane.f32.xlu0 %v1828
        %v1846 = vpop.xlane.xlu0 %1845
        %1847 = vadd.xlane.f32.xlu0 %v1829
        %v1848 = vpop.xlane.xlu0 %1847
        %1849 = vadd.xlane.f32.xlu0 %v1830
        %v1850 = vpop.xlane.xlu0 %1849
        %1851 = vadd.xlane.f32.xlu0 %v1831
        %v1852 = vpop.xlane.xlu0 %1851
        %1853 = vadd.xlane.f32.xlu0 %v1832
        %v1854 = vpop.xlane.xlu0 %1853
        %1855 = vadd.xlane.f32.xlu0 %v1833
        %v1856 = vpop.xlane.xlu0 %1855
        %1857 = vadd.xlane.f32.xlu0 %v1834
        %v1858 = vpop.xlane.xlu0 %1857
        %1859 = vadd.xlane.f32.xlu0 %v1835
        %v1860 = vpop.xlane.xlu0 %1859
        %1861 = vadd.xlane.f32.xlu0 %v1836
        %v1862 = vpop.xlane.xlu0 %1861
        %1863 = vadd.xlane.f32.xlu0 %v1837
        %v1864 = vpop.xlane.xlu0 %1863
        %1865 = vadd.xlane.f32.xlu0 %v1838
        %v1866 = vpop.xlane.xlu0 %1865
        %1867 = vadd.xlane.f32.xlu0 %v1839
        %v1868 = vpop.xlane.xlu0 %1867
        %1869 = vadd.xlane.f32.xlu0 %v1840
        %v1870 = vpop.xlane.xlu0 %1869
        %1871 = vadd.xlane.f32.xlu0 %v1841
        %v1872 = vpop.xlane.xlu0 %1871
        %1873 = vadd.xlane.f32.xlu0 %v1842
        %v1874 = vpop.xlane.xlu0 %1873
        %v1875 = vmul.f32 %v1844, %v1794
        %v1876 = vmul.f32 %v1846, %v1794
        %v1877 = vmul.f32 %v1848, %v1794
        %v1878 = vmul.f32 %v1850, %v1794
        %v1879 = vmul.f32 %v1852, %v1794
        %v1880 = vmul.f32 %v1854, %v1794
        %v1881 = vmul.f32 %v1856, %v1794
        %v1882 = vmul.f32 %v1858, %v1794
        %v1883 = vmul.f32 %v1860, %v1794
        %v1884 = vmul.f32 %v1862, %v1794
        %v1885 = vmul.f32 %v1864, %v1794
        %v1886 = vmul.f32 %v1866, %v1794
        %v1887 = vmul.f32 %v1868, %v1794
        %v1888 = vmul.f32 %v1870, %v1794
        %v1889 = vmul.f32 %v1872, %v1794
        %v1890 = vmul.f32 %v1874, %v1794
        %v1891 = vadd.f32 %v1875, 1e-05
        %v1892 = vadd.f32 %v1876, 1e-05
        %v1893 = vadd.f32 %v1877, 1e-05
        %v1894 = vadd.f32 %v1878, 1e-05
        %v1895 = vadd.f32 %v1879, 1e-05
        %v1896 = vadd.f32 %v1880, 1e-05
        %v1897 = vadd.f32 %v1881, 1e-05
        %v1898 = vadd.f32 %v1882, 1e-05
        %v1899 = vadd.f32 %v1883, 1e-05
        %v1900 = vadd.f32 %v1884, 1e-05
        %v1901 = vadd.f32 %v1885, 1e-05
        %v1902 = vadd.f32 %v1886, 1e-05
        %v1903 = vadd.f32 %v1887, 1e-05
        %v1904 = vadd.f32 %v1888, 1e-05
        %v1905 = vadd.f32 %v1889, 1e-05
        %v1906 = vadd.f32 %v1890, 1e-05
        %v1907 = vrsqrt.pop %v1891
        %v1908 = vrsqrt.pop %v1892
        %v1909 = vrsqrt.pop %v1893
        %v1910 = vrsqrt.pop %v1894
        %v1911 = vrsqrt.pop %v1895
        %v1912 = vrsqrt.pop %v1896
        %v1913 = vrsqrt.pop %v1897
        %v1914 = vrsqrt.pop %v1898
        %v1915 = vrsqrt.pop %v1899
        %v1916 = vrsqrt.pop %v1900
        %v1917 = vrsqrt.pop %v1901
        %v1918 = vrsqrt.pop %v1902
        %v1919 = vrsqrt.pop %v1903
        %v1920 = vrsqrt.pop %v1904
        %v1921 = vrsqrt.pop %v1905
        %v1922 = vrsqrt.pop %v1906
        %v1923 = vmul.f32 %v1811, %v1907
        %v1924 = vmul.f32 %v1812, %v1908
        %v1925 = vmul.f32 %v1813, %v1909
        %v1926 = vmul.f32 %v1814, %v1910
        %v1927 = vmul.f32 %v1815, %v1911
        %v1928 = vmul.f32 %v1816, %v1912
        %v1929 = vmul.f32 %v1817, %v1913
        %v1930 = vmul.f32 %v1818, %v1914
        %v1931 = vmul.f32 %v1819, %v1915
        %v1932 = vmul.f32 %v1820, %v1916
        %v1933 = vmul.f32 %v1821, %v1917
        %v1934 = vmul.f32 %v1822, %v1918
        %v1935 = vmul.f32 %v1823, %v1919
        %v1936 = vmul.f32 %v1824, %v1920
        %v1937 = vmul.f32 %v1825, %v1921
        %v1938 = vmul.f32 %v1826, %v1922
        %v1939 = vlaneseq
        %v1940 = vshrl.u32 %v1939, 7
        %v1941 = vsub.s32 4, %v1940
        %v1942 = vrot.slane %v795, %v1941
        %v1943 = vmul.f32 %v1923, %v1942
        %v1944 = vmul.f32 %v1924, %v1942
        %v1945 = vmul.f32 %v1925, %v1942
        %v1946 = vmul.f32 %v1926, %v1942
        %v1947 = vmul.f32 %v1927, %v1942
        %v1948 = vmul.f32 %v1928, %v1942
        %v1949 = vmul.f32 %v1929, %v1942
        %v1950 = vmul.f32 %v1930, %v1942
        %v1951 = vmul.f32 %v1931, %v1942
        %v1952 = vmul.f32 %v1932, %v1942
        %v1953 = vmul.f32 %v1933, %v1942
        %v1954 = vmul.f32 %v1934, %v1942
        %v1955 = vmul.f32 %v1935, %v1942
        %v1956 = vmul.f32 %v1936, %v1942
        %v1957 = vmul.f32 %v1937, %v1942
        %v1958 = vmul.f32 %v1938, %v1942
        %v1959 = vlaneseq
        %v1960 = vshrl.u32 %v1959, 7
        %v1961 = vsub.s32 5, %v1960
        %v1962 = vrot.slane %v795, %v1961
        %v1963 = vadd.f32 %v1943, %v1962
        %v1964 = vadd.f32 %v1944, %v1962
        %v1965 = vadd.f32 %v1945, %v1962
        %v1966 = vadd.f32 %v1946, %v1962
        %v1967 = vadd.f32 %v1947, %v1962
        %v1968 = vadd.f32 %v1948, %v1962
        %v1969 = vadd.f32 %v1949, %v1962
        %v1970 = vadd.f32 %v1950, %v1962
        %v1971 = vadd.f32 %v1951, %v1962
        %v1972 = vadd.f32 %v1952, %v1962
        %v1973 = vadd.f32 %v1953, %v1962
        %v1974 = vadd.f32 %v1954, %v1962
        %v1975 = vadd.f32 %v1955, %v1962
        %v1976 = vadd.f32 %v1956, %v1962
        %v1977 = vadd.f32 %v1957, %v1962
        %v1978 = vadd.f32 %v1958, %v1962
        %v1979 = vpack.c.bf16 %v1964, %v1963
        %v1980 = vpack.c.bf16 %v1966, %v1965
        %v1981 = vpack.c.bf16 %v1968, %v1967
        %v1982 = vpack.c.bf16 %v1970, %v1969
        %v1983 = vpack.c.bf16 %v1972, %v1971
        %v1984 = vpack.c.bf16 %v1974, %v1973
        %v1985 = vpack.c.bf16 %v1976, %v1975
        %v1986 = vpack.c.bf16 %v1978, %v1977
        %v1987 = vlaneseq
        %v1988 = vshrl.u32 %v1987, 7
        %v1989 = vsub.s32 2, %v1988
        %v1990 = vrot.slane %v795, %v1989
        %v1991 = vlaneseq
        %v1992 = vshrl.u32 %v1991, 7
        %v1993 = vsub.s32 2, %v1992
        %v1994 = vrot.slane %v796, %v1993
        %v2011 = vunpack.c.l.b16 %v683
        %v2012 = vunpack.c.h.b16 %v683
        %v2013 = vunpack.c.l.b16 %v684
        %v2014 = vunpack.c.h.b16 %v684
        %v2015 = vunpack.c.l.b16 %v685
        %v2016 = vunpack.c.h.b16 %v685
        %v2017 = vunpack.c.l.b16 %v686
        %v2018 = vunpack.c.h.b16 %v686
        %v2019 = vunpack.c.l.b16 %v687
        %v2020 = vunpack.c.h.b16 %v687
        %v2021 = vunpack.c.l.b16 %v688
        %v2022 = vunpack.c.h.b16 %v688
        %v2023 = vunpack.c.l.b16 %v689
        %v2024 = vunpack.c.h.b16 %v689
        %v2025 = vunpack.c.l.b16 %v690
        %v2026 = vunpack.c.h.b16 %v690
        %v2027 = vunpack.c.l.b16 %v691
        %v2028 = vunpack.c.h.b16 %v691
        %v2029 = vunpack.c.l.b16 %v692
        %v2030 = vunpack.c.h.b16 %v692
        %v2031 = vunpack.c.l.b16 %v693
        %v2032 = vunpack.c.h.b16 %v693
        %v2033 = vunpack.c.l.b16 %v694
        %v2034 = vunpack.c.h.b16 %v694
        %v2035 = vunpack.c.l.b16 %v695
        %v2036 = vunpack.c.h.b16 %v695
        %v2037 = vunpack.c.l.b16 %v696
        %v2038 = vunpack.c.h.b16 %v696
        %v2039 = vunpack.c.l.b16 %v697
        %v2040 = vunpack.c.h.b16 %v697
        %v2041 = vunpack.c.l.b16 %v698
        %v2042 = vunpack.c.h.b16 %v698
        %v2043 = vpack.c.b16 %v2013, %v2011
        %v2044 = vpack.c.b16 %v2014, %v2012
        %v2045 = vpack.c.b16 %v2017, %v2015
        %v2046 = vpack.c.b16 %v2018, %v2016
        %v2047 = vpack.c.b16 %v2021, %v2019
        %v2048 = vpack.c.b16 %v2022, %v2020
        %v2049 = vpack.c.b16 %v2025, %v2023
        %v2050 = vpack.c.b16 %v2026, %v2024
        %v2051 = vpack.c.b16 %v2029, %v2027
        %v2052 = vpack.c.b16 %v2030, %v2028
        %v2053 = vpack.c.b16 %v2033, %v2031
        %v2054 = vpack.c.b16 %v2034, %v2032
        %v2055 = vpack.c.b16 %v2037, %v2035
        %v2056 = vpack.c.b16 %v2038, %v2036
        %v2057 = vpack.c.b16 %v2041, %v2039
        %v2058 = vpack.c.b16 %v2042, %v2040
        %2075 = vmatprep.subr.bf16.mxu0 %v2044
        %2076 = vmatpush1.bf16.msra.mxu0 %v2043
        %2077 = vmatprep.subr.bf16.mxu0 %v2046
        %2078 = vmatpush1.bf16.msra.mxu0 %v2045
        %2079 = vmatprep.subr.bf16.mxu0 %v2048
        %2080 = vmatpush1.bf16.msra.mxu0 %v2047
        %2081 = vmatprep.subr.bf16.mxu0 %v2050
        %2082 = vmatpush1.bf16.msra.mxu0 %v2049
        %2083 = vmatprep.subr.bf16.mxu0 %v2052
        %2084 = vmatpush1.bf16.msra.mxu0 %v2051
        %2085 = vmatprep.subr.bf16.mxu0 %v2054
        %2086 = vmatpush1.bf16.msra.mxu0 %v2053
        %2087 = vmatprep.subr.bf16.mxu0 %v2056
        %2088 = vmatpush1.bf16.msra.mxu0 %v2055
        %2089 = vmatprep.subr.bf16.mxu0 %v2058
        %2090 = vmatpush1.bf16.msra.mxu0 %v2057
        %2091 = vmatprep.subr.bf16.mxu0 0
        %2092 = vmatpush1.bf16.msra.mxu0 0
        %2093 = vmatprep.subr.bf16.mxu0 0
        %2094 = vmatpush1.bf16.msra.mxu0 0
        %2095 = vmatprep.subr.bf16.mxu0 0
        %2096 = vmatpush1.bf16.msra.mxu0 0
        %2097 = vmatprep.subr.bf16.mxu0 0
        %2098 = vmatpush1.bf16.msra.mxu0 0
        %2099 = vmatprep.subr.bf16.mxu0 0
        %2100 = vmatpush1.bf16.msra.mxu0 0
        %2101 = vmatprep.subr.bf16.mxu0 0
        %2102 = vmatpush1.bf16.msra.mxu0 0
        %2103 = vmatprep.subr.bf16.mxu0 0
        %2104 = vmatpush1.bf16.msra.mxu0 0
        %2105 = vmatprep.subr.bf16.mxu0 0
        %2106 = vmatpush1.bf16.msra.mxu0 0
        %2107 = vmatprep.mubr.bf16.mxu0 0
        %2108 = vmatmul.mubr.bf16.gmra.mrb[0].mxu0 %v1979
        %v2109 = vpop.f32.mrb[0].mxu0
        %v2110 = vadd.f32 %v1990, %v2109
        %v2111 = vpop.f32.mrb[0].mxu0
        %v2112 = vadd.f32 %v1994, %v2111
        %v2113 = vpop.f32.mrb[0].mxu0
        %v2114 = vadd.f32 %v1990, %v2113
        %v2115 = vpop.f32.mrb[0].mxu0
        %v2116 = vadd.f32 %v1994, %v2115
        %2117 = vmatprep.mubr.bf16.mxu0 0
        %2118 = vmatmul.mubr.bf16.gmra.mrb[0].mxu0 %v1980
        %v2119 = vpop.f32.mrb[0].mxu0
        %v2120 = vadd.f32 %v1990, %v2119
        %v2121 = vpop.f32.mrb[0].mxu0
        %v2122 = vadd.f32 %v1994, %v2121
        %v2123 = vpop.f32.mrb[0].mxu0
        %v2124 = vadd.f32 %v1990, %v2123
        %v2125 = vpop.f32.mrb[0].mxu0
        %v2126 = vadd.f32 %v1994, %v2125
        %2127 = vmatprep.mubr.bf16.mxu0 0
        %2128 = vmatmul.mubr.bf16.gmra.mrb[0].mxu0 %v1981
        %v2129 = vpop.f32.mrb[0].mxu0
        %v2130 = vadd.f32 %v1990, %v2129
        %v2131 = vpop.f32.mrb[0].mxu0
        %v2132 = vadd.f32 %v1994, %v2131
        %v2133 = vpop.f32.mrb[0].mxu0
        %v2134 = vadd.f32 %v1990, %v2133
        %v2135 = vpop.f32.mrb[0].mxu0
        %v2136 = vadd.f32 %v1994, %v2135
        %2137 = vmatprep.mubr.bf16.mxu0 0
        %2138 = vmatmul.mubr.bf16.gmra.mrb[0].mxu0 %v1982
        %v2139 = vpop.f32.mrb[0].mxu0
        %v2140 = vadd.f32 %v1990, %v2139
        %v2141 = vpop.f32.mrb[0].mxu0
        %v2142 = vadd.f32 %v1994, %v2141
        %v2143 = vpop.f32.mrb[0].mxu0
        %v2144 = vadd.f32 %v1990, %v2143
        %v2145 = vpop.f32.mrb[0].mxu0
        %v2146 = vadd.f32 %v1994, %v2145
        %2147 = vmatprep.mubr.bf16.mxu0 0
        %2148 = vmatmul.mubr.bf16.gmra.mrb[0].mxu0 %v1983
        %v2149 = vpop.f32.mrb[0].mxu0
        %v2150 = vadd.f32 %v1990, %v2149
        %v2151 = vpop.f32.mrb[0].mxu0
        %v2152 = vadd.f32 %v1994, %v2151
        %v2153 = vpop.f32.mrb[0].mxu0
        %v2154 = vadd.f32 %v1990, %v2153
        %v2155 = vpop.f32.mrb[0].mxu0
        %v2156 = vadd.f32 %v1994, %v2155
        %2157 = vmatprep.mubr.bf16.mxu0 0
        %2158 = vmatmul.mubr.bf16.gmra.mrb[0].mxu0 %v1984
        %v2159 = vpop.f32.mrb[0].mxu0
        %v2160 = vadd.f32 %v1990, %v2159
        %v2161 = vpop.f32.mrb[0].mxu0
        %v2162 = vadd.f32 %v1994, %v2161
        %v2163 = vpop.f32.mrb[0].mxu0
        %v2164 = vadd.f32 %v1990, %v2163
        %v2165 = vpop.f32.mrb[0].mxu0
        %v2166 = vadd.f32 %v1994, %v2165
        %2167 = vmatprep.mubr.bf16.mxu0 0
        %2168 = vmatmul.mubr.bf16.gmra.mrb[0].mxu0 %v1985
        %v2169 = vpop.f32.mrb[0].mxu0
        %v2170 = vadd.f32 %v1990, %v2169
        %v2171 = vpop.f32.mrb[0].mxu0
        %v2172 = vadd.f32 %v1994, %v2171
        %v2173 = vpop.f32.mrb[0].mxu0
        %v2174 = vadd.f32 %v1990, %v2173
        %v2175 = vpop.f32.mrb[0].mxu0
        %v2176 = vadd.f32 %v1994, %v2175
        %2177 = vmatprep.mubr.bf16.mxu0 0
        %2178 = vmatmul.mubr.bf16.gmra.mrb[0].mxu0 %v1986
        %v2179 = vpop.f32.mrb[0].mxu0
        %v2180 = vadd.f32 %v1990, %v2179
        %v2181 = vpop.f32.mrb[0].mxu0
        %v2182 = vadd.f32 %v1994, %v2181
        %v2183 = vpop.f32.mrb[0].mxu0
        %v2184 = vadd.f32 %v1990, %v2183
        %v2185 = vpop.f32.mrb[0].mxu0
        %v2186 = vadd.f32 %v1994, %v2185
        %2187 = vdwg.mxu0
        %v2188 = vmax.f32 %v2110, 0.0
        %v2189 = vmax.f32 %v2112, 0.0
        %v2190 = vmax.f32 %v2114, 0.0
        %v2191 = vmax.f32 %v2116, 0.0
        %v2192 = vmax.f32 %v2120, 0.0
        %v2193 = vmax.f32 %v2122, 0.0
        %v2194 = vmax.f32 %v2124, 0.0
        %v2195 = vmax.f32 %v2126, 0.0
        %v2196 = vmax.f32 %v2130, 0.0
        %v2197 = vmax.f32 %v2132, 0.0
        %v2198 = vmax.f32 %v2134, 0.0
        %v2199 = vmax.f32 %v2136, 0.0
        %v2200 = vmax.f32 %v2140, 0.0
        %v2201 = vmax.f32 %v2142, 0.0
        %v2202 = vmax.f32 %v2144, 0.0
        %v2203 = vmax.f32 %v2146, 0.0
        %v2204 = vmax.f32 %v2150, 0.0
        %v2205 = vmax.f32 %v2152, 0.0
        %v2206 = vmax.f32 %v2154, 0.0
        %v2207 = vmax.f32 %v2156, 0.0
        %v2208 = vmax.f32 %v2160, 0.0
        %v2209 = vmax.f32 %v2162, 0.0
        %v2210 = vmax.f32 %v2164, 0.0
        %v2211 = vmax.f32 %v2166, 0.0
        %v2212 = vmax.f32 %v2170, 0.0
        %v2213 = vmax.f32 %v2172, 0.0
        %v2214 = vmax.f32 %v2174, 0.0
        %v2215 = vmax.f32 %v2176, 0.0
        %v2216 = vmax.f32 %v2180, 0.0
        %v2217 = vmax.f32 %v2182, 0.0
        %v2218 = vmax.f32 %v2184, 0.0
        %v2219 = vmax.f32 %v2186, 0.0
        %v2220 = vpack.c.bf16 %v2190, %v2188
        %v2221 = vpack.c.bf16 %v2191, %v2189
        %v2222 = vpack.c.bf16 %v2194, %v2192
        %v2223 = vpack.c.bf16 %v2195, %v2193
        %v2224 = vpack.c.bf16 %v2198, %v2196
        %v2225 = vpack.c.bf16 %v2199, %v2197
        %v2226 = vpack.c.bf16 %v2202, %v2200
        %v2227 = vpack.c.bf16 %v2203, %v2201
        %v2228 = vpack.c.bf16 %v2206, %v2204
        %v2229 = vpack.c.bf16 %v2207, %v2205
        %v2230 = vpack.c.bf16 %v2210, %v2208
        %v2231 = vpack.c.bf16 %v2211, %v2209
        %v2232 = vpack.c.bf16 %v2214, %v2212
        %v2233 = vpack.c.bf16 %v2215, %v2213
        %v2234 = vpack.c.bf16 %v2218, %v2216
        %v2235 = vpack.c.bf16 %v2219, %v2217
        %v2268 = vunpack.c.l.b16 %v699
        %v2269 = vunpack.c.l.b16 %v700
        %v2270 = vunpack.c.l.b16 %v701
        %v2271 = vunpack.c.l.b16 %v702
        %v2272 = vunpack.c.l.b16 %v703
        %v2273 = vunpack.c.l.b16 %v704
        %v2274 = vunpack.c.l.b16 %v705
        %v2275 = vunpack.c.l.b16 %v706
        %v2276 = vunpack.c.l.b16 %v707
        %v2277 = vunpack.c.l.b16 %v708
        %v2278 = vunpack.c.l.b16 %v709
        %v2279 = vunpack.c.l.b16 %v710
        %v2280 = vunpack.c.l.b16 %v711
        %v2281 = vunpack.c.l.b16 %v712
        %v2282 = vunpack.c.l.b16 %v713
        %v2283 = vunpack.c.l.b16 %v714
        %v2284 = vunpack.c.l.b16 %v715
        %v2285 = vunpack.c.l.b16 %v716
        %v2286 = vunpack.c.l.b16 %v717
        %v2287 = vunpack.c.l.b16 %v718
        %v2288 = vunpack.c.l.b16 %v719
        %v2289 = vunpack.c.l.b16 %v720
        %v2290 = vunpack.c.l.b16 %v721
        %v2291 = vunpack.c.l.b16 %v722
        %v2292 = vunpack.c.l.b16 %v723
        %v2293 = vunpack.c.l.b16 %v724
        %v2294 = vunpack.c.l.b16 %v725
        %v2295 = vunpack.c.l.b16 %v726
        %v2296 = vunpack.c.l.b16 %v727
        %v2297 = vunpack.c.l.b16 %v728
        %v2298 = vunpack.c.l.b16 %v729
        %v2299 = vunpack.c.l.b16 %v730
        %v2300 = vpack.c.b16 %v2269, %v2268
        %v2301 = vpack.c.b16 %v2271, %v2270
        %v2302 = vpack.c.b16 %v2273, %v2272
        %v2303 = vpack.c.b16 %v2275, %v2274
        %v2304 = vpack.c.b16 %v2277, %v2276
        %v2305 = vpack.c.b16 %v2279, %v2278
        %v2306 = vpack.c.b16 %v2281, %v2280
        %v2307 = vpack.c.b16 %v2283, %v2282
        %v2308 = vpack.c.b16 %v2285, %v2284
        %v2309 = vpack.c.b16 %v2287, %v2286
        %v2310 = vpack.c.b16 %v2289, %v2288
        %v2311 = vpack.c.b16 %v2291, %v2290
        %v2312 = vpack.c.b16 %v2293, %v2292
        %v2313 = vpack.c.b16 %v2295, %v2294
        %v2314 = vpack.c.b16 %v2297, %v2296
        %v2315 = vpack.c.b16 %v2299, %v2298
        %2332 = vmatprep.subr.bf16.mxu0 0
        %2333 = vmatpush1.bf16.msra.mxu0 %v2300
        %2334 = vmatprep.subr.bf16.mxu0 0
        %2335 = vmatpush1.bf16.msra.mxu0 %v2301
        %2336 = vmatprep.subr.bf16.mxu0 0
        %2337 = vmatpush1.bf16.msra.mxu0 %v2302
        %2338 = vmatprep.subr.bf16.mxu0 0
        %2339 = vmatpush1.bf16.msra.mxu0 %v2303
        %2340 = vmatprep.subr.bf16.mxu0 0
        %2341 = vmatpush1.bf16.msra.mxu0 %v2304
        %2342 = vmatprep.subr.bf16.mxu0 0
        %2343 = vmatpush1.bf16.msra.mxu0 %v2305
        %2344 = vmatprep.subr.bf16.mxu0 0
        %2345 = vmatpush1.bf16.msra.mxu0 %v2306
        %2346 = vmatprep.subr.bf16.mxu0 0
        %2347 = vmatpush1.bf16.msra.mxu0 %v2307
        %2348 = vmatprep.subr.bf16.mxu0 0
        %2349 = vmatpush1.bf16.msra.mxu0 %v2308
        %2350 = vmatprep.subr.bf16.mxu0 0
        %2351 = vmatpush1.bf16.msra.mxu0 %v2309
        %2352 = vmatprep.subr.bf16.mxu0 0
        %2353 = vmatpush1.bf16.msra.mxu0 %v2310
        %2354 = vmatprep.subr.bf16.mxu0 0
        %2355 = vmatpush1.bf16.msra.mxu0 %v2311
        %2356 = vmatprep.subr.bf16.mxu0 0
        %2357 = vmatpush1.bf16.msra.mxu0 %v2312
        %2358 = vmatprep.subr.bf16.mxu0 0
        %2359 = vmatpush1.bf16.msra.mxu0 %v2313
        %2360 = vmatprep.subr.bf16.mxu0 0
        %2361 = vmatpush1.bf16.msra.mxu0 %v2314
        %2362 = vmatprep.subr.bf16.mxu0 0
        %2363 = vmatpush1.bf16.msra.mxu0 %v2315
        %2364 = vmatprep.mubr.bf16.mxu0 %v2221
        %2365 = vmatmul.mubr.bf16.gmra.mrb[0].mxu0 %v2220
        %v2366 = vpop.f32.mrb[0].mxu0
        %v2367 = vadd.f32 0.0, %v2366
        %v2368 = vpop.f32.mrb[0].mxu0
        %v2369 = vpop.f32.mrb[0].mxu0
        %v2370 = vadd.f32 0.0, %v2369
        %v2371 = vpop.f32.mrb[0].mxu0
        %2372 = vmatprep.mubr.bf16.mxu0 %v2223
        %2373 = vmatmul.mubr.bf16.gmra.mrb[0].mxu0 %v2222
        %v2374 = vpop.f32.mrb[0].mxu0
        %v2375 = vadd.f32 0.0, %v2374
        %v2376 = vpop.f32.mrb[0].mxu0
        %v2377 = vpop.f32.mrb[0].mxu0
        %v2378 = vadd.f32 0.0, %v2377
        %v2379 = vpop.f32.mrb[0].mxu0
        %2380 = vmatprep.mubr.bf16.mxu0 %v2225
        %2381 = vmatmul.mubr.bf16.gmra.mrb[0].mxu0 %v2224
        %v2382 = vpop.f32.mrb[0].mxu0
        %v2383 = vadd.f32 0.0, %v2382
        %v2384 = vpop.f32.mrb[0].mxu0
        %v2385 = vpop.f32.mrb[0].mxu0
        %v2386 = vadd.f32 0.0, %v2385
        %v2387 = vpop.f32.mrb[0].mxu0
        %2388 = vmatprep.mubr.bf16.mxu0 %v2227
        %2389 = vmatmul.mubr.bf16.gmra.mrb[0].mxu0 %v2226
        %v2390 = vpop.f32.mrb[0].mxu0
        %v2391 = vadd.f32 0.0, %v2390
        %v2392 = vpop.f32.mrb[0].mxu0
        %v2393 = vpop.f32.mrb[0].mxu0
        %v2394 = vadd.f32 0.0, %v2393
        %v2395 = vpop.f32.mrb[0].mxu0
        %2396 = vmatprep.mubr.bf16.mxu0 %v2229
        %2397 = vmatmul.mubr.bf16.gmra.mrb[0].mxu0 %v2228
        %v2398 = vpop.f32.mrb[0].mxu0
        %v2399 = vadd.f32 0.0, %v2398
        %v2400 = vpop.f32.mrb[0].mxu0
        %v2401 = vpop.f32.mrb[0].mxu0
        %v2402 = vadd.f32 0.0, %v2401
        %v2403 = vpop.f32.mrb[0].mxu0
        %2404 = vmatprep.mubr.bf16.mxu0 %v2231
        %2405 = vmatmul.mubr.bf16.gmra.mrb[0].mxu0 %v2230
        %v2406 = vpop.f32.mrb[0].mxu0
        %v2407 = vadd.f32 0.0, %v2406
        %v2408 = vpop.f32.mrb[0].mxu0
        %v2409 = vpop.f32.mrb[0].mxu0
        %v2410 = vadd.f32 0.0, %v2409
        %v2411 = vpop.f32.mrb[0].mxu0
        %2412 = vmatprep.mubr.bf16.mxu0 %v2233
        %2413 = vmatmul.mubr.bf16.gmra.mrb[0].mxu0 %v2232
        %v2414 = vpop.f32.mrb[0].mxu0
        %v2415 = vadd.f32 0.0, %v2414
        %v2416 = vpop.f32.mrb[0].mxu0
        %v2417 = vpop.f32.mrb[0].mxu0
        %v2418 = vadd.f32 0.0, %v2417
        %v2419 = vpop.f32.mrb[0].mxu0
        %2420 = vmatprep.mubr.bf16.mxu0 %v2235
        %2421 = vmatmul.mubr.bf16.gmra.mrb[0].mxu0 %v2234
        %v2422 = vpop.f32.mrb[0].mxu0
        %v2423 = vadd.f32 0.0, %v2422
        %v2424 = vpop.f32.mrb[0].mxu0
        %v2425 = vpop.f32.mrb[0].mxu0
        %v2426 = vadd.f32 0.0, %v2425
        %v2427 = vpop.f32.mrb[0].mxu0
        %2428 = vdwg.mxu0
        %v2429 = vadd.f32 %v1963, %v2367
        %v2430 = vadd.f32 %v1964, %v2370
        %v2431 = vadd.f32 %v1965, %v2375
        %v2432 = vadd.f32 %v1966, %v2378
        %v2433 = vadd.f32 %v1967, %v2383
        %v2434 = vadd.f32 %v1968, %v2386
        %v2435 = vadd.f32 %v1969, %v2391
        %v2436 = vadd.f32 %v1970, %v2394
        %v2437 = vadd.f32 %v1971, %v2399
        %v2438 = vadd.f32 %v1972, %v2402
        %v2439 = vadd.f32 %v1973, %v2407
        %v2440 = vadd.f32 %v1974, %v2410
        %v2441 = vadd.f32 %v1975, %v2415
        %v2442 = vadd.f32 %v1976, %v2418
        %v2443 = vadd.f32 %v1977, %v2423
        %v2444 = vadd.f32 %v1978, %v2426
        %v2445 = vlaneseq
        %v2446 = vshrl.u32 %v2445, 7
        %v2447 = vsub.s32 3, %v2446
        %v2448 = vrot.slane %v795, %v2447
        %v2449 = vadd.f32 %v2429, %v2448
        %v2450 = vadd.f32 %v2430, %v2448
        %v2451 = vadd.f32 %v2431, %v2448
        %v2452 = vadd.f32 %v2432, %v2448
        %v2453 = vadd.f32 %v2433, %v2448
        %v2454 = vadd.f32 %v2434, %v2448
        %v2455 = vadd.f32 %v2435, %v2448
        %v2456 = vadd.f32 %v2436, %v2448
        %v2457 = vadd.f32 %v2437, %v2448
        %v2458 = vadd.f32 %v2438, %v2448
        %v2459 = vadd.f32 %v2439, %v2448
        %v2460 = vadd.f32 %v2440, %v2448
        %v2461 = vadd.f32 %v2441, %v2448
        %v2462 = vadd.f32 %v2442, %v2448
        %v2463 = vadd.f32 %v2443, %v2448
        %v2464 = vadd.f32 %v2444, %v2448
        %2465 = vadd.xlane.f32.xlu0 %v2449
        %v2466 = vpop.xlane.xlu0 %2465
        %2467 = vadd.xlane.f32.xlu0 %v2450
        %v2468 = vpop.xlane.xlu0 %2467
        %2469 = vadd.xlane.f32.xlu0 %v2451
        %v2470 = vpop.xlane.xlu0 %2469
        %2471 = vadd.xlane.f32.xlu0 %v2452
        %v2472 = vpop.xlane.xlu0 %2471
        %2473 = vadd.xlane.f32.xlu0 %v2453
        %v2474 = vpop.xlane.xlu0 %2473
        %2475 = vadd.xlane.f32.xlu0 %v2454
        %v2476 = vpop.xlane.xlu0 %2475
        %2477 = vadd.xlane.f32.xlu0 %v2455
        %v2478 = vpop.xlane.xlu0 %2477
        %2479 = vadd.xlane.f32.xlu0 %v2456
        %v2480 = vpop.xlane.xlu0 %2479
        %2481 = vadd.xlane.f32.xlu0 %v2457
        %v2482 = vpop.xlane.xlu0 %2481
        %2483 = vadd.xlane.f32.xlu0 %v2458
        %v2484 = vpop.xlane.xlu0 %2483
        %2485 = vadd.xlane.f32.xlu0 %v2459
        %v2486 = vpop.xlane.xlu0 %2485
        %2487 = vadd.xlane.f32.xlu0 %v2460
        %v2488 = vpop.xlane.xlu0 %2487
        %2489 = vadd.xlane.f32.xlu0 %v2461
        %v2490 = vpop.xlane.xlu0 %2489
        %2491 = vadd.xlane.f32.xlu0 %v2462
        %v2492 = vpop.xlane.xlu0 %2491
        %2493 = vadd.xlane.f32.xlu0 %v2463
        %v2494 = vpop.xlane.xlu0 %2493
        %2495 = vadd.xlane.f32.xlu0 %v2464
        %v2496 = vpop.xlane.xlu0 %2495
        %v2497 = vmul.f32 %v2466, %v1794
        %v2498 = vmul.f32 %v2468, %v1794
        %v2499 = vmul.f32 %v2470, %v1794
        %v2500 = vmul.f32 %v2472, %v1794
        %v2501 = vmul.f32 %v2474, %v1794
        %v2502 = vmul.f32 %v2476, %v1794
        %v2503 = vmul.f32 %v2478, %v1794
        %v2504 = vmul.f32 %v2480, %v1794
        %v2505 = vmul.f32 %v2482, %v1794
        %v2506 = vmul.f32 %v2484, %v1794
        %v2507 = vmul.f32 %v2486, %v1794
        %v2508 = vmul.f32 %v2488, %v1794
        %v2509 = vmul.f32 %v2490, %v1794
        %v2510 = vmul.f32 %v2492, %v1794
        %v2511 = vmul.f32 %v2494, %v1794
        %v2512 = vmul.f32 %v2496, %v1794
        %v2513 = vsub.f32 %v2449, %v2497
        %v2514 = vsub.f32 %v2450, %v2498
        %v2515 = vsub.f32 %v2451, %v2499
        %v2516 = vsub.f32 %v2452, %v2500
        %v2517 = vsub.f32 %v2453, %v2501
        %v2518 = vsub.f32 %v2454, %v2502
        %v2519 = vsub.f32 %v2455, %v2503
        %v2520 = vsub.f32 %v2456, %v2504
        %v2521 = vsub.f32 %v2457, %v2505
        %v2522 = vsub.f32 %v2458, %v2506
        %v2523 = vsub.f32 %v2459, %v2507
        %v2524 = vsub.f32 %v2460, %v2508
        %v2525 = vsub.f32 %v2461, %v2509
        %v2526 = vsub.f32 %v2462, %v2510
        %v2527 = vsub.f32 %v2463, %v2511
        %v2528 = vsub.f32 %v2464, %v2512
        %v2529 = vmul.f32 %v2513, %v2513
        %v2530 = vmul.f32 %v2514, %v2514
        %v2531 = vmul.f32 %v2515, %v2515
        %v2532 = vmul.f32 %v2516, %v2516
        %v2533 = vmul.f32 %v2517, %v2517
        %v2534 = vmul.f32 %v2518, %v2518
        %v2535 = vmul.f32 %v2519, %v2519
        %v2536 = vmul.f32 %v2520, %v2520
        %v2537 = vmul.f32 %v2521, %v2521
        %v2538 = vmul.f32 %v2522, %v2522
        %v2539 = vmul.f32 %v2523, %v2523
        %v2540 = vmul.f32 %v2524, %v2524
        %v2541 = vmul.f32 %v2525, %v2525
        %v2542 = vmul.f32 %v2526, %v2526
        %v2543 = vmul.f32 %v2527, %v2527
        %v2544 = vmul.f32 %v2528, %v2528
        %2545 = vadd.xlane.f32.xlu0 %v2529
        %v2546 = vpop.xlane.xlu0 %2545
        %2547 = vadd.xlane.f32.xlu0 %v2530
        %v2548 = vpop.xlane.xlu0 %2547
        %2549 = vadd.xlane.f32.xlu0 %v2531
        %v2550 = vpop.xlane.xlu0 %2549
        %2551 = vadd.xlane.f32.xlu0 %v2532
        %v2552 = vpop.xlane.xlu0 %2551
        %2553 = vadd.xlane.f32.xlu0 %v2533
        %v2554 = vpop.xlane.xlu0 %2553
        %2555 = vadd.xlane.f32.xlu0 %v2534
        %v2556 = vpop.xlane.xlu0 %2555
        %2557 = vadd.xlane.f32.xlu0 %v2535
        %v2558 = vpop.xlane.xlu0 %2557
        %2559 = vadd.xlane.f32.xlu0 %v2536
        %v2560 = vpop.xlane.xlu0 %2559
        %2561 = vadd.xlane.f32.xlu0 %v2537
        %v2562 = vpop.xlane.xlu0 %2561
        %2563 = vadd.xlane.f32.xlu0 %v2538
        %v2564 = vpop.xlane.xlu0 %2563
        %2565 = vadd.xlane.f32.xlu0 %v2539
        %v2566 = vpop.xlane.xlu0 %2565
        %2567 = vadd.xlane.f32.xlu0 %v2540
        %v2568 = vpop.xlane.xlu0 %2567
        %2569 = vadd.xlane.f32.xlu0 %v2541
        %v2570 = vpop.xlane.xlu0 %2569
        %2571 = vadd.xlane.f32.xlu0 %v2542
        %v2572 = vpop.xlane.xlu0 %2571
        %2573 = vadd.xlane.f32.xlu0 %v2543
        %v2574 = vpop.xlane.xlu0 %2573
        %2575 = vadd.xlane.f32.xlu0 %v2544
        %v2576 = vpop.xlane.xlu0 %2575
        %v2577 = vmul.f32 %v2546, %v1794
        %v2578 = vmul.f32 %v2548, %v1794
        %v2579 = vmul.f32 %v2550, %v1794
        %v2580 = vmul.f32 %v2552, %v1794
        %v2581 = vmul.f32 %v2554, %v1794
        %v2582 = vmul.f32 %v2556, %v1794
        %v2583 = vmul.f32 %v2558, %v1794
        %v2584 = vmul.f32 %v2560, %v1794
        %v2585 = vmul.f32 %v2562, %v1794
        %v2586 = vmul.f32 %v2564, %v1794
        %v2587 = vmul.f32 %v2566, %v1794
        %v2588 = vmul.f32 %v2568, %v1794
        %v2589 = vmul.f32 %v2570, %v1794
        %v2590 = vmul.f32 %v2572, %v1794
        %v2591 = vmul.f32 %v2574, %v1794
        %v2592 = vmul.f32 %v2576, %v1794
        %v2593 = vadd.f32 %v2577, 1e-05
        %v2594 = vadd.f32 %v2578, 1e-05
        %v2595 = vadd.f32 %v2579, 1e-05
        %v2596 = vadd.f32 %v2580, 1e-05
        %v2597 = vadd.f32 %v2581, 1e-05
        %v2598 = vadd.f32 %v2582, 1e-05
        %v2599 = vadd.f32 %v2583, 1e-05
        %v2600 = vadd.f32 %v2584, 1e-05
        %v2601 = vadd.f32 %v2585, 1e-05
        %v2602 = vadd.f32 %v2586, 1e-05
        %v2603 = vadd.f32 %v2587, 1e-05
        %v2604 = vadd.f32 %v2588, 1e-05
        %v2605 = vadd.f32 %v2589, 1e-05
        %v2606 = vadd.f32 %v2590, 1e-05
        %v2607 = vadd.f32 %v2591, 1e-05
        %v2608 = vadd.f32 %v2592, 1e-05
        %v2609 = vrsqrt.pop %v2593
        %v2610 = vrsqrt.pop %v2594
        %v2611 = vrsqrt.pop %v2595
        %v2612 = vrsqrt.pop %v2596
        %v2613 = vrsqrt.pop %v2597
        %v2614 = vrsqrt.pop %v2598
        %v2615 = vrsqrt.pop %v2599
        %v2616 = vrsqrt.pop %v2600
        %v2617 = vrsqrt.pop %v2601
        %v2618 = vrsqrt.pop %v2602
        %v2619 = vrsqrt.pop %v2603
        %v2620 = vrsqrt.pop %v2604
        %v2621 = vrsqrt.pop %v2605
        %v2622 = vrsqrt.pop %v2606
        %v2623 = vrsqrt.pop %v2607
        %v2624 = vrsqrt.pop %v2608
        %v2625 = vmul.f32 %v2513, %v2609
        %v2626 = vmul.f32 %v2514, %v2610
        %v2627 = vmul.f32 %v2515, %v2611
        %v2628 = vmul.f32 %v2516, %v2612
        %v2629 = vmul.f32 %v2517, %v2613
        %v2630 = vmul.f32 %v2518, %v2614
        %v2631 = vmul.f32 %v2519, %v2615
        %v2632 = vmul.f32 %v2520, %v2616
        %v2633 = vmul.f32 %v2521, %v2617
        %v2634 = vmul.f32 %v2522, %v2618
        %v2635 = vmul.f32 %v2523, %v2619
        %v2636 = vmul.f32 %v2524, %v2620
        %v2637 = vmul.f32 %v2525, %v2621
        %v2638 = vmul.f32 %v2526, %v2622
        %v2639 = vmul.f32 %v2527, %v2623
        %v2640 = vmul.f32 %v2528, %v2624
        %v2641 = vlaneseq
        %v2642 = vshrl.u32 %v2641, 7
        %v2643 = vsub.s32 6, %v2642
        %v2644 = vrot.slane %v795, %v2643
        %v2645 = vmul.f32 %v2625, %v2644
        %v2646 = vmul.f32 %v2626, %v2644
        %v2647 = vmul.f32 %v2627, %v2644
        %v2648 = vmul.f32 %v2628, %v2644
        %v2649 = vmul.f32 %v2629, %v2644
        %v2650 = vmul.f32 %v2630, %v2644
        %v2651 = vmul.f32 %v2631, %v2644
        %v2652 = vmul.f32 %v2632, %v2644
        %v2653 = vmul.f32 %v2633, %v2644
        %v2654 = vmul.f32 %v2634, %v2644
        %v2655 = vmul.f32 %v2635, %v2644
        %v2656 = vmul.f32 %v2636, %v2644
        %v2657 = vmul.f32 %v2637, %v2644
        %v2658 = vmul.f32 %v2638, %v2644
        %v2659 = vmul.f32 %v2639, %v2644
        %v2660 = vmul.f32 %v2640, %v2644
        %v2661 = vlaneseq
        %v2662 = vshrl.u32 %v2661, 7
        %v2663 = vsub.s32 7, %v2662
        %v2664 = vrot.slane %v795, %v2663
        %v2665 = vadd.f32 %v2645, %v2664
        %v2666 = vadd.f32 %v2646, %v2664
        %v2667 = vadd.f32 %v2647, %v2664
        %v2668 = vadd.f32 %v2648, %v2664
        %v2669 = vadd.f32 %v2649, %v2664
        %v2670 = vadd.f32 %v2650, %v2664
        %v2671 = vadd.f32 %v2651, %v2664
        %v2672 = vadd.f32 %v2652, %v2664
        %v2673 = vadd.f32 %v2653, %v2664
        %v2674 = vadd.f32 %v2654, %v2664
        %v2675 = vadd.f32 %v2655, %v2664
        %v2676 = vadd.f32 %v2656, %v2664
        %v2677 = vadd.f32 %v2657, %v2664
        %v2678 = vadd.f32 %v2658, %v2664
        %v2679 = vadd.f32 %v2659, %v2664
        %v2680 = vadd.f32 %v2660, %v2664
        %v2681 = vpack.c.bf16 %v2666, %v2665
        %v2682 = vpack.c.bf16 %v2668, %v2667
        %v2683 = vpack.c.bf16 %v2670, %v2669
        %v2684 = vpack.c.bf16 %v2672, %v2671
        %v2685 = vpack.c.bf16 %v2674, %v2673
        %v2686 = vpack.c.bf16 %v2676, %v2675
        %v2687 = vpack.c.bf16 %v2678, %v2677
        %v2688 = vpack.c.bf16 %v2680, %v2679
        %v2689 = vlaneseq
        %v2690 = vshrl.u32 %v2689, 7
        %v2691 = vsub.s32 0, %v2690
        %v2692 = vrot.slane %v797, %v2691
        %v2709 = vunpack.c.l.b16 %v650
        %v2710 = vunpack.c.l.b16 %v651
        %v2711 = vunpack.c.l.b16 %v652
        %v2712 = vunpack.c.l.b16 %v653
        %v2713 = vunpack.c.l.b16 %v654
        %v2714 = vunpack.c.l.b16 %v655
        %v2715 = vunpack.c.l.b16 %v656
        %v2716 = vunpack.c.l.b16 %v657
        %v2717 = vunpack.c.l.b16 %v658
        %v2718 = vunpack.c.l.b16 %v659
        %v2719 = vunpack.c.l.b16 %v660
        %v2720 = vunpack.c.l.b16 %v661
        %v2721 = vunpack.c.l.b16 %v662
        %v2722 = vunpack.c.l.b16 %v663
        %v2723 = vunpack.c.l.b16 %v664
        %v2724 = vunpack.c.l.b16 %v665
        %v2725 = vpack.c.b16 %v2710, %v2709
        %v2726 = vpack.c.b16 %v2712, %v2711
        %v2727 = vpack.c.b16 %v2714, %v2713
        %v2728 = vpack.c.b16 %v2716, %v2715
        %v2729 = vpack.c.b16 %v2718, %v2717
        %v2730 = vpack.c.b16 %v2720, %v2719
        %v2731 = vpack.c.b16 %v2722, %v2721
        %v2732 = vpack.c.b16 %v2724, %v2723
        %2741 = vmatprep.subr.bf16.mxu0 0
        %2742 = vmatpush1.bf16.msra.mxu0 %v2725
        %2743 = vmatprep.subr.bf16.mxu0 0
        %2744 = vmatpush1.bf16.msra.mxu0 %v2726
        %2745 = vmatprep.subr.bf16.mxu0 0
        %2746 = vmatpush1.bf16.msra.mxu0 %v2727
        %2747 = vmatprep.subr.bf16.mxu0 0
        %2748 = vmatpush1.bf16.msra.mxu0 %v2728
        %2749 = vmatprep.subr.bf16.mxu0 0
        %2750 = vmatpush1.bf16.msra.mxu0 %v2729
        %2751 = vmatprep.subr.bf16.mxu0 0
        %2752 = vmatpush1.bf16.msra.mxu0 %v2730
        %2753 = vmatprep.subr.bf16.mxu0 0
        %2754 = vmatpush1.bf16.msra.mxu0 %v2731
        %2755 = vmatprep.subr.bf16.mxu0 0
        %2756 = vmatpush1.bf16.msra.mxu0 %v2732
        %2757 = vmatprep.subr.bf16.mxu0 0
        %2758 = vmatpush1.bf16.msra.mxu0 0
        %2759 = vmatprep.subr.bf16.mxu0 0
        %2760 = vmatpush1.bf16.msra.mxu0 0
        %2761 = vmatprep.subr.bf16.mxu0 0
        %2762 = vmatpush1.bf16.msra.mxu0 0
        %2763 = vmatprep.subr.bf16.mxu0 0
        %2764 = vmatpush1.bf16.msra.mxu0 0
        %2765 = vmatprep.subr.bf16.mxu0 0
        %2766 = vmatpush1.bf16.msra.mxu0 0
        %2767 = vmatprep.subr.bf16.mxu0 0
        %2768 = vmatpush1.bf16.msra.mxu0 0
        %2769 = vmatprep.subr.bf16.mxu0 0
        %2770 = vmatpush1.bf16.msra.mxu0 0
        %2771 = vmatprep.subr.bf16.mxu0 0
        %2772 = vmatpush1.bf16.msra.mxu0 0
        %2773 = vmatprep.mubr.bf16.mxu0 0
        %2774 = vmatmul.mubr.bf16.gmra.mrb[0].mxu0 %v2681
        %v2775 = vpop.f32.mrb[0].mxu0
        %v2776 = vadd.f32 %v2692, %v2775
        %v2777 = vpop.f32.mrb[0].mxu0
        %v2778 = vpop.f32.mrb[0].mxu0
        %v2779 = vadd.f32 %v2692, %v2778
        %v2780 = vpop.f32.mrb[0].mxu0
        %2781 = vmatprep.mubr.bf16.mxu0 0
        %2782 = vmatmul.mubr.bf16.gmra.mrb[0].mxu0 %v2682
        %v2783 = vpop.f32.mrb[0].mxu0
        %v2784 = vadd.f32 %v2692, %v2783
        %v2785 = vpop.f32.mrb[0].mxu0
        %v2786 = vpop.f32.mrb[0].mxu0
        %v2787 = vadd.f32 %v2692, %v2786
        %v2788 = vpop.f32.mrb[0].mxu0
        %2789 = vmatprep.mubr.bf16.mxu0 0
        %2790 = vmatmul.mubr.bf16.gmra.mrb[0].mxu0 %v2683
        %v2791 = vpop.f32.mrb[0].mxu0
        %v2792 = vadd.f32 %v2692, %v2791
        %v2793 = vpop.f32.mrb[0].mxu0
        %v2794 = vpop.f32.mrb[0].mxu0
        %v2795 = vadd.f32 %v2692, %v2794
        %v2796 = vpop.f32.mrb[0].mxu0
        %2797 = vmatprep.mubr.bf16.mxu0 0
        %2798 = vmatmul.mubr.bf16.gmra.mrb[0].mxu0 %v2684
        %v2799 = vpop.f32.mrb[0].mxu0
        %v2800 = vadd.f32 %v2692, %v2799
        %v2801 = vpop.f32.mrb[0].mxu0
        %v2802 = vpop.f32.mrb[0].mxu0
        %v2803 = vadd.f32 %v2692, %v2802
        %v2804 = vpop.f32.mrb[0].mxu0
        %2805 = vmatprep.mubr.bf16.mxu0 0
        %2806 = vmatmul.mubr.bf16.gmra.mrb[0].mxu0 %v2685
        %v2807 = vpop.f32.mrb[0].mxu0
        %v2808 = vadd.f32 %v2692, %v2807
        %v2809 = vpop.f32.mrb[0].mxu0
        %v2810 = vpop.f32.mrb[0].mxu0
        %v2811 = vadd.f32 %v2692, %v2810
        %v2812 = vpop.f32.mrb[0].mxu0
        %2813 = vmatprep.mubr.bf16.mxu0 0
        %2814 = vmatmul.mubr.bf16.gmra.mrb[0].mxu0 %v2686
        %v2815 = vpop.f32.mrb[0].mxu0
        %v2816 = vadd.f32 %v2692, %v2815
        %v2817 = vpop.f32.mrb[0].mxu0
        %v2818 = vpop.f32.mrb[0].mxu0
        %v2819 = vadd.f32 %v2692, %v2818
        %v2820 = vpop.f32.mrb[0].mxu0
        %2821 = vmatprep.mubr.bf16.mxu0 0
        %2822 = vmatmul.mubr.bf16.gmra.mrb[0].mxu0 %v2687
        %v2823 = vpop.f32.mrb[0].mxu0
        %v2824 = vadd.f32 %v2692, %v2823
        %v2825 = vpop.f32.mrb[0].mxu0
        %v2826 = vpop.f32.mrb[0].mxu0
        %v2827 = vadd.f32 %v2692, %v2826
        %v2828 = vpop.f32.mrb[0].mxu0
        %2829 = vmatprep.mubr.bf16.mxu0 0
        %2830 = vmatmul.mubr.bf16.gmra.mrb[0].mxu0 %v2688
        %v2831 = vpop.f32.mrb[0].mxu0
        %v2832 = vadd.f32 %v2692, %v2831
        %v2833 = vpop.f32.mrb[0].mxu0
        %v2834 = vpop.f32.mrb[0].mxu0
        %v2835 = vadd.f32 %v2692, %v2834
        %v2836 = vpop.f32.mrb[0].mxu0
        %2837 = vdwg.mxu0
        %v2838 = vpack.c.bf16 %v2779, %v2776
        %v2839 = vpack.c.bf16 %v2787, %v2784
        %v2840 = vpack.c.bf16 %v2795, %v2792
        %v2841 = vpack.c.bf16 %v2803, %v2800
        %v2842 = vpack.c.bf16 %v2811, %v2808
        %v2843 = vpack.c.bf16 %v2819, %v2816
        %v2844 = vpack.c.bf16 %v2827, %v2824
        %v2845 = vpack.c.bf16 %v2835, %v2832
        %v2862 = vunpack.c.l.b16 %v601
        %v2863 = vunpack.c.l.b16 %v602
        %v2864 = vunpack.c.l.b16 %v603
        %v2865 = vunpack.c.l.b16 %v604
        %v2866 = vunpack.c.l.b16 %v605
        %v2867 = vunpack.c.l.b16 %v606
        %v2868 = vunpack.c.l.b16 %v607
        %v2869 = vunpack.c.l.b16 %v608
        %v2870 = vunpack.c.l.b16 %v609
        %v2871 = vunpack.c.l.b16 %v610
        %v2872 = vunpack.c.l.b16 %v611
        %v2873 = vunpack.c.l.b16 %v612
        %v2874 = vunpack.c.l.b16 %v613
        %v2875 = vunpack.c.l.b16 %v614
        %v2876 = vunpack.c.l.b16 %v615
        %v2877 = vunpack.c.l.b16 %v616
        %v2878 = vpack.c.b16 %v2863, %v2862
        %v2879 = vpack.c.b16 %v2865, %v2864
        %v2880 = vpack.c.b16 %v2867, %v2866
        %v2881 = vpack.c.b16 %v2869, %v2868
        %v2882 = vpack.c.b16 %v2871, %v2870
        %v2883 = vpack.c.b16 %v2873, %v2872
        %v2884 = vpack.c.b16 %v2875, %v2874
        %v2885 = vpack.c.b16 %v2877, %v2876
        %2894 = vmatprep.subr.bf16.mxu0 0
        %2895 = vmatpush1.bf16.xpose.msra.mxu0 %v2878
        %2896 = vmatprep.subr.bf16.mxu0 0
        %2897 = vmatpush1.bf16.xpose.msra.mxu0 %v2879
        %2898 = vmatprep.subr.bf16.mxu0 0
        %2899 = vmatpush1.bf16.xpose.msra.mxu0 %v2880
        %2900 = vmatprep.subr.bf16.mxu0 0
        %2901 = vmatpush1.bf16.xpose.msra.mxu0 %v2881
        %2902 = vmatprep.subr.bf16.mxu0 0
        %2903 = vmatpush1.bf16.xpose.msra.mxu0 %v2882
        %2904 = vmatprep.subr.bf16.mxu0 0
        %2905 = vmatpush1.bf16.xpose.msra.mxu0 %v2883
        %2906 = vmatprep.subr.bf16.mxu0 0
        %2907 = vmatpush1.bf16.xpose.msra.mxu0 %v2884
        %2908 = vmatprep.subr.bf16.mxu0 0
        %2909 = vmatpush1.bf16.xpose.msra.mxu0 %v2885
        %2910 = vmatprep.subr.bf16.mxu0 0
        %2911 = vmatpush1.bf16.xpose.msra.mxu0 0
        %2912 = vmatprep.subr.bf16.mxu0 0
        %2913 = vmatpush1.bf16.xpose.msra.mxu0 0
        %2914 = vmatprep.subr.bf16.mxu0 0
        %2915 = vmatpush1.bf16.xpose.msra.mxu0 0
        %2916 = vmatprep.subr.bf16.mxu0 0
        %2917 = vmatpush1.bf16.xpose.msra.mxu0 0
        %2918 = vmatprep.subr.bf16.mxu0 0
        %2919 = vmatpush1.bf16.xpose.msra.mxu0 0
        %2920 = vmatprep.subr.bf16.mxu0 0
        %2921 = vmatpush1.bf16.xpose.msra.mxu0 0
        %2922 = vmatprep.subr.bf16.mxu0 0
        %2923 = vmatpush1.bf16.xpose.msra.mxu0 0
        %2924 = vmatprep.subr.bf16.mxu0 0
        %2925 = vmatpush1.bf16.xpose.msra.mxu0 0
        %2926 = vmatprep.mubr.bf16.mxu0 0
        %2927 = vmatmul.mubr.bf16.gmra.mrb[0].mxu0 %v2838
        %v2928 = vpop.f32.mrb[0].mxu0
        %v2929 = vadd.f32 0.0, %v2928
        %v2930 = vpop.f32.mrb[0].mxu0
        %v2931 = vpop.f32.mrb[0].mxu0
        %v2932 = vadd.f32 0.0, %v2931
        %v2933 = vpop.f32.mrb[0].mxu0
        %2934 = vmatprep.mubr.bf16.mxu0 0
        %2935 = vmatmul.mubr.bf16.gmra.mrb[0].mxu0 %v2839
        %v2936 = vpop.f32.mrb[0].mxu0
        %v2937 = vadd.f32 0.0, %v2936
        %v2938 = vpop.f32.mrb[0].mxu0
        %v2939 = vpop.f32.mrb[0].mxu0
        %v2940 = vadd.f32 0.0, %v2939
        %v2941 = vpop.f32.mrb[0].mxu0
        %2942 = vmatprep.mubr.bf16.mxu0 0
        %2943 = vmatmul.mubr.bf16.gmra.mrb[0].mxu0 %v2840
        %v2944 = vpop.f32.mrb[0].mxu0
        %v2945 = vadd.f32 0.0, %v2944
        %v2946 = vpop.f32.mrb[0].mxu0
        %v2947 = vpop.f32.mrb[0].mxu0
        %v2948 = vadd.f32 0.0, %v2947
        %v2949 = vpop.f32.mrb[0].mxu0
        %2950 = vmatprep.mubr.bf16.mxu0 0
        %2951 = vmatmul.mubr.bf16.gmra.mrb[0].mxu0 %v2841
        %v2952 = vpop.f32.mrb[0].mxu0
        %v2953 = vadd.f32 0.0, %v2952
        %v2954 = vpop.f32.mrb[0].mxu0
        %v2955 = vpop.f32.mrb[0].mxu0
        %v2956 = vadd.f32 0.0, %v2955
        %v2957 = vpop.f32.mrb[0].mxu0
        %2958 = vmatprep.mubr.bf16.mxu0 0
        %2959 = vmatmul.mubr.bf16.gmra.mrb[0].mxu0 %v2842
        %v2960 = vpop.f32.mrb[0].mxu0
        %v2961 = vadd.f32 0.0, %v2960
        %v2962 = vpop.f32.mrb[0].mxu0
        %v2963 = vpop.f32.mrb[0].mxu0
        %v2964 = vadd.f32 0.0, %v2963
        %v2965 = vpop.f32.mrb[0].mxu0
        %2966 = vmatprep.mubr.bf16.mxu0 0
        %2967 = vmatmul.mubr.bf16.gmra.mrb[0].mxu0 %v2843
        %v2968 = vpop.f32.mrb[0].mxu0
        %v2969 = vadd.f32 0.0, %v2968
        %v2970 = vpop.f32.mrb[0].mxu0
        %v2971 = vpop.f32.mrb[0].mxu0
        %v2972 = vadd.f32 0.0, %v2971
        %v2973 = vpop.f32.mrb[0].mxu0
        %2974 = vmatprep.mubr.bf16.mxu0 0
        %2975 = vmatmul.mubr.bf16.gmra.mrb[0].mxu0 %v2844
        %v2976 = vpop.f32.mrb[0].mxu0
        %v2977 = vadd.f32 0.0, %v2976
        %v2978 = vpop.f32.mrb[0].mxu0
        %v2979 = vpop.f32.mrb[0].mxu0
        %v2980 = vadd.f32 0.0, %v2979
        %v2981 = vpop.f32.mrb[0].mxu0
        %2982 = vmatprep.mubr.bf16.mxu0 0
        %2983 = vmatmul.mubr.bf16.gmra.mrb[0].mxu0 %v2845
        %v2984 = vpop.f32.mrb[0].mxu0
        %v2985 = vadd.f32 0.0, %v2984
        %v2986 = vpop.f32.mrb[0].mxu0
        %v2987 = vpop.f32.mrb[0].mxu0
        %v2988 = vadd.f32 0.0, %v2987
        %v2989 = vpop.f32.mrb[0].mxu0
        %2990 = vdwg.mxu0
        %2991 = vmax.xlane.f32.xlu0 %v2929
        %v2992 = vpop.xlane.xlu0 %2991
        %2993 = vmax.xlane.f32.xlu0 %v2932
        %v2994 = vpop.xlane.xlu0 %2993
        %2995 = vmax.xlane.f32.xlu0 %v2937
        %v2996 = vpop.xlane.xlu0 %2995
        %2997 = vmax.xlane.f32.xlu0 %v2940
        %v2998 = vpop.xlane.xlu0 %2997
        %2999 = vmax.xlane.f32.xlu0 %v2945
        %v3000 = vpop.xlane.xlu0 %2999
        %3001 = vmax.xlane.f32.xlu0 %v2948
        %v3002 = vpop.xlane.xlu0 %3001
        %3003 = vmax.xlane.f32.xlu0 %v2953
        %v3004 = vpop.xlane.xlu0 %3003
        %3005 = vmax.xlane.f32.xlu0 %v2956
        %v3006 = vpop.xlane.xlu0 %3005
        %3007 = vmax.xlane.f32.xlu0 %v2961
        %v3008 = vpop.xlane.xlu0 %3007
        %3009 = vmax.xlane.f32.xlu0 %v2964
        %v3010 = vpop.xlane.xlu0 %3009
        %3011 = vmax.xlane.f32.xlu0 %v2969
        %v3012 = vpop.xlane.xlu0 %3011
        %3013 = vmax.xlane.f32.xlu0 %v2972
        %v3014 = vpop.xlane.xlu0 %3013
        %3015 = vmax.xlane.f32.xlu0 %v2977
        %v3016 = vpop.xlane.xlu0 %3015
        %3017 = vmax.xlane.f32.xlu0 %v2980
        %v3018 = vpop.xlane.xlu0 %3017
        %3019 = vmax.xlane.f32.xlu0 %v2985
        %v3020 = vpop.xlane.xlu0 %3019
        %3021 = vmax.xlane.f32.xlu0 %v2988
        %v3022 = vpop.xlane.xlu0 %3021
        %v3023 = vsub.f32 %v2929, %v2992
        %v3024 = vsub.f32 %v2932, %v2994
        %v3025 = vsub.f32 %v2937, %v2996
        %v3026 = vsub.f32 %v2940, %v2998
        %v3027 = vsub.f32 %v2945, %v3000
        %v3028 = vsub.f32 %v2948, %v3002
        %v3029 = vsub.f32 %v2953, %v3004
        %v3030 = vsub.f32 %v2956, %v3006
        %v3031 = vsub.f32 %v2961, %v3008
        %v3032 = vsub.f32 %v2964, %v3010
        %v3033 = vsub.f32 %v2969, %v3012
        %v3034 = vsub.f32 %v2972, %v3014
        %v3035 = vsub.f32 %v2977, %v3016
        %v3036 = vsub.f32 %v2980, %v3018
        %v3037 = vsub.f32 %v2985, %v3020
        %v3038 = vsub.f32 %v2988, %v3022
        %v3039 = vmul.f32 %v3023, 1.442695
        %v3040 = vpow.pop %v3039
        %v3041 = vmul.f32 %v3024, 1.442695
        %v3042 = vpow.pop %v3041
        %v3043 = vmul.f32 %v3025, 1.442695
        %v3044 = vpow.pop %v3043
        %v3045 = vmul.f32 %v3026, 1.442695
        %v3046 = vpow.pop %v3045
        %v3047 = vmul.f32 %v3027, 1.442695
        %v3048 = vpow.pop %v3047
        %v3049 = vmul.f32 %v3028, 1.442695
        %v3050 = vpow.pop %v3049
        %v3051 = vmul.f32 %v3029, 1.442695
        %v3052 = vpow.pop %v3051
        %v3053 = vmul.f32 %v3030, 1.442695
        %v3054 = vpow.pop %v3053
        %v3055 = vmul.f32 %v3031, 1.442695
        %v3056 = vpow.pop %v3055
        %v3057 = vmul.f32 %v3032, 1.442695
        %v3058 = vpow.pop %v3057
        %v3059 = vmul.f32 %v3033, 1.442695
        %v3060 = vpow.pop %v3059
        %v3061 = vmul.f32 %v3034, 1.442695
        %v3062 = vpow.pop %v3061
        %v3063 = vmul.f32 %v3035, 1.442695
        %v3064 = vpow.pop %v3063
        %v3065 = vmul.f32 %v3036, 1.442695
        %v3066 = vpow.pop %v3065
        %v3067 = vmul.f32 %v3037, 1.442695
        %v3068 = vpow.pop %v3067
        %v3069 = vmul.f32 %v3038, 1.442695
        %v3070 = vpow.pop %v3069
        %3071 = vadd.xlane.f32.xlu0 %v3040
        %v3072 = vpop.xlane.xlu0 %3071
        %3073 = vadd.xlane.f32.xlu0 %v3042
        %v3074 = vpop.xlane.xlu0 %3073
        %3075 = vadd.xlane.f32.xlu0 %v3044
        %v3076 = vpop.xlane.xlu0 %3075
        %3077 = vadd.xlane.f32.xlu0 %v3046
        %v3078 = vpop.xlane.xlu0 %3077
        %3079 = vadd.xlane.f32.xlu0 %v3048
        %v3080 = vpop.xlane.xlu0 %3079
        %3081 = vadd.xlane.f32.xlu0 %v3050
        %v3082 = vpop.xlane.xlu0 %3081
        %3083 = vadd.xlane.f32.xlu0 %v3052
        %v3084 = vpop.xlane.xlu0 %3083
        %3085 = vadd.xlane.f32.xlu0 %v3054
        %v3086 = vpop.xlane.xlu0 %3085
        %3087 = vadd.xlane.f32.xlu0 %v3056
        %v3088 = vpop.xlane.xlu0 %3087
        %3089 = vadd.xlane.f32.xlu0 %v3058
        %v3090 = vpop.xlane.xlu0 %3089
        %3091 = vadd.xlane.f32.xlu0 %v3060
        %v3092 = vpop.xlane.xlu0 %3091
        %3093 = vadd.xlane.f32.xlu0 %v3062
        %v3094 = vpop.xlane.xlu0 %3093
        %3095 = vadd.xlane.f32.xlu0 %v3064
        %v3096 = vpop.xlane.xlu0 %3095
        %3097 = vadd.xlane.f32.xlu0 %v3066
        %v3098 = vpop.xlane.xlu0 %3097
        %3099 = vadd.xlane.f32.xlu0 %v3068
        %v3100 = vpop.xlane.xlu0 %3099
        %3101 = vadd.xlane.f32.xlu0 %v3070
        %v3102 = vpop.xlane.xlu0 %3101
        %v3103 = vrcp.pop %v3072
        %v3104 = vmul.f32 %v3040, %v3103
        %v3105 = vrcp.pop %v3074
        %v3106 = vmul.f32 %v3042, %v3105
        %v3107 = vrcp.pop %v3076
        %v3108 = vmul.f32 %v3044, %v3107
        %v3109 = vrcp.pop %v3078
        %v3110 = vmul.f32 %v3046, %v3109
        %v3111 = vrcp.pop %v3080
        %v3112 = vmul.f32 %v3048, %v3111
        %v3113 = vrcp.pop %v3082
        %v3114 = vmul.f32 %v3050, %v3113
        %v3115 = vrcp.pop %v3084
        %v3116 = vmul.f32 %v3052, %v3115
        %v3117 = vrcp.pop %v3086
        %v3118 = vmul.f32 %v3054, %v3117
        %v3119 = vrcp.pop %v3088
        %v3120 = vmul.f32 %v3056, %v3119
        %v3121 = vrcp.pop %v3090
        %v3122 = vmul.f32 %v3058, %v3121
        %v3123 = vrcp.pop %v3092
        %v3124 = vmul.f32 %v3060, %v3123
        %v3125 = vrcp.pop %v3094
        %v3126 = vmul.f32 %v3062, %v3125
        %v3127 = vrcp.pop %v3096
        %v3128 = vmul.f32 %v3064, %v3127
        %v3129 = vrcp.pop %v3098
        %v3130 = vmul.f32 %v3066, %v3129
        %v3131 = vrcp.pop %v3100
        %v3132 = vmul.f32 %v3068, %v3131
        %v3133 = vrcp.pop %v3102
        %v3134 = vmul.f32 %v3070, %v3133
        %v3135 = vpack.c.bf16 %v3106, %v3104
        %v3136 = vpack.c.bf16 %v3110, %v3108
        %v3137 = vpack.c.bf16 %v3114, %v3112
        %v3138 = vpack.c.bf16 %v3118, %v3116
        %v3139 = vpack.c.bf16 %v3122, %v3120
        %v3140 = vpack.c.bf16 %v3126, %v3124
        %v3141 = vpack.c.bf16 %v3130, %v3128
        %v3142 = vpack.c.bf16 %v3134, %v3132
        %v3143 = vunpack.c.h.b16 %v601
        %v3144 = vunpack.c.h.b16 %v602
        %v3145 = vunpack.c.h.b16 %v603
        %v3146 = vunpack.c.h.b16 %v604
        %v3147 = vunpack.c.h.b16 %v605
        %v3148 = vunpack.c.h.b16 %v606
        %v3149 = vunpack.c.h.b16 %v607
        %v3150 = vunpack.c.h.b16 %v608
        %v3151 = vunpack.c.h.b16 %v609
        %v3152 = vunpack.c.h.b16 %v610
        %v3153 = vunpack.c.h.b16 %v611
        %v3154 = vunpack.c.h.b16 %v612
        %v3155 = vunpack.c.h.b16 %v613
        %v3156 = vunpack.c.h.b16 %v614
        %v3157 = vunpack.c.h.b16 %v615
        %v3158 = vunpack.c.h.b16 %v616
        %v3159 = vpack.c.b16 %v3144, %v3143
        %v3160 = vpack.c.b16 %v3146, %v3145
        %v3161 = vpack.c.b16 %v3148, %v3147
        %v3162 = vpack.c.b16 %v3150, %v3149
        %v3163 = vpack.c.b16 %v3152, %v3151
        %v3164 = vpack.c.b16 %v3154, %v3153
        %v3165 = vpack.c.b16 %v3156, %v3155
        %v3166 = vpack.c.b16 %v3158, %v3157
        %3175 = vmatprep.subr.bf16.mxu0 0
        %3176 = vmatpush1.bf16.msra.mxu0 %v3159
        %3177 = vmatprep.subr.bf16.mxu0 0
        %3178 = vmatpush1.bf16.msra.mxu0 %v3160
        %3179 = vmatprep.subr.bf16.mxu0 0
        %3180 = vmatpush1.bf16.msra.mxu0 %v3161
        %3181 = vmatprep.subr.bf16.mxu0 0
        %3182 = vmatpush1.bf16.msra.mxu0 %v3162
        %3183 = vmatprep.subr.bf16.mxu0 0
        %3184 = vmatpush1.bf16.msra.mxu0 %v3163
        %3185 = vmatprep.subr.bf16.mxu0 0
        %3186 = vmatpush1.bf16.msra.mxu0 %v3164
        %3187 = vmatprep.subr.bf16.mxu0 0
        %3188 = vmatpush1.bf16.msra.mxu0 %v3165
        %3189 = vmatprep.subr.bf16.mxu0 0
        %3190 = vmatpush1.bf16.msra.mxu0 %v3166
        %3191 = vmatprep.subr.bf16.mxu0 0
        %3192 = vmatpush1.bf16.msra.mxu0 0
        %3193 = vmatprep.subr.bf16.mxu0 0
        %3194 = vmatpush1.bf16.msra.mxu0 0
        %3195 = vmatprep.subr.bf16.mxu0 0
        %3196 = vmatpush1.bf16.msra.mxu0 0
        %3197 = vmatprep.subr.bf16.mxu0 0
        %3198 = vmatpush1.bf16.msra.mxu0 0
        %3199 = vmatprep.subr.bf16.mxu0 0
        %3200 = vmatpush1.bf16.msra.mxu0 0
        %3201 = vmatprep.subr.bf16.mxu0 0
        %3202 = vmatpush1.bf16.msra.mxu0 0
        %3203 = vmatprep.subr.bf16.mxu0 0
        %3204 = vmatpush1.bf16.msra.mxu0 0
        %3205 = vmatprep.subr.bf16.mxu0 0
        %3206 = vmatpush1.bf16.msra.mxu0 0
        %3207 = vmatprep.mubr.bf16.mxu0 0
        %3208 = vmatmul.mubr.bf16.gmra.mrb[0].mxu0 %v3135
        %v3209 = vpop.f32.mrb[0].mxu0
        %v3210 = vadd.f32 0.0, %v3209
        %v3211 = vpop.f32.mrb[0].mxu0
        %v3212 = vpop.f32.mrb[0].mxu0
        %v3213 = vadd.f32 0.0, %v3212
        %v3214 = vpop.f32.mrb[0].mxu0
        %3215 = vmatprep.mubr.bf16.mxu0 0
        %3216 = vmatmul.mubr.bf16.gmra.mrb[0].mxu0 %v3136
        %v3217 = vpop.f32.mrb[0].mxu0
        %v3218 = vadd.f32 0.0, %v3217
        %v3219 = vpop.f32.mrb[0].mxu0
        %v3220 = vpop.f32.mrb[0].mxu0
        %v3221 = vadd.f32 0.0, %v3220
        %v3222 = vpop.f32.mrb[0].mxu0
        %3223 = vmatprep.mubr.bf16.mxu0 0
        %3224 = vmatmul.mubr.bf16.gmra.mrb[0].mxu0 %v3137
        %v3225 = vpop.f32.mrb[0].mxu0
        %v3226 = vadd.f32 0.0, %v3225
        %v3227 = vpop.f32.mrb[0].mxu0
        %v3228 = vpop.f32.mrb[0].mxu0
        %v3229 = vadd.f32 0.0, %v3228
        %v3230 = vpop.f32.mrb[0].mxu0
        %3231 = vmatprep.mubr.bf16.mxu0 0
        %3232 = vmatmul.mubr.bf16.gmra.mrb[0].mxu0 %v3138
        %v3233 = vpop.f32.mrb[0].mxu0
        %v3234 = vadd.f32 0.0, %v3233
        %v3235 = vpop.f32.mrb[0].mxu0
        %v3236 = vpop.f32.mrb[0].mxu0
        %v3237 = vadd.f32 0.0, %v3236
        %v3238 = vpop.f32.mrb[0].mxu0
        %3239 = vmatprep.mubr.bf16.mxu0 0
        %3240 = vmatmul.mubr.bf16.gmra.mrb[0].mxu0 %v3139
        %v3241 = vpop.f32.mrb[0].mxu0
        %v3242 = vadd.f32 0.0, %v3241
        %v3243 = vpop.f32.mrb[0].mxu0
        %v3244 = vpop.f32.mrb[0].mxu0
        %v3245 = vadd.f32 0.0, %v3244
        %v3246 = vpop.f32.mrb[0].mxu0
        %3247 = vmatprep.mubr.bf16.mxu0 0
        %3248 = vmatmul.mubr.bf16.gmra.mrb[0].mxu0 %v3140
        %v3249 = vpop.f32.mrb[0].mxu0
        %v3250 = vadd.f32 0.0, %v3249
        %v3251 = vpop.f32.mrb[0].mxu0
        %v3252 = vpop.f32.mrb[0].mxu0
        %v3253 = vadd.f32 0.0, %v3252
        %v3254 = vpop.f32.mrb[0].mxu0
        %3255 = vmatprep.mubr.bf16.mxu0 0
        %3256 = vmatmul.mubr.bf16.gmra.mrb[0].mxu0 %v3141
        %v3257 = vpop.f32.mrb[0].mxu0
        %v3258 = vadd.f32 0.0, %v3257
        %v3259 = vpop.f32.mrb[0].mxu0
        %v3260 = vpop.f32.mrb[0].mxu0
        %v3261 = vadd.f32 0.0, %v3260
        %v3262 = vpop.f32.mrb[0].mxu0
        %3263 = vmatprep.mubr.bf16.mxu0 0
        %3264 = vmatmul.mubr.bf16.gmra.mrb[0].mxu0 %v3142
        %v3265 = vpop.f32.mrb[0].mxu0
        %v3266 = vadd.f32 0.0, %v3265
        %v3267 = vpop.f32.mrb[0].mxu0
        %v3268 = vpop.f32.mrb[0].mxu0
        %v3269 = vadd.f32 0.0, %v3268
        %v3270 = vpop.f32.mrb[0].mxu0
        %3271 = vdwg.mxu0
        %v3272 = vpack.c.bf16 %v3213, %v3210
        %v3273 = vpack.c.bf16 %v3221, %v3218
        %v3274 = vpack.c.bf16 %v3229, %v3226
        %v3275 = vpack.c.bf16 %v3237, %v3234
        %v3276 = vpack.c.bf16 %v3245, %v3242
        %v3277 = vpack.c.bf16 %v3253, %v3250
        %v3278 = vpack.c.bf16 %v3261, %v3258
        %v3279 = vpack.c.bf16 %v3269, %v3266
        %v3280 = vlaneseq
        %v3281 = vshrl.u32 %v3280, 7
        %v3282 = vsub.s32 1, %v3281
        %v3283 = vrot.slane %v797, %v3282
        %v3300 = vunpack.c.l.b16 %v667
        %v3301 = vunpack.c.l.b16 %v668
        %v3302 = vunpack.c.l.b16 %v669
        %v3303 = vunpack.c.l.b16 %v670
        %v3304 = vunpack.c.l.b16 %v671
        %v3305 = vunpack.c.l.b16 %v672
        %v3306 = vunpack.c.l.b16 %v673
        %v3307 = vunpack.c.l.b16 %v674
        %v3308 = vunpack.c.l.b16 %v675
        %v3309 = vunpack.c.l.b16 %v676
        %v3310 = vunpack.c.l.b16 %v677
        %v3311 = vunpack.c.l.b16 %v678
        %v3312 = vunpack.c.l.b16 %v679
        %v3313 = vunpack.c.l.b16 %v680
        %v3314 = vunpack.c.l.b16 %v681
        %v3315 = vunpack.c.l.b16 %v682
        %v3316 = vpack.c.b16 %v3301, %v3300
        %v3317 = vpack.c.b16 %v3303, %v3302
        %v3318 = vpack.c.b16 %v3305, %v3304
        %v3319 = vpack.c.b16 %v3307, %v3306
        %v3320 = vpack.c.b16 %v3309, %v3308
        %v3321 = vpack.c.b16 %v3311, %v3310
        %v3322 = vpack.c.b16 %v3313, %v3312
        %v3323 = vpack.c.b16 %v3315, %v3314
        %3332 = vmatprep.subr.bf16.mxu0 0
        %3333 = vmatpush1.bf16.msra.mxu0 %v3316
        %3334 = vmatprep.subr.bf16.mxu0 0
        %3335 = vmatpush1.bf16.msra.mxu0 %v3317
        %3336 = vmatprep.subr.bf16.mxu0 0
        %3337 = vmatpush1.bf16.msra.mxu0 %v3318
        %3338 = vmatprep.subr.bf16.mxu0 0
        %3339 = vmatpush1.bf16.msra.mxu0 %v3319
        %3340 = vmatprep.subr.bf16.mxu0 0
        %3341 = vmatpush1.bf16.msra.mxu0 %v3320
        %3342 = vmatprep.subr.bf16.mxu0 0
        %3343 = vmatpush1.bf16.msra.mxu0 %v3321
        %3344 = vmatprep.subr.bf16.mxu0 0
        %3345 = vmatpush1.bf16.msra.mxu0 %v3322
        %3346 = vmatprep.subr.bf16.mxu0 0
        %3347 = vmatpush1.bf16.msra.mxu0 %v3323
        %3348 = vmatprep.subr.bf16.mxu0 0
        %3349 = vmatpush1.bf16.msra.mxu0 0
        %3350 = vmatprep.subr.bf16.mxu0 0
        %3351 = vmatpush1.bf16.msra.mxu0 0
        %3352 = vmatprep.subr.bf16.mxu0 0
        %3353 = vmatpush1.bf16.msra.mxu0 0
        %3354 = vmatprep.subr.bf16.mxu0 0
        %3355 = vmatpush1.bf16.msra.mxu0 0
        %3356 = vmatprep.subr.bf16.mxu0 0
        %3357 = vmatpush1.bf16.msra.mxu0 0
        %3358 = vmatprep.subr.bf16.mxu0 0
        %3359 = vmatpush1.bf16.msra.mxu0 0
        %3360 = vmatprep.subr.bf16.mxu0 0
        %3361 = vmatpush1.bf16.msra.mxu0 0
        %3362 = vmatprep.subr.bf16.mxu0 0
        %3363 = vmatpush1.bf16.msra.mxu0 0
        %3364 = vmatprep.mubr.bf16.mxu0 0
        %3365 = vmatmul.mubr.bf16.gmra.mrb[0].mxu0 %v3272
        %v3366 = vpop.f32.mrb[0].mxu0
        %v3367 = vadd.f32 %v3283, %v3366
        %v3368 = vpop.f32.mrb[0].mxu0
        %v3369 = vpop.f32.mrb[0].mxu0
        %v3370 = vadd.f32 %v3283, %v3369
        %v3371 = vpop.f32.mrb[0].mxu0
        %3372 = vmatprep.mubr.bf16.mxu0 0
        %3373 = vmatmul.mubr.bf16.gmra.mrb[0].mxu0 %v3273
        %v3374 = vpop.f32.mrb[0].mxu0
        %v3375 = vadd.f32 %v3283, %v3374
        %v3376 = vpop.f32.mrb[0].mxu0
        %v3377 = vpop.f32.mrb[0].mxu0
        %v3378 = vadd.f32 %v3283, %v3377
        %v3379 = vpop.f32.mrb[0].mxu0
        %3380 = vmatprep.mubr.bf16.mxu0 0
        %3381 = vmatmul.mubr.bf16.gmra.mrb[0].mxu0 %v3274
        %v3382 = vpop.f32.mrb[0].mxu0
        %v3383 = vadd.f32 %v3283, %v3382
        %v3384 = vpop.f32.mrb[0].mxu0
        %v3385 = vpop.f32.mrb[0].mxu0
        %v3386 = vadd.f32 %v3283, %v3385
        %v3387 = vpop.f32.mrb[0].mxu0
        %3388 = vmatprep.mubr.bf16.mxu0 0
        %3389 = vmatmul.mubr.bf16.gmra.mrb[0].mxu0 %v3275
        %v3390 = vpop.f32.mrb[0].mxu0
        %v3391 = vadd.f32 %v3283, %v3390
        %v3392 = vpop.f32.mrb[0].mxu0
        %v3393 = vpop.f32.mrb[0].mxu0
        %v3394 = vadd.f32 %v3283, %v3393
        %v3395 = vpop.f32.mrb[0].mxu0
        %3396 = vmatprep.mubr.bf16.mxu0 0
        %3397 = vmatmul.mubr.bf16.gmra.mrb[0].mxu0 %v3276
        %v3398 = vpop.f32.mrb[0].mxu0
        %v3399 = vadd.f32 %v3283, %v3398
        %v3400 = vpop.f32.mrb[0].mxu0
        %v3401 = vpop.f32.mrb[0].mxu0
        %v3402 = vadd.f32 %v3283, %v3401
        %v3403 = vpop.f32.mrb[0].mxu0
        %3404 = vmatprep.mubr.bf16.mxu0 0
        %3405 = vmatmul.mubr.bf16.gmra.mrb[0].mxu0 %v3277
        %v3406 = vpop.f32.mrb[0].mxu0
        %v3407 = vadd.f32 %v3283, %v3406
        %v3408 = vpop.f32.mrb[0].mxu0
        %v3409 = vpop.f32.mrb[0].mxu0
        %v3410 = vadd.f32 %v3283, %v3409
        %v3411 = vpop.f32.mrb[0].mxu0
        %3412 = vmatprep.mubr.bf16.mxu0 0
        %3413 = vmatmul.mubr.bf16.gmra.mrb[0].mxu0 %v3278
        %v3414 = vpop.f32.mrb[0].mxu0
        %v3415 = vadd.f32 %v3283, %v3414
        %v3416 = vpop.f32.mrb[0].mxu0
        %v3417 = vpop.f32.mrb[0].mxu0
        %v3418 = vadd.f32 %v3283, %v3417
        %v3419 = vpop.f32.mrb[0].mxu0
        %3420 = vmatprep.mubr.bf16.mxu0 0
        %3421 = vmatmul.mubr.bf16.gmra.mrb[0].mxu0 %v3279
        %v3422 = vpop.f32.mrb[0].mxu0
        %v3423 = vadd.f32 %v3283, %v3422
        %v3424 = vpop.f32.mrb[0].mxu0
        %v3425 = vpop.f32.mrb[0].mxu0
        %v3426 = vadd.f32 %v3283, %v3425
        %v3427 = vpop.f32.mrb[0].mxu0
        %3428 = vdwg.mxu0
        %v3429 = vadd.f32 %v2665, %v3367
        %v3430 = vadd.f32 %v2666, %v3370
        %v3431 = vadd.f32 %v2667, %v3375
        %v3432 = vadd.f32 %v2668, %v3378
        %v3433 = vadd.f32 %v2669, %v3383
        %v3434 = vadd.f32 %v2670, %v3386
        %v3435 = vadd.f32 %v2671, %v3391
        %v3436 = vadd.f32 %v2672, %v3394
        %v3437 = vadd.f32 %v2673, %v3399
        %v3438 = vadd.f32 %v2674, %v3402
        %v3439 = vadd.f32 %v2675, %v3407
        %v3440 = vadd.f32 %v2676, %v3410
        %v3441 = vadd.f32 %v2677, %v3415
        %v3442 = vadd.f32 %v2678, %v3418
        %v3443 = vadd.f32 %v2679, %v3423
        %v3444 = vadd.f32 %v2680, %v3426
        %3445 = vadd.xlane.f32.xlu0 %v3429
        %v3446 = vpop.xlane.xlu0 %3445
        %3447 = vadd.xlane.f32.xlu0 %v3430
        %v3448 = vpop.xlane.xlu0 %3447
        %3449 = vadd.xlane.f32.xlu0 %v3431
        %v3450 = vpop.xlane.xlu0 %3449
        %3451 = vadd.xlane.f32.xlu0 %v3432
        %v3452 = vpop.xlane.xlu0 %3451
        %3453 = vadd.xlane.f32.xlu0 %v3433
        %v3454 = vpop.xlane.xlu0 %3453
        %3455 = vadd.xlane.f32.xlu0 %v3434
        %v3456 = vpop.xlane.xlu0 %3455
        %3457 = vadd.xlane.f32.xlu0 %v3435
        %v3458 = vpop.xlane.xlu0 %3457
        %3459 = vadd.xlane.f32.xlu0 %v3436
        %v3460 = vpop.xlane.xlu0 %3459
        %3461 = vadd.xlane.f32.xlu0 %v3437
        %v3462 = vpop.xlane.xlu0 %3461
        %3463 = vadd.xlane.f32.xlu0 %v3438
        %v3464 = vpop.xlane.xlu0 %3463
        %3465 = vadd.xlane.f32.xlu0 %v3439
        %v3466 = vpop.xlane.xlu0 %3465
        %3467 = vadd.xlane.f32.xlu0 %v3440
        %v3468 = vpop.xlane.xlu0 %3467
        %3469 = vadd.xlane.f32.xlu0 %v3441
        %v3470 = vpop.xlane.xlu0 %3469
        %3471 = vadd.xlane.f32.xlu0 %v3442
        %v3472 = vpop.xlane.xlu0 %3471
        %3473 = vadd.xlane.f32.xlu0 %v3443
        %v3474 = vpop.xlane.xlu0 %3473
        %3475 = vadd.xlane.f32.xlu0 %v3444
        %v3476 = vpop.xlane.xlu0 %3475
        %v3477 = vmul.f32 %v3446, %v1794
        %v3478 = vmul.f32 %v3448, %v1794
        %v3479 = vmul.f32 %v3450, %v1794
        %v3480 = vmul.f32 %v3452, %v1794
        %v3481 = vmul.f32 %v3454, %v1794
        %v3482 = vmul.f32 %v3456, %v1794
        %v3483 = vmul.f32 %v3458, %v1794
        %v3484 = vmul.f32 %v3460, %v1794
        %v3485 = vmul.f32 %v3462, %v1794
        %v3486 = vmul.f32 %v3464, %v1794
        %v3487 = vmul.f32 %v3466, %v1794
        %v3488 = vmul.f32 %v3468, %v1794
        %v3489 = vmul.f32 %v3470, %v1794
        %v3490 = vmul.f32 %v3472, %v1794
        %v3491 = vmul.f32 %v3474, %v1794
        %v3492 = vmul.f32 %v3476, %v1794
        %v3493 = vsub.f32 %v3429, %v3477
        %v3494 = vsub.f32 %v3430, %v3478
        %v3495 = vsub.f32 %v3431, %v3479
        %v3496 = vsub.f32 %v3432, %v3480
        %v3497 = vsub.f32 %v3433, %v3481
        %v3498 = vsub.f32 %v3434, %v3482
        %v3499 = vsub.f32 %v3435, %v3483
        %v3500 = vsub.f32 %v3436, %v3484
        %v3501 = vsub.f32 %v3437, %v3485
        %v3502 = vsub.f32 %v3438, %v3486
        %v3503 = vsub.f32 %v3439, %v3487
        %v3504 = vsub.f32 %v3440, %v3488
        %v3505 = vsub.f32 %v3441, %v3489
        %v3506 = vsub.f32 %v3442, %v3490
        %v3507 = vsub.f32 %v3443, %v3491
        %v3508 = vsub.f32 %v3444, %v3492
        %v3509 = vmul.f32 %v3493, %v3493
        %v3510 = vmul.f32 %v3494, %v3494
        %v3511 = vmul.f32 %v3495, %v3495
        %v3512 = vmul.f32 %v3496, %v3496
        %v3513 = vmul.f32 %v3497, %v3497
        %v3514 = vmul.f32 %v3498, %v3498
        %v3515 = vmul.f32 %v3499, %v3499
        %v3516 = vmul.f32 %v3500, %v3500
        %v3517 = vmul.f32 %v3501, %v3501
        %v3518 = vmul.f32 %v3502, %v3502
        %v3519 = vmul.f32 %v3503, %v3503
        %v3520 = vmul.f32 %v3504, %v3504
        %v3521 = vmul.f32 %v3505, %v3505
        %v3522 = vmul.f32 %v3506, %v3506
        %v3523 = vmul.f32 %v3507, %v3507
        %v3524 = vmul.f32 %v3508, %v3508
        %3525 = vadd.xlane.f32.xlu0 %v3509
        %v3526 = vpop.xlane.xlu0 %3525
        %3527 = vadd.xlane.f32.xlu0 %v3510
        %v3528 = vpop.xlane.xlu0 %3527
        %3529 = vadd.xlane.f32.xlu0 %v3511
        %v3530 = vpop.xlane.xlu0 %3529
        %3531 = vadd.xlane.f32.xlu0 %v3512
        %v3532 = vpop.xlane.xlu0 %3531
        %3533 = vadd.xlane.f32.xlu0 %v3513
        %v3534 = vpop.xlane.xlu0 %3533
        %3535 = vadd.xlane.f32.xlu0 %v3514
        %v3536 = vpop.xlane.xlu0 %3535
        %3537 = vadd.xlane.f32.xlu0 %v3515
        %v3538 = vpop.xlane.xlu0 %3537
        %3539 = vadd.xlane.f32.xlu0 %v3516
        %v3540 = vpop.xlane.xlu0 %3539
        %3541 = vadd.xlane.f32.xlu0 %v3517
        %v3542 = vpop.xlane.xlu0 %3541
        %3543 = vadd.xlane.f32.xlu0 %v3518
        %v3544 = vpop.xlane.xlu0 %3543
        %3545 = vadd.xlane.f32.xlu0 %v3519
        %v3546 = vpop.xlane.xlu0 %3545
        %3547 = vadd.xlane.f32.xlu0 %v3520
        %v3548 = vpop.xlane.xlu0 %3547
        %3549 = vadd.xlane.f32.xlu0 %v3521
        %v3550 = vpop.xlane.xlu0 %3549
        %3551 = vadd.xlane.f32.xlu0 %v3522
        %v3552 = vpop.xlane.xlu0 %3551
        %3553 = vadd.xlane.f32.xlu0 %v3523
        %v3554 = vpop.xlane.xlu0 %3553
        %3555 = vadd.xlane.f32.xlu0 %v3524
        %v3556 = vpop.xlane.xlu0 %3555
        %v3557 = vmul.f32 %v3526, %v1794
        %v3558 = vmul.f32 %v3528, %v1794
        %v3559 = vmul.f32 %v3530, %v1794
        %v3560 = vmul.f32 %v3532, %v1794
        %v3561 = vmul.f32 %v3534, %v1794
        %v3562 = vmul.f32 %v3536, %v1794
        %v3563 = vmul.f32 %v3538, %v1794
        %v3564 = vmul.f32 %v3540, %v1794
        %v3565 = vmul.f32 %v3542, %v1794
        %v3566 = vmul.f32 %v3544, %v1794
        %v3567 = vmul.f32 %v3546, %v1794
        %v3568 = vmul.f32 %v3548, %v1794
        %v3569 = vmul.f32 %v3550, %v1794
        %v3570 = vmul.f32 %v3552, %v1794
        %v3571 = vmul.f32 %v3554, %v1794
        %v3572 = vmul.f32 %v3556, %v1794
        %v3573 = vadd.f32 %v3557, 1e-05
        %v3574 = vadd.f32 %v3558, 1e-05
        %v3575 = vadd.f32 %v3559, 1e-05
        %v3576 = vadd.f32 %v3560, 1e-05
        %v3577 = vadd.f32 %v3561, 1e-05
        %v3578 = vadd.f32 %v3562, 1e-05
        %v3579 = vadd.f32 %v3563, 1e-05
        %v3580 = vadd.f32 %v3564, 1e-05
        %v3581 = vadd.f32 %v3565, 1e-05
        %v3582 = vadd.f32 %v3566, 1e-05
        %v3583 = vadd.f32 %v3567, 1e-05
        %v3584 = vadd.f32 %v3568, 1e-05
        %v3585 = vadd.f32 %v3569, 1e-05
        %v3586 = vadd.f32 %v3570, 1e-05
        %v3587 = vadd.f32 %v3571, 1e-05
        %v3588 = vadd.f32 %v3572, 1e-05
        %v3589 = vrsqrt.pop %v3573
        %v3590 = vrsqrt.pop %v3574
        %v3591 = vrsqrt.pop %v3575
        %v3592 = vrsqrt.pop %v3576
        %v3593 = vrsqrt.pop %v3577
        %v3594 = vrsqrt.pop %v3578
        %v3595 = vrsqrt.pop %v3579
        %v3596 = vrsqrt.pop %v3580
        %v3597 = vrsqrt.pop %v3581
        %v3598 = vrsqrt.pop %v3582
        %v3599 = vrsqrt.pop %v3583
        %v3600 = vrsqrt.pop %v3584
        %v3601 = vrsqrt.pop %v3585
        %v3602 = vrsqrt.pop %v3586
        %v3603 = vrsqrt.pop %v3587
        %v3604 = vrsqrt.pop %v3588
        %v3605 = vmul.f32 %v3493, %v3589
        %v3606 = vmul.f32 %v3494, %v3590
        %v3607 = vmul.f32 %v3495, %v3591
        %v3608 = vmul.f32 %v3496, %v3592
        %v3609 = vmul.f32 %v3497, %v3593
        %v3610 = vmul.f32 %v3498, %v3594
        %v3611 = vmul.f32 %v3499, %v3595
        %v3612 = vmul.f32 %v3500, %v3596
        %v3613 = vmul.f32 %v3501, %v3597
        %v3614 = vmul.f32 %v3502, %v3598
        %v3615 = vmul.f32 %v3503, %v3599
        %v3616 = vmul.f32 %v3504, %v3600
        %v3617 = vmul.f32 %v3505, %v3601
        %v3618 = vmul.f32 %v3506, %v3602
        %v3619 = vmul.f32 %v3507, %v3603
        %v3620 = vmul.f32 %v3508, %v3604
        %v3621 = vlaneseq
        %v3622 = vshrl.u32 %v3621, 7
        %v3623 = vsub.s32 4, %v3622
        %v3624 = vrot.slane %v797, %v3623
        %v3625 = vmul.f32 %v3605, %v3624
        %v3626 = vmul.f32 %v3606, %v3624
        %v3627 = vmul.f32 %v3607, %v3624
        %v3628 = vmul.f32 %v3608, %v3624
        %v3629 = vmul.f32 %v3609, %v3624
        %v3630 = vmul.f32 %v3610, %v3624
        %v3631 = vmul.f32 %v3611, %v3624
        %v3632 = vmul.f32 %v3612, %v3624
        %v3633 = vmul.f32 %v3613, %v3624
        %v3634 = vmul.f32 %v3614, %v3624
        %v3635 = vmul.f32 %v3615, %v3624
        %v3636 = vmul.f32 %v3616, %v3624
        %v3637 = vmul.f32 %v3617, %v3624
        %v3638 = vmul.f32 %v3618, %v3624
        %v3639 = vmul.f32 %v3619, %v3624
        %v3640 = vmul.f32 %v3620, %v3624
        %v3641 = vlaneseq
        %v3642 = vshrl.u32 %v3641, 7
        %v3643 = vsub.s32 5, %v3642
        %v3644 = vrot.slane %v797, %v3643
        %v3645 = vadd.f32 %v3625, %v3644
        %v3646 = vadd.f32 %v3626, %v3644
        %v3647 = vadd.f32 %v3627, %v3644
        %v3648 = vadd.f32 %v3628, %v3644
        %v3649 = vadd.f32 %v3629, %v3644
        %v3650 = vadd.f32 %v3630, %v3644
        %v3651 = vadd.f32 %v3631, %v3644
        %v3652 = vadd.f32 %v3632, %v3644
        %v3653 = vadd.f32 %v3633, %v3644
        %v3654 = vadd.f32 %v3634, %v3644
        %v3655 = vadd.f32 %v3635, %v3644
        %v3656 = vadd.f32 %v3636, %v3644
        %v3657 = vadd.f32 %v3637, %v3644
        %v3658 = vadd.f32 %v3638, %v3644
        %v3659 = vadd.f32 %v3639, %v3644
        %v3660 = vadd.f32 %v3640, %v3644
        %v3661 = vpack.c.bf16 %v3646, %v3645
        %v3662 = vpack.c.bf16 %v3648, %v3647
        %v3663 = vpack.c.bf16 %v3650, %v3649
        %v3664 = vpack.c.bf16 %v3652, %v3651
        %v3665 = vpack.c.bf16 %v3654, %v3653
        %v3666 = vpack.c.bf16 %v3656, %v3655
        %v3667 = vpack.c.bf16 %v3658, %v3657
        %v3668 = vpack.c.bf16 %v3660, %v3659
        %v3669 = vlaneseq
        %v3670 = vshrl.u32 %v3669, 7
        %v3671 = vsub.s32 2, %v3670
        %v3672 = vrot.slane %v797, %v3671
        %v3689 = vunpack.c.l.b16 %v731
        %v3690 = vunpack.c.l.b16 %v732
        %v3691 = vunpack.c.l.b16 %v733
        %v3692 = vunpack.c.l.b16 %v734
        %v3693 = vunpack.c.l.b16 %v735
        %v3694 = vunpack.c.l.b16 %v736
        %v3695 = vunpack.c.l.b16 %v737
        %v3696 = vunpack.c.l.b16 %v738
        %v3697 = vunpack.c.l.b16 %v739
        %v3698 = vunpack.c.l.b16 %v740
        %v3699 = vunpack.c.l.b16 %v741
        %v3700 = vunpack.c.l.b16 %v742
        %v3701 = vunpack.c.l.b16 %v743
        %v3702 = vunpack.c.l.b16 %v744
        %v3703 = vunpack.c.l.b16 %v745
        %v3704 = vunpack.c.l.b16 %v746
        %v3705 = vpack.c.b16 %v3690, %v3689
        %v3706 = vpack.c.b16 %v3692, %v3691
        %v3707 = vpack.c.b16 %v3694, %v3693
        %v3708 = vpack.c.b16 %v3696, %v3695
        %v3709 = vpack.c.b16 %v3698, %v3697
        %v3710 = vpack.c.b16 %v3700, %v3699
        %v3711 = vpack.c.b16 %v3702, %v3701
        %v3712 = vpack.c.b16 %v3704, %v3703
        %3721 = vmatprep.subr.bf16.mxu0 0
        %3722 = vmatpush1.bf16.msra.mxu0 %v3705
        %3723 = vmatprep.subr.bf16.mxu0 0
        %3724 = vmatpush1.bf16.msra.mxu0 %v3706
        %3725 = vmatprep.subr.bf16.mxu0 0
        %3726 = vmatpush1.bf16.msra.mxu0 %v3707
        %3727 = vmatprep.subr.bf16.mxu0 0
        %3728 = vmatpush1.bf16.msra.mxu0 %v3708
        %3729 = vmatprep.subr.bf16.mxu0 0
        %3730 = vmatpush1.bf16.msra.mxu0 %v3709
        %3731 = vmatprep.subr.bf16.mxu0 0
        %3732 = vmatpush1.bf16.msra.mxu0 %v3710
        %3733 = vmatprep.subr.bf16.mxu0 0
        %3734 = vmatpush1.bf16.msra.mxu0 %v3711
        %3735 = vmatprep.subr.bf16.mxu0 0
        %3736 = vmatpush1.bf16.msra.mxu0 %v3712
        %3737 = vmatprep.subr.bf16.mxu0 0
        %3738 = vmatpush1.bf16.msra.mxu0 0
        %3739 = vmatprep.subr.bf16.mxu0 0
        %3740 = vmatpush1.bf16.msra.mxu0 0
        %3741 = vmatprep.subr.bf16.mxu0 0
        %3742 = vmatpush1.bf16.msra.mxu0 0
        %3743 = vmatprep.subr.bf16.mxu0 0
        %3744 = vmatpush1.bf16.msra.mxu0 0
        %3745 = vmatprep.subr.bf16.mxu0 0
        %3746 = vmatpush1.bf16.msra.mxu0 0
        %3747 = vmatprep.subr.bf16.mxu0 0
        %3748 = vmatpush1.bf16.msra.mxu0 0
        %3749 = vmatprep.subr.bf16.mxu0 0
        %3750 = vmatpush1.bf16.msra.mxu0 0
        %3751 = vmatprep.subr.bf16.mxu0 0
        %3752 = vmatpush1.bf16.msra.mxu0 0
        %3753 = vmatprep.mubr.bf16.mxu0 0
        %3754 = vmatmul.mubr.bf16.gmra.mrb[0].mxu0 %v3661
        %v3755 = vpop.f32.mrb[0].mxu0
        %v3756 = vadd.f32 %v3672, %v3755
        %v3757 = vpop.f32.mrb[0].mxu0
        %v3758 = vpop.f32.mrb[0].mxu0
        %v3759 = vadd.f32 %v3672, %v3758
        %v3760 = vpop.f32.mrb[0].mxu0
        %3761 = vmatprep.mubr.bf16.mxu0 0
        %3762 = vmatmul.mubr.bf16.gmra.mrb[0].mxu0 %v3662
        %v3763 = vpop.f32.mrb[0].mxu0
        %v3764 = vadd.f32 %v3672, %v3763
        %v3765 = vpop.f32.mrb[0].mxu0
        %v3766 = vpop.f32.mrb[0].mxu0
        %v3767 = vadd.f32 %v3672, %v3766
        %v3768 = vpop.f32.mrb[0].mxu0
        %3769 = vmatprep.mubr.bf16.mxu0 0
        %3770 = vmatmul.mubr.bf16.gmra.mrb[0].mxu0 %v3663
        %v3771 = vpop.f32.mrb[0].mxu0
        %v3772 = vadd.f32 %v3672, %v3771
        %v3773 = vpop.f32.mrb[0].mxu0
        %v3774 = vpop.f32.mrb[0].mxu0
        %v3775 = vadd.f32 %v3672, %v3774
        %v3776 = vpop.f32.mrb[0].mxu0
        %3777 = vmatprep.mubr.bf16.mxu0 0
        %3778 = vmatmul.mubr.bf16.gmra.mrb[0].mxu0 %v3664
        %v3779 = vpop.f32.mrb[0].mxu0
        %v3780 = vadd.f32 %v3672, %v3779
        %v3781 = vpop.f32.mrb[0].mxu0
        %v3782 = vpop.f32.mrb[0].mxu0
        %v3783 = vadd.f32 %v3672, %v3782
        %v3784 = vpop.f32.mrb[0].mxu0
        %3785 = vmatprep.mubr.bf16.mxu0 0
        %3786 = vmatmul.mubr.bf16.gmra.mrb[0].mxu0 %v3665
        %v3787 = vpop.f32.mrb[0].mxu0
        %v3788 = vadd.f32 %v3672, %v3787
        %v3789 = vpop.f32.mrb[0].mxu0
        %v3790 = vpop.f32.mrb[0].mxu0
        %v3791 = vadd.f32 %v3672, %v3790
        %v3792 = vpop.f32.mrb[0].mxu0
        %3793 = vmatprep.mubr.bf16.mxu0 0
        %3794 = vmatmul.mubr.bf16.gmra.mrb[0].mxu0 %v3666
        %v3795 = vpop.f32.mrb[0].mxu0
        %v3796 = vadd.f32 %v3672, %v3795
        %v3797 = vpop.f32.mrb[0].mxu0
        %v3798 = vpop.f32.mrb[0].mxu0
        %v3799 = vadd.f32 %v3672, %v3798
        %v3800 = vpop.f32.mrb[0].mxu0
        %3801 = vmatprep.mubr.bf16.mxu0 0
        %3802 = vmatmul.mubr.bf16.gmra.mrb[0].mxu0 %v3667
        %v3803 = vpop.f32.mrb[0].mxu0
        %v3804 = vadd.f32 %v3672, %v3803
        %v3805 = vpop.f32.mrb[0].mxu0
        %v3806 = vpop.f32.mrb[0].mxu0
        %v3807 = vadd.f32 %v3672, %v3806
        %v3808 = vpop.f32.mrb[0].mxu0
        %3809 = vmatprep.mubr.bf16.mxu0 0
        %3810 = vmatmul.mubr.bf16.gmra.mrb[0].mxu0 %v3668
        %v3811 = vpop.f32.mrb[0].mxu0
        %v3812 = vadd.f32 %v3672, %v3811
        %v3813 = vpop.f32.mrb[0].mxu0
        %v3814 = vpop.f32.mrb[0].mxu0
        %v3815 = vadd.f32 %v3672, %v3814
        %v3816 = vpop.f32.mrb[0].mxu0
        %3817 = vdwg.mxu0
        %v3818 = vmax.f32 %v3756, 0.0
        %v3819 = vmax.f32 %v3759, 0.0
        %v3820 = vmax.f32 %v3764, 0.0
        %v3821 = vmax.f32 %v3767, 0.0
        %v3822 = vmax.f32 %v3772, 0.0
        %v3823 = vmax.f32 %v3775, 0.0
        %v3824 = vmax.f32 %v3780, 0.0
        %v3825 = vmax.f32 %v3783, 0.0
        %v3826 = vmax.f32 %v3788, 0.0
        %v3827 = vmax.f32 %v3791, 0.0
        %v3828 = vmax.f32 %v3796, 0.0
        %v3829 = vmax.f32 %v3799, 0.0
        %v3830 = vmax.f32 %v3804, 0.0
        %v3831 = vmax.f32 %v3807, 0.0
        %v3832 = vmax.f32 %v3812, 0.0
        %v3833 = vmax.f32 %v3815, 0.0
        %v3834 = vpack.c.bf16 %v3819, %v3818
        %v3835 = vpack.c.bf16 %v3821, %v3820
        %v3836 = vpack.c.bf16 %v3823, %v3822
        %v3837 = vpack.c.bf16 %v3825, %v3824
        %v3838 = vpack.c.bf16 %v3827, %v3826
        %v3839 = vpack.c.bf16 %v3829, %v3828
        %v3840 = vpack.c.bf16 %v3831, %v3830
        %v3841 = vpack.c.bf16 %v3833, %v3832
        %v3858 = vunpack.c.l.b16 %v747
        %v3859 = vunpack.c.l.b16 %v748
        %v3860 = vunpack.c.l.b16 %v749
        %v3861 = vunpack.c.l.b16 %v750
        %v3862 = vunpack.c.l.b16 %v751
        %v3863 = vunpack.c.l.b16 %v752
        %v3864 = vunpack.c.l.b16 %v753
        %v3865 = vunpack.c.l.b16 %v754
        %v3866 = vunpack.c.l.b16 %v755
        %v3867 = vunpack.c.l.b16 %v756
        %v3868 = vunpack.c.l.b16 %v757
        %v3869 = vunpack.c.l.b16 %v758
        %v3870 = vunpack.c.l.b16 %v759
        %v3871 = vunpack.c.l.b16 %v760
        %v3872 = vunpack.c.l.b16 %v761
        %v3873 = vunpack.c.l.b16 %v762
        %v3874 = vpack.c.b16 %v3859, %v3858
        %v3875 = vpack.c.b16 %v3861, %v3860
        %v3876 = vpack.c.b16 %v3863, %v3862
        %v3877 = vpack.c.b16 %v3865, %v3864
        %v3878 = vpack.c.b16 %v3867, %v3866
        %v3879 = vpack.c.b16 %v3869, %v3868
        %v3880 = vpack.c.b16 %v3871, %v3870
        %v3881 = vpack.c.b16 %v3873, %v3872
        %3890 = vmatprep.subr.bf16.mxu0 0
        %3891 = vmatpush1.bf16.msra.mxu0 %v3874
        %3892 = vmatprep.subr.bf16.mxu0 0
        %3893 = vmatpush1.bf16.msra.mxu0 %v3875
        %3894 = vmatprep.subr.bf16.mxu0 0
        %3895 = vmatpush1.bf16.msra.mxu0 %v3876
        %3896 = vmatprep.subr.bf16.mxu0 0
        %3897 = vmatpush1.bf16.msra.mxu0 %v3877
        %3898 = vmatprep.subr.bf16.mxu0 0
        %3899 = vmatpush1.bf16.msra.mxu0 %v3878
        %3900 = vmatprep.subr.bf16.mxu0 0
        %3901 = vmatpush1.bf16.msra.mxu0 %v3879
        %3902 = vmatprep.subr.bf16.mxu0 0
        %3903 = vmatpush1.bf16.msra.mxu0 %v3880
        %3904 = vmatprep.subr.bf16.mxu0 0
        %3905 = vmatpush1.bf16.msra.mxu0 %v3881
        %3906 = vmatprep.subr.bf16.mxu0 0
        %3907 = vmatpush1.bf16.msra.mxu0 0
        %3908 = vmatprep.subr.bf16.mxu0 0
        %3909 = vmatpush1.bf16.msra.mxu0 0
        %3910 = vmatprep.subr.bf16.mxu0 0
        %3911 = vmatpush1.bf16.msra.mxu0 0
        %3912 = vmatprep.subr.bf16.mxu0 0
        %3913 = vmatpush1.bf16.msra.mxu0 0
        %3914 = vmatprep.subr.bf16.mxu0 0
        %3915 = vmatpush1.bf16.msra.mxu0 0
        %3916 = vmatprep.subr.bf16.mxu0 0
        %3917 = vmatpush1.bf16.msra.mxu0 0
        %3918 = vmatprep.subr.bf16.mxu0 0
        %3919 = vmatpush1.bf16.msra.mxu0 0
        %3920 = vmatprep.subr.bf16.mxu0 0
        %3921 = vmatpush1.bf16.msra.mxu0 0
        %3922 = vmatprep.mubr.bf16.mxu0 0
        %3923 = vmatmul.mubr.bf16.gmra.mrb[0].mxu0 %v3834
        %v3924 = vpop.f32.mrb[0].mxu0
        %v3925 = vadd.f32 0.0, %v3924
        %v3926 = vpop.f32.mrb[0].mxu0
        %v3927 = vpop.f32.mrb[0].mxu0
        %v3928 = vadd.f32 0.0, %v3927
        %v3929 = vpop.f32.mrb[0].mxu0
        %3930 = vmatprep.mubr.bf16.mxu0 0
        %3931 = vmatmul.mubr.bf16.gmra.mrb[0].mxu0 %v3835
        %v3932 = vpop.f32.mrb[0].mxu0
        %v3933 = vadd.f32 0.0, %v3932
        %v3934 = vpop.f32.mrb[0].mxu0
        %v3935 = vpop.f32.mrb[0].mxu0
        %v3936 = vadd.f32 0.0, %v3935
        %v3937 = vpop.f32.mrb[0].mxu0
        %3938 = vmatprep.mubr.bf16.mxu0 0
        %3939 = vmatmul.mubr.bf16.gmra.mrb[0].mxu0 %v3836
        %v3940 = vpop.f32.mrb[0].mxu0
        %v3941 = vadd.f32 0.0, %v3940
        %v3942 = vpop.f32.mrb[0].mxu0
        %v3943 = vpop.f32.mrb[0].mxu0
        %v3944 = vadd.f32 0.0, %v3943
        %v3945 = vpop.f32.mrb[0].mxu0
        %3946 = vmatprep.mubr.bf16.mxu0 0
        %3947 = vmatmul.mubr.bf16.gmra.mrb[0].mxu0 %v3837
        %v3948 = vpop.f32.mrb[0].mxu0
        %v3949 = vadd.f32 0.0, %v3948
        %v3950 = vpop.f32.mrb[0].mxu0
        %v3951 = vpop.f32.mrb[0].mxu0
        %v3952 = vadd.f32 0.0, %v3951
        %v3953 = vpop.f32.mrb[0].mxu0
        %3954 = vmatprep.mubr.bf16.mxu0 0
        %3955 = vmatmul.mubr.bf16.gmra.mrb[0].mxu0 %v3838
        %v3956 = vpop.f32.mrb[0].mxu0
        %v3957 = vadd.f32 0.0, %v3956
        %v3958 = vpop.f32.mrb[0].mxu0
        %v3959 = vpop.f32.mrb[0].mxu0
        %v3960 = vadd.f32 0.0, %v3959
        %v3961 = vpop.f32.mrb[0].mxu0
        %3962 = vmatprep.mubr.bf16.mxu0 0
        %3963 = vmatmul.mubr.bf16.gmra.mrb[0].mxu0 %v3839
        %v3964 = vpop.f32.mrb[0].mxu0
        %v3965 = vadd.f32 0.0, %v3964
        %v3966 = vpop.f32.mrb[0].mxu0
        %v3967 = vpop.f32.mrb[0].mxu0
        %v3968 = vadd.f32 0.0, %v3967
        %v3969 = vpop.f32.mrb[0].mxu0
        %3970 = vmatprep.mubr.bf16.mxu0 0
        %3971 = vmatmul.mubr.bf16.gmra.mrb[0].mxu0 %v3840
        %v3972 = vpop.f32.mrb[0].mxu0
        %v3973 = vadd.f32 0.0, %v3972
        %v3974 = vpop.f32.mrb[0].mxu0
        %v3975 = vpop.f32.mrb[0].mxu0
        %v3976 = vadd.f32 0.0, %v3975
        %v3977 = vpop.f32.mrb[0].mxu0
        %3978 = vmatprep.mubr.bf16.mxu0 0
        %3979 = vmatmul.mubr.bf16.gmra.mrb[0].mxu0 %v3841
        %v3980 = vpop.f32.mrb[0].mxu0
        %v3981 = vadd.f32 0.0, %v3980
        %v3982 = vpop.f32.mrb[0].mxu0
        %v3983 = vpop.f32.mrb[0].mxu0
        %v3984 = vadd.f32 0.0, %v3983
        %v3985 = vpop.f32.mrb[0].mxu0
        %3986 = vdwg.mxu0
        %v3987 = vadd.f32 %v3645, %v3925
        %v3988 = vadd.f32 %v3646, %v3928
        %v3989 = vadd.f32 %v3647, %v3933
        %v3990 = vadd.f32 %v3648, %v3936
        %v3991 = vadd.f32 %v3649, %v3941
        %v3992 = vadd.f32 %v3650, %v3944
        %v3993 = vadd.f32 %v3651, %v3949
        %v3994 = vadd.f32 %v3652, %v3952
        %v3995 = vadd.f32 %v3653, %v3957
        %v3996 = vadd.f32 %v3654, %v3960
        %v3997 = vadd.f32 %v3655, %v3965
        %v3998 = vadd.f32 %v3656, %v3968
        %v3999 = vadd.f32 %v3657, %v3973
        %v4000 = vadd.f32 %v3658, %v3976
        %v4001 = vadd.f32 %v3659, %v3981
        %v4002 = vadd.f32 %v3660, %v3984
        %v4003 = vlaneseq
        %v4004 = vshrl.u32 %v4003, 7
        %v4005 = vsub.s32 3, %v4004
        %v4006 = vrot.slane %v797, %v4005
        %v4007 = vadd.f32 %v3987, %v4006
        %v4008 = vadd.f32 %v3988, %v4006
        %v4009 = vadd.f32 %v3989, %v4006
        %v4010 = vadd.f32 %v3990, %v4006
        %v4011 = vadd.f32 %v3991, %v4006
        %v4012 = vadd.f32 %v3992, %v4006
        %v4013 = vadd.f32 %v3993, %v4006
        %v4014 = vadd.f32 %v3994, %v4006
        %v4015 = vadd.f32 %v3995, %v4006
        %v4016 = vadd.f32 %v3996, %v4006
        %v4017 = vadd.f32 %v3997, %v4006
        %v4018 = vadd.f32 %v3998, %v4006
        %v4019 = vadd.f32 %v3999, %v4006
        %v4020 = vadd.f32 %v4000, %v4006
        %v4021 = vadd.f32 %v4001, %v4006
        %v4022 = vadd.f32 %v4002, %v4006
        %4023 = vadd.xlane.f32.xlu0 %v4007
        %v4024 = vpop.xlane.xlu0 %4023
        %4025 = vadd.xlane.f32.xlu0 %v4008
        %v4026 = vpop.xlane.xlu0 %4025
        %4027 = vadd.xlane.f32.xlu0 %v4009
        %v4028 = vpop.xlane.xlu0 %4027
        %4029 = vadd.xlane.f32.xlu0 %v4010
        %v4030 = vpop.xlane.xlu0 %4029
        %4031 = vadd.xlane.f32.xlu0 %v4011
        %v4032 = vpop.xlane.xlu0 %4031
        %4033 = vadd.xlane.f32.xlu0 %v4012
        %v4034 = vpop.xlane.xlu0 %4033
        %4035 = vadd.xlane.f32.xlu0 %v4013
        %v4036 = vpop.xlane.xlu0 %4035
        %4037 = vadd.xlane.f32.xlu0 %v4014
        %v4038 = vpop.xlane.xlu0 %4037
        %4039 = vadd.xlane.f32.xlu0 %v4015
        %v4040 = vpop.xlane.xlu0 %4039
        %4041 = vadd.xlane.f32.xlu0 %v4016
        %v4042 = vpop.xlane.xlu0 %4041
        %4043 = vadd.xlane.f32.xlu0 %v4017
        %v4044 = vpop.xlane.xlu0 %4043
        %4045 = vadd.xlane.f32.xlu0 %v4018
        %v4046 = vpop.xlane.xlu0 %4045
        %4047 = vadd.xlane.f32.xlu0 %v4019
        %v4048 = vpop.xlane.xlu0 %4047
        %4049 = vadd.xlane.f32.xlu0 %v4020
        %v4050 = vpop.xlane.xlu0 %4049
        %4051 = vadd.xlane.f32.xlu0 %v4021
        %v4052 = vpop.xlane.xlu0 %4051
        %4053 = vadd.xlane.f32.xlu0 %v4022
        %v4054 = vpop.xlane.xlu0 %4053
        %v4055 = vmul.f32 %v4024, %v1794
        %v4056 = vmul.f32 %v4026, %v1794
        %v4057 = vmul.f32 %v4028, %v1794
        %v4058 = vmul.f32 %v4030, %v1794
        %v4059 = vmul.f32 %v4032, %v1794
        %v4060 = vmul.f32 %v4034, %v1794
        %v4061 = vmul.f32 %v4036, %v1794
        %v4062 = vmul.f32 %v4038, %v1794
        %v4063 = vmul.f32 %v4040, %v1794
        %v4064 = vmul.f32 %v4042, %v1794
        %v4065 = vmul.f32 %v4044, %v1794
        %v4066 = vmul.f32 %v4046, %v1794
        %v4067 = vmul.f32 %v4048, %v1794
        %v4068 = vmul.f32 %v4050, %v1794
        %v4069 = vmul.f32 %v4052, %v1794
        %v4070 = vmul.f32 %v4054, %v1794
        %v4071 = vsub.f32 %v4007, %v4055
        %v4072 = vsub.f32 %v4008, %v4056
        %v4073 = vsub.f32 %v4009, %v4057
        %v4074 = vsub.f32 %v4010, %v4058
        %v4075 = vsub.f32 %v4011, %v4059
        %v4076 = vsub.f32 %v4012, %v4060
        %v4077 = vsub.f32 %v4013, %v4061
        %v4078 = vsub.f32 %v4014, %v4062
        %v4079 = vsub.f32 %v4015, %v4063
        %v4080 = vsub.f32 %v4016, %v4064
        %v4081 = vsub.f32 %v4017, %v4065
        %v4082 = vsub.f32 %v4018, %v4066
        %v4083 = vsub.f32 %v4019, %v4067
        %v4084 = vsub.f32 %v4020, %v4068
        %v4085 = vsub.f32 %v4021, %v4069
        %v4086 = vsub.f32 %v4022, %v4070
        %v4087 = vmul.f32 %v4071, %v4071
        %v4088 = vmul.f32 %v4072, %v4072
        %v4089 = vmul.f32 %v4073, %v4073
        %v4090 = vmul.f32 %v4074, %v4074
        %v4091 = vmul.f32 %v4075, %v4075
        %v4092 = vmul.f32 %v4076, %v4076
        %v4093 = vmul.f32 %v4077, %v4077
        %v4094 = vmul.f32 %v4078, %v4078
        %v4095 = vmul.f32 %v4079, %v4079
        %v4096 = vmul.f32 %v4080, %v4080
        %v4097 = vmul.f32 %v4081, %v4081
        %v4098 = vmul.f32 %v4082, %v4082
        %v4099 = vmul.f32 %v4083, %v4083
        %v4100 = vmul.f32 %v4084, %v4084
        %v4101 = vmul.f32 %v4085, %v4085
        %v4102 = vmul.f32 %v4086, %v4086
        %4103 = vadd.xlane.f32.xlu0 %v4087
        %v4104 = vpop.xlane.xlu0 %4103
        %4105 = vadd.xlane.f32.xlu0 %v4088
        %v4106 = vpop.xlane.xlu0 %4105
        %4107 = vadd.xlane.f32.xlu0 %v4089
        %v4108 = vpop.xlane.xlu0 %4107
        %4109 = vadd.xlane.f32.xlu0 %v4090
        %v4110 = vpop.xlane.xlu0 %4109
        %4111 = vadd.xlane.f32.xlu0 %v4091
        %v4112 = vpop.xlane.xlu0 %4111
        %4113 = vadd.xlane.f32.xlu0 %v4092
        %v4114 = vpop.xlane.xlu0 %4113
        %4115 = vadd.xlane.f32.xlu0 %v4093
        %v4116 = vpop.xlane.xlu0 %4115
        %4117 = vadd.xlane.f32.xlu0 %v4094
        %v4118 = vpop.xlane.xlu0 %4117
        %4119 = vadd.xlane.f32.xlu0 %v4095
        %v4120 = vpop.xlane.xlu0 %4119
        %4121 = vadd.xlane.f32.xlu0 %v4096
        %v4122 = vpop.xlane.xlu0 %4121
        %4123 = vadd.xlane.f32.xlu0 %v4097
        %v4124 = vpop.xlane.xlu0 %4123
        %4125 = vadd.xlane.f32.xlu0 %v4098
        %v4126 = vpop.xlane.xlu0 %4125
        %4127 = vadd.xlane.f32.xlu0 %v4099
        %v4128 = vpop.xlane.xlu0 %4127
        %4129 = vadd.xlane.f32.xlu0 %v4100
        %v4130 = vpop.xlane.xlu0 %4129
        %4131 = vadd.xlane.f32.xlu0 %v4101
        %v4132 = vpop.xlane.xlu0 %4131
        %4133 = vadd.xlane.f32.xlu0 %v4102
        %v4134 = vpop.xlane.xlu0 %4133
        %v4135 = vmul.f32 %v4104, %v1794
        %v4136 = vmul.f32 %v4106, %v1794
        %v4137 = vmul.f32 %v4108, %v1794
        %v4138 = vmul.f32 %v4110, %v1794
        %v4139 = vmul.f32 %v4112, %v1794
        %v4140 = vmul.f32 %v4114, %v1794
        %v4141 = vmul.f32 %v4116, %v1794
        %v4142 = vmul.f32 %v4118, %v1794
        %v4143 = vmul.f32 %v4120, %v1794
        %v4144 = vmul.f32 %v4122, %v1794
        %v4145 = vmul.f32 %v4124, %v1794
        %v4146 = vmul.f32 %v4126, %v1794
        %v4147 = vmul.f32 %v4128, %v1794
        %v4148 = vmul.f32 %v4130, %v1794
        %v4149 = vmul.f32 %v4132, %v1794
        %v4150 = vmul.f32 %v4134, %v1794
        %v4151 = vadd.f32 %v4135, 1e-05
        %v4152 = vadd.f32 %v4136, 1e-05
        %v4153 = vadd.f32 %v4137, 1e-05
        %v4154 = vadd.f32 %v4138, 1e-05
        %v4155 = vadd.f32 %v4139, 1e-05
        %v4156 = vadd.f32 %v4140, 1e-05
        %v4157 = vadd.f32 %v4141, 1e-05
        %v4158 = vadd.f32 %v4142, 1e-05
        %v4159 = vadd.f32 %v4143, 1e-05
        %v4160 = vadd.f32 %v4144, 1e-05
        %v4161 = vadd.f32 %v4145, 1e-05
        %v4162 = vadd.f32 %v4146, 1e-05
        %v4163 = vadd.f32 %v4147, 1e-05
        %v4164 = vadd.f32 %v4148, 1e-05
        %v4165 = vadd.f32 %v4149, 1e-05
        %v4166 = vadd.f32 %v4150, 1e-05
        %v4167 = vrsqrt.pop %v4151
        %v4168 = vrsqrt.pop %v4152
        %v4169 = vrsqrt.pop %v4153
        %v4170 = vrsqrt.pop %v4154
        %v4171 = vrsqrt.pop %v4155
        %v4172 = vrsqrt.pop %v4156
        %v4173 = vrsqrt.pop %v4157
        %v4174 = vrsqrt.pop %v4158
        %v4175 = vrsqrt.pop %v4159
        %v4176 = vrsqrt.pop %v4160
        %v4177 = vrsqrt.pop %v4161
        %v4178 = vrsqrt.pop %v4162
        %v4179 = vrsqrt.pop %v4163
        %v4180 = vrsqrt.pop %v4164
        %v4181 = vrsqrt.pop %v4165
        %v4182 = vrsqrt.pop %v4166
        %v4183 = vmul.f32 %v4071, %v4167
        %v4184 = vmul.f32 %v4072, %v4168
        %v4185 = vmul.f32 %v4073, %v4169
        %v4186 = vmul.f32 %v4074, %v4170
        %v4187 = vmul.f32 %v4075, %v4171
        %v4188 = vmul.f32 %v4076, %v4172
        %v4189 = vmul.f32 %v4077, %v4173
        %v4190 = vmul.f32 %v4078, %v4174
        %v4191 = vmul.f32 %v4079, %v4175
        %v4192 = vmul.f32 %v4080, %v4176
        %v4193 = vmul.f32 %v4081, %v4177
        %v4194 = vmul.f32 %v4082, %v4178
        %v4195 = vmul.f32 %v4083, %v4179
        %v4196 = vmul.f32 %v4084, %v4180
        %v4197 = vmul.f32 %v4085, %v4181
        %v4198 = vmul.f32 %v4086, %v4182
        %v4199 = vlaneseq
        %v4200 = vshrl.u32 %v4199, 7
        %v4201 = vsub.s32 6, %v4200
        %v4202 = vrot.slane %v797, %v4201
        %v4203 = vmul.f32 %v4183, %v4202
        %v4204 = vmul.f32 %v4184, %v4202
        %v4205 = vmul.f32 %v4185, %v4202
        %v4206 = vmul.f32 %v4186, %v4202
        %v4207 = vmul.f32 %v4187, %v4202
        %v4208 = vmul.f32 %v4188, %v4202
        %v4209 = vmul.f32 %v4189, %v4202
        %v4210 = vmul.f32 %v4190, %v4202
        %v4211 = vmul.f32 %v4191, %v4202
        %v4212 = vmul.f32 %v4192, %v4202
        %v4213 = vmul.f32 %v4193, %v4202
        %v4214 = vmul.f32 %v4194, %v4202
        %v4215 = vmul.f32 %v4195, %v4202
        %v4216 = vmul.f32 %v4196, %v4202
        %v4217 = vmul.f32 %v4197, %v4202
        %v4218 = vmul.f32 %v4198, %v4202
        %v4219 = vlaneseq
        %v4220 = vshrl.u32 %v4219, 7
        %v4221 = vsub.s32 7, %v4220
        %v4222 = vrot.slane %v797, %v4221
        %v4223 = vadd.f32 %v4203, %v4222
        %v4224 = vadd.f32 %v4204, %v4222
        %v4225 = vadd.f32 %v4205, %v4222
        %v4226 = vadd.f32 %v4206, %v4222
        %v4227 = vadd.f32 %v4207, %v4222
        %v4228 = vadd.f32 %v4208, %v4222
        %v4229 = vadd.f32 %v4209, %v4222
        %v4230 = vadd.f32 %v4210, %v4222
        %v4231 = vadd.f32 %v4211, %v4222
        %v4232 = vadd.f32 %v4212, %v4222
        %v4233 = vadd.f32 %v4213, %v4222
        %v4234 = vadd.f32 %v4214, %v4222
        %v4235 = vadd.f32 %v4215, %v4222
        %v4236 = vadd.f32 %v4216, %v4222
        %v4237 = vadd.f32 %v4217, %v4222
        %v4238 = vadd.f32 %v4218, %v4222
        %v4239 = vpack.c.bf16 %v4224, %v4223
        %v4240 = vpack.c.bf16 %v4226, %v4225
        %v4241 = vpack.c.bf16 %v4228, %v4227
        %v4242 = vpack.c.bf16 %v4230, %v4229
        %v4243 = vpack.c.bf16 %v4232, %v4231
        %v4244 = vpack.c.bf16 %v4234, %v4233
        %v4245 = vpack.c.bf16 %v4236, %v4235
        %v4246 = vpack.c.bf16 %v4238, %v4237
        %v4279 = vunpack.c.l.b16 %v763
        %v4280 = vunpack.c.l.b16 %v764
        %v4281 = vunpack.c.l.b16 %v765
        %v4282 = vunpack.c.l.b16 %v766
        %v4283 = vunpack.c.l.b16 %v767
        %v4284 = vunpack.c.l.b16 %v768
        %v4285 = vunpack.c.l.b16 %v769
        %v4286 = vunpack.c.l.b16 %v770
        %v4287 = vunpack.c.l.b16 %v771
        %v4288 = vunpack.c.l.b16 %v772
        %v4289 = vunpack.c.l.b16 %v773
        %v4290 = vunpack.c.l.b16 %v774
        %v4291 = vunpack.c.l.b16 %v775
        %v4292 = vunpack.c.l.b16 %v776
        %v4293 = vunpack.c.l.b16 %v777
        %v4294 = vunpack.c.l.b16 %v778
        %v4295 = vunpack.c.l.b16 %v779
        %v4296 = vunpack.c.l.b16 %v780
        %v4297 = vunpack.c.l.b16 %v781
        %v4298 = vunpack.c.l.b16 %v782
        %v4299 = vunpack.c.l.b16 %v783
        %v4300 = vunpack.c.l.b16 %v784
        %v4301 = vunpack.c.l.b16 %v785
        %v4302 = vunpack.c.l.b16 %v786
        %v4303 = vunpack.c.l.b16 %v787
        %v4304 = vunpack.c.l.b16 %v788
        %v4305 = vunpack.c.l.b16 %v789
        %v4306 = vunpack.c.l.b16 %v790
        %v4307 = vunpack.c.l.b16 %v791
        %v4308 = vunpack.c.l.b16 %v792
        %v4309 = vunpack.c.l.b16 %v793
        %v4310 = vunpack.c.l.b16 %v794
        %v4311 = vpack.c.b16 %v4280, %v4279
        %v4312 = vpack.c.b16 %v4282, %v4281
        %v4313 = vpack.c.b16 %v4284, %v4283
        %v4314 = vpack.c.b16 %v4286, %v4285
        %v4315 = vpack.c.b16 %v4288, %v4287
        %v4316 = vpack.c.b16 %v4290, %v4289
        %v4317 = vpack.c.b16 %v4292, %v4291
        %v4318 = vpack.c.b16 %v4294, %v4293
        %v4319 = vpack.c.b16 %v4296, %v4295
        %v4320 = vpack.c.b16 %v4298, %v4297
        %v4321 = vpack.c.b16 %v4300, %v4299
        %v4322 = vpack.c.b16 %v4302, %v4301
        %v4323 = vpack.c.b16 %v4304, %v4303
        %v4324 = vpack.c.b16 %v4306, %v4305
        %v4325 = vpack.c.b16 %v4308, %v4307
        %v4326 = vpack.c.b16 %v4310, %v4309
        %4343 = vmatprep.subr.bf16.mxu0 0
        %4344 = vmatpush1.bf16.msra.mxu0 %v4311
        %4345 = vmatprep.subr.bf16.mxu0 0
        %4346 = vmatpush1.bf16.msra.mxu0 %v4312
        %4347 = vmatprep.subr.bf16.mxu0 0
        %4348 = vmatpush1.bf16.msra.mxu0 %v4313
        %4349 = vmatprep.subr.bf16.mxu0 0
        %4350 = vmatpush1.bf16.msra.mxu0 %v4314
        %4351 = vmatprep.subr.bf16.mxu0 0
        %4352 = vmatpush1.bf16.msra.mxu0 %v4315
        %4353 = vmatprep.subr.bf16.mxu0 0
        %4354 = vmatpush1.bf16.msra.mxu0 %v4316
        %4355 = vmatprep.subr.bf16.mxu0 0
        %4356 = vmatpush1.bf16.msra.mxu0 %v4317
        %4357 = vmatprep.subr.bf16.mxu0 0
        %4358 = vmatpush1.bf16.msra.mxu0 %v4318
        %4359 = vmatprep.subr.bf16.mxu0 0
        %4360 = vmatpush1.bf16.msra.mxu0 %v4319
        %4361 = vmatprep.subr.bf16.mxu0 0
        %4362 = vmatpush1.bf16.msra.mxu0 %v4320
        %4363 = vmatprep.subr.bf16.mxu0 0
        %4364 = vmatpush1.bf16.msra.mxu0 %v4321
        %4365 = vmatprep.subr.bf16.mxu0 0
        %4366 = vmatpush1.bf16.msra.mxu0 %v4322
        %4367 = vmatprep.subr.bf16.mxu0 0
        %4368 = vmatpush1.bf16.msra.mxu0 %v4323
        %4369 = vmatprep.subr.bf16.mxu0 0
        %4370 = vmatpush1.bf16.msra.mxu0 %v4324
        %4371 = vmatprep.subr.bf16.mxu0 0
        %4372 = vmatpush1.bf16.msra.mxu0 %v4325
        %4373 = vmatprep.subr.bf16.mxu0 0
        %4374 = vmatpush1.bf16.msra.mxu0 %v4326
        %4375 = vmatprep.mubr.bf16.mxu0 %v4239
        %4376 = vmatmul.mubr.bf16.gmra.mrb[0].mxu0 %v2681
        %v4377 = vpop.f32.mrb[0].mxu0
        %v4378 = vadd.f32 0.0, %v4377
        %v4379 = vpop.f32.mrb[0].mxu0
        %v4380 = vpop.f32.mrb[0].mxu0
        %v4381 = vadd.f32 0.0, %v4380
        %v4382 = vpop.f32.mrb[0].mxu0
        %4383 = vmatprep.mubr.bf16.mxu0 %v4240
        %4384 = vmatmul.mubr.bf16.gmra.mrb[0].mxu0 %v2682
        %v4385 = vpop.f32.mrb[0].mxu0
        %v4386 = vadd.f32 0.0, %v4385
        %v4387 = vpop.f32.mrb[0].mxu0
        %v4388 = vpop.f32.mrb[0].mxu0
        %v4389 = vadd.f32 0.0, %v4388
        %v4390 = vpop.f32.mrb[0].mxu0
        %4391 = vmatprep.mubr.bf16.mxu0 %v4241
        %4392 = vmatmul.mubr.bf16.gmra.mrb[0].mxu0 %v2683
        %v4393 = vpop.f32.mrb[0].mxu0
        %v4394 = vadd.f32 0.0, %v4393
        %v4395 = vpop.f32.mrb[0].mxu0
        %v4396 = vpop.f32.mrb[0].mxu0
        %v4397 = vadd.f32 0.0, %v4396
        %v4398 = vpop.f32.mrb[0].mxu0
        %4399 = vmatprep.mubr.bf16.mxu0 %v4242
        %4400 = vmatmul.mubr.bf16.gmra.mrb[0].mxu0 %v2684
        %v4401 = vpop.f32.mrb[0].mxu0
        %v4402 = vadd.f32 0.0, %v4401
        %v4403 = vpop.f32.mrb[0].mxu0
        %v4404 = vpop.f32.mrb[0].mxu0
        %v4405 = vadd.f32 0.0, %v4404
        %v4406 = vpop.f32.mrb[0].mxu0
        %4407 = vmatprep.mubr.bf16.mxu0 %v4243
        %4408 = vmatmul.mubr.bf16.gmra.mrb[0].mxu0 %v2685
        %v4409 = vpop.f32.mrb[0].mxu0
        %v4410 = vadd.f32 0.0, %v4409
        %v4411 = vpop.f32.mrb[0].mxu0
        %v4412 = vpop.f32.mrb[0].mxu0
        %v4413 = vadd.f32 0.0, %v4412
        %v4414 = vpop.f32.mrb[0].mxu0
        %4415 = vmatprep.mubr.bf16.mxu0 %v4244
        %4416 = vmatmul.mubr.bf16.gmra.mrb[0].mxu0 %v2686
        %v4417 = vpop.f32.mrb[0].mxu0
        %v4418 = vadd.f32 0.0, %v4417
        %v4419 = vpop.f32.mrb[0].mxu0
        %v4420 = vpop.f32.mrb[0].mxu0
        %v4421 = vadd.f32 0.0, %v4420
        %v4422 = vpop.f32.mrb[0].mxu0
        %4423 = vmatprep.mubr.bf16.mxu0 %v4245
        %4424 = vmatmul.mubr.bf16.gmra.mrb[0].mxu0 %v2687
        %v4425 = vpop.f32.mrb[0].mxu0
        %v4426 = vadd.f32 0.0, %v4425
        %v4427 = vpop.f32.mrb[0].mxu0
        %v4428 = vpop.f32.mrb[0].mxu0
        %v4429 = vadd.f32 0.0, %v4428
        %v4430 = vpop.f32.mrb[0].mxu0
        %4431 = vmatprep.mubr.bf16.mxu0 %v4246
        %4432 = vmatmul.mubr.bf16.gmra.mrb[0].mxu0 %v2688
        %v4433 = vpop.f32.mrb[0].mxu0
        %v4434 = vadd.f32 0.0, %v4433
        %v4435 = vpop.f32.mrb[0].mxu0
        %v4436 = vpop.f32.mrb[0].mxu0
        %v4437 = vadd.f32 0.0, %v4436
        %v4438 = vpop.f32.mrb[0].mxu0
        %4439 = vdwg.mxu0
        %4440 = vst [vmem:[%s549] sm:$0xff] %v4378
        %4441 = vst [vmem:[%s549 + $0x8] sm:$0xff] %v4381
        %4442 = vst [vmem:[%s549 + $0x10] sm:$0xff] %v4386
        %4443 = vst [vmem:[%s549 + $0x18] sm:$0xff] %v4389
        %4444 = vst [vmem:[%s549 + $0x20] sm:$0xff] %v4394
        %4445 = vst [vmem:[%s549 + $0x28] sm:$0xff] %v4397
        %4446 = vst [vmem:[%s549 + $0x30] sm:$0xff] %v4402
        %4447 = vst [vmem:[%s549 + $0x38] sm:$0xff] %v4405
        %4448 = vst [vmem:[%s549 + $0x40] sm:$0xff] %v4410
        %4449 = vst [vmem:[%s549 + $0x48] sm:$0xff] %v4413
        %4450 = vst [vmem:[%s549 + $0x50] sm:$0xff] %v4418
        %4451 = vst [vmem:[%s549 + $0x58] sm:$0xff] %v4421
        %4452 = vst [vmem:[%s549 + $0x60] sm:$0xff] %v4426
        %4453 = vst [vmem:[%s549 + $0x68] sm:$0xff] %v4429
        %4454 = vst [vmem:[%s549 + $0x70] sm:$0xff] %v4434
        %4455 = vst [vmem:[%s549 + $0x78] sm:$0xff] %v4437
        %s4456 = sand.u32 %s277, 1
        %s4457 = scalar_lea.sflag [#allocation4], %s4456
        %s4458 = sand.u32 %s277, 1
        %s4459 = smul.addr %s4458, 128
        %s4460 = scalar_lea.vmem [#allocation20], %s4459
        // Predicated region
        $region109: #{tpu_custom_call.1} parent=63 // pred_check
          %p4461 = pneg %p287
        $region110: #{tpu_custom_call.1} parent=63 // pred_check_branch
          %4463 = sbr.rel (%p4461) target = $region112
        $region111: #{tpu_custom_call.1} parent=63 // pred_region
          %s4464 = smul.u32 16, %s33
          %s4466 = ssub.s32 2048, 2048
          %4467 = vsyncadd %s4457, %s4466
          %s4468 = smul.addr %s4464, 128
          %s4469 = scalar_lea.hbm %s11, %s4468
          %s4470 = sshll.u32 %s4460, 4
          %s4471 = int_to_ptr.vmem [resolvable:$true] %s4470
          %4476 = dma.vmem_to_hbm [thread:$0]  %s4471, 2048, %s4469, %s4457, 128, 128, 8
        $region112: #{tpu_custom_call.1} parent=63 // pred_fallthru
          _
      $region64: #{tpu_custom_call.1} parent=5 // pred_fallthru
        _
      %p4477 = scmp.le.s32.totalorder 2, %s28
      // Predicated region
      $region113: #{tpu_custom_call.1} parent=5 // pred_check
        %p4478 = pneg %p4477
      $region114: #{tpu_custom_call.1} parent=5 // pred_check_branch
        %4480 = sbr.rel (%p4478) target = $region116
      $region115: #{tpu_custom_call.1} parent=5 // pred_region
        %s4481 = ssub.s32 %s28, 2
        // Predicated region
        $region117: #{tpu_custom_call.1} parent=115 // pred_check
          %p4482 = pneg %p293
        $region118: #{tpu_custom_call.1} parent=115 // pred_check_branch
          %4484 = sbr.rel (%p4482) target = $region120
        $region119: #{tpu_custom_call.1} parent=115 // pred_region
          %s4485 = sand.u32 %s278, 1
          %s4486 = scalar_lea.sflag [#allocation4], %s4485
          %s4487 = sand.u32 %s278, 1
          %s4488 = smul.addr %s4487, 128
          %s4489 = scalar_lea.vmem [#allocation20], %s4488
          %4490 = dma.done %s4486, 2048
        $region120: #{tpu_custom_call.1} parent=115 // pred_fallthru
          _
      $region116: #{tpu_custom_call.1} parent=5 // pred_fallthru
        _
    $region6: #{tpu_custom_call.1} parent=1 // loop_footer
      %s32 = sadd.s32 1, %s28
    $region7: #{tpu_custom_call.1} parent=1 // loop_footer_branch
      %27 = sbr.rel target = $region3
    $region8: #{tpu_custom_call.1} parent=1 // loop_exit
      _
    %4491 = vsyncpa [#allocation3], 1
    %s4492 = scalar_lea.sflag [#allocation3], 1
    %4493 = vsyncpa %s4492, 1
    %4494 = vsyncpa [#allocation6], 1
    %4495 = vsyncpa [#allocation9], 1
    %4496 = vsyncpa [#allocation12], 1
    %4497 = vsyncpa [#allocation15], 1
    %4498 = vsyncpa [#allocation18], 1
    %4499 = vsyncpa [#allocation4], 1
    %s4500 = scalar_lea.sflag [#allocation4], 1
    %4501 = vsyncpa %s4500, 1

</llo_original>
